<compile_context>
chip_gen: v6e
topology: v6e:2x2x1
jax: 0.10.0
libtpu: 0.0.40
codegen_flags: <defaults>
</compile_context>

<pallas_src>
import numpy as np
import jax
import jax.numpy as jnp
from jax import lax
from jax.experimental import pallas as pl
from jax.experimental.pallas import tpu as pltpu

# ---------------- problem sizes ----------------
B = 2                  # batch
C_IN = 2               # input feature planes
H = W = 8              # board
NF = 16                # num_filters
NB = 6                 # num_blocks
NL = NB + 1            # 7 conv layers in the tower
BOARD = H * W          # 64
HP, WP = H + 2, W + 2  # board with 1-wide spatial halo
PB = HP * WP           # 100 padded positions per image
TILE = 128             # one lane tile per batch image
NTOT = B * TILE        # 256 lanes total
K8 = 8 * NF            # 128 = im2col contraction depth (off-centre taps)
BN_EPS = 1e-5

# 3x3 taps; centre tap handled separately (no lane shift needed)
TAPS = [(ky, kx) for ky in range(3) for kx in range(3)]
OFF_TAPS = [t for t in TAPS if t != (1, 1)]
OFF_SHIFTS = [(ky - 1) * WP + (kx - 1) for (ky, kx) in OFF_TAPS]   # in {-11..11}\{0}


# ---------------- Pallas kernel ----------------
def net_kernel(x_ref, cslab_ref, hslab_ref, mask_ref,
               p_ref, v_ref, act_ref, patch_ref):
    mask = mask_ref[...]                       # (1, 256): 1 at interior board lanes
    act_ref[...] = x_ref[...]                  # persistent activation buffer (16, 256)

    # ---------------- conv tower: 7 layers ----------------
    for layer in range(NL):
        act = act_ref[...]                                          # (16, 256)
        w8 = cslab_ref[layer * NF:(layer + 1) * NF, 0:K8]           # (16, 128) BN-scaled
        wc = cslab_ref[layer * NF:(layer + 1) * NF, K8:K8 + NF]     # (16, 16)  BN-scaled
        sh = cslab_ref[layer * NF:(layer + 1) * NF, K8 + NF:K8 + NF + 1]  # (16, 1)

        # centre tap: small K=16 dot straight off the activation (overlaps patch build)
        c = jnp.dot(wc, act, preferred_element_type=jnp.float32)    # (16, 256)

        # im2col patch: 8 lane-rotated copies (XLU), full-width unmasked stores.
        # Wrap-around lanes only land on halo/guard output positions (mask re-zeroes).
        for t, s in enumerate(OFF_SHIFTS):
            patch_ref[t * NF:(t + 1) * NF, :] = pltpu.roll(act, (-s) % NTOT, 1)

        c = c + jnp.dot(w8, patch_ref[...], preferred_element_type=jnp.float32)
        c = c + sh                                                  # folded BN shift
        if layer == 0:
            h_new = jnp.maximum(c, 0.0)                             # relu(bn(conv(x)))
        else:
            h_new = jnp.maximum(act + c, 0.0)                       # residual block
        act_ref[...] = h_new * mask            # re-zero halo/guard lanes, unmasked store

    act = act_ref[...]                                              # (16, 256)

    # ---------------- fused policy + value heads ----------------
    whead = hslab_ref[:, 0:NF]                 # (8,16) rows 0..3 policy, 4..7 value
    shh = hslab_ref[:, NF:NF + 1]              # (8,1)  folded BN shifts
    wp2 = hslab_ref[:, NF + 1:NF + 2]          # (8,1)  conv_p2 weight (rows 4..7 zero)
    wfc = hslab_ref[:, TILE:TILE + NTOT]       # (8,256) fc_v weight (rows 0..3 zero)

    hh = jnp.maximum(jnp.dot(whead, act, preferred_element_type=jnp.float32) + shh, 0.0)
    logits = jnp.sum(hh * wp2, axis=0, keepdims=True)               # (1, 256)
    vcol = jnp.sum(hh * wfc, axis=0, keepdims=True)                 # (1, 256)
    logits = jnp.where(mask > 0.0, logits, -1e30)                   # kill halo/guard lanes

    for b in range(B):                          # 128-lane-aligned per-batch slices
        lb = logits[:, b * TILE:(b + 1) * TILE]                     # (1, 128)
        m = jnp.max(lb, axis=1, keepdims=True)
        e = jnp.exp(lb - m)
        p_ref[b:b + 1, :] = e * pl.reciprocal(jnp.sum(e, axis=1, keepdims=True),
                                              approx=True)
        vb = jnp.sum(vcol[:, b * TILE:(b + 1) * TILE], axis=1, keepdims=True)
        v_ref[b:b + 1, :] = jnp.tanh(vb)


# ---------------- wrapper ----------------
@jax.jit
def net_forward(x_nchw, params):
    # NCHW -> (C=16, 256): channel pad to 16, 1-wide spatial halo, one 128-lane tile/batch
    xp = jnp.pad(x_nchw.astype(jnp.float32),
                 ((0, 0), (0, NF - C_IN), (1, 1), (1, 1)))          # (B, 16, 10, 10)
    xt = jnp.transpose(xp, (1, 0, 2, 3)).reshape(NF, B, PB)         # (16, B, 100)
    xt = jnp.pad(xt, ((0, 0), (0, 0), (0, TILE - PB))).reshape(NF, NTOT)   # (16, 256)

    vspec = pl.BlockSpec(memory_space=pltpu.MemorySpace.VMEM)
    p_pad, v = pl.pallas_call(
        net_kernel,
        out_shape=(jax.ShapeDtypeStruct((B, TILE), jnp.float32),    # lane-dense policy slab
                   jax.ShapeDtypeStruct((B, 1), jnp.float32)),
        in_specs=[vspec] * 4,
        out_specs=(vspec, vspec),
        scratch_shapes=[pltpu.VMEM((NF, NTOT), jnp.float32),        # persistent activation
                        pltpu.VMEM((K8, NTOT), jnp.float32)],       # im2col patch
    )(xt, params["cslab"], params["hslab"], params["mask"])

    # 100 padded positions -> 64 board positions (free layout plumbing in XLA)
    p = p_pad[:, :PB].reshape(B, HP, WP)[:, 1:1 + H, 1:1 + W].reshape(B, BOARD)
    return p, v


# ---------------- deterministic parameter init (PyTorch conventions, converted) ----------
def init_params(key):
    kit = iter(jax.random.split(key, 64))

    def nrm(shape, scale):
        return scale * jax.random.normal(next(kit), shape, jnp.float32)

    def bn_fold(c):
        gamma = 1.0 + 0.1 * jax.random.normal(next(kit), (c,), jnp.float32)
        beta = 0.1 * jax.random.normal(next(kit), (c,), jnp.float32)
        mean = 0.1 * jax.random.normal(next(kit), (c,), jnp.float32)
        var = jax.random.uniform(next(kit), (c,), jnp.float32, 0.5, 1.5)
        scale = gamma / jnp.sqrt(var + BN_EPS)
        shift = beta - mean * scale
        return scale, shift

    def conv_w(cout, cin, k):
        w_pt = nrm((cout, cin, k, k), 0.2)            # PyTorch OIHW
        return jnp.transpose(w_pt, (2, 3, 1, 0))      # -> HWIO

    # tower: layer0 (input channels zero-padded to 16) + residual blocks
    w0 = conv_w(NF, C_IN, 3)                                           # (3,3,2,16)
    w0p = jnp.zeros((3, 3, NF, NF), jnp.float32).at[:, :, :C_IN, :].set(w0)
    w_layers = [w0p]
    s0, t0 = bn_fold(NF)
    sc_list, sh_list = [s0], [t0]
    wblocks = []
    for _ in range(NB):
        wb = conv_w(NF, NF, 3)
        wblocks.append(wb)
        w_layers.append(wb)
        s, t = bn_fold(NF)
        sc_list.append(s)
        sh_list.append(t)

    # conv slab: per layer 16 rows, cols [0:128]=off-centre taps (BN-scaled),
    # [128:144]=centre tap (BN-scaled), [144]=BN shift
    w8_rows, wc_rows, sh_rows = [], [], []
    for wl, sc, sh in zip(w_layers, sc_list, sh_list):
        w8 = jnp.concatenate([wl[ky, kx].T for (ky, kx) in OFF_TAPS], axis=1)  # (16,128)
        wc = wl[1, 1].T                                                        # (16,16)
        w8_rows.append(sc[:, None] * w8)
        wc_rows.append(sc[:, None] * wc)
        sh_rows.append(sh[:, None])
    cslab = jnp.concatenate([jnp.concatenate(w8_rows, axis=0),
                             jnp.concatenate(wc_rows, axis=0),
                             jnp.concatenate(sh_rows, axis=0)], axis=1)        # (112,145)

    # heads (1x1 convs + fc_v), packed into one slab
    wp1_pt = nrm((4, NF, 1, 1), 0.2)
    sp1, tp1 = bn_fold(4)
    wp2_pt = nrm((1, 4, 1, 1), 0.2)
    wv_pt = nrm((4, NF, 1, 1), 0.2)
    sv, tv = bn_fold(4)
    wfc_pt = nrm((1, 4 * BOARD), 0.2)      # Linear over the NCHW flattening (c, y, x)

    wp1 = wp1_pt[:, :, 0, 0]                                           # (4,16)
    wv = wv_pt[:, :, 0, 0]                                             # (4,16)
    wp2 = wp2_pt[0, :, 0, 0]                                           # (4,)
    whead = jnp.concatenate([sp1[:, None] * wp1, sv[:, None] * wv], axis=0)    # (8,16)
    shh = jnp.concatenate([tp1, tv])[:, None]                                  # (8,1)
    wp2pad = jnp.concatenate([wp2, jnp.zeros((4,), jnp.float32)])[:, None]     # (8,1)
    wfc_grid = jnp.pad(wfc_pt.reshape(4, H, W), ((0, 0), (1, 1), (1, 1))).reshape(4, PB)
    wfc_tile = jnp.pad(wfc_grid, ((0, 0), (0, TILE - PB)))                     # (4,128)
    wfct = jnp.tile(wfc_tile, (1, B))                                          # (4,256)
    wfcpad = jnp.concatenate([jnp.zeros((4, NTOT), jnp.float32), wfct], axis=0)  # (8,256)

    hslab = jnp.zeros((8, TILE + NTOT), jnp.float32)
    hslab = hslab.at[:, 0:NF].set(whead)
    hslab = hslab.at[:, NF:NF + 1].set(shh)
    hslab = hslab.at[:, NF + 1:NF + 2].set(wp2pad)
    hslab = hslab.at[:, TILE:TILE + NTOT].set(wfcpad)                          # (8,384)

    # interior-position mask over the per-batch 128-lane tiles, (1, 256)
    m = np.zeros((B, HP, WP), np.float32)
    m[:, 1:1 + H, 1:1 + W] = 1.0
    m = np.pad(m.reshape(B, PB), ((0, 0), (0, TILE - PB))).reshape(1, NTOT)
    mask = jnp.asarray(m)

    return dict(
        # kernel-layout params
        cslab=cslab, hslab=hslab, mask=mask,
        # reference-only copies (plain-JAX layouts)
        w0=w0, wblocks=wblocks,
        sc3_r=jnp.stack(sc_list), sh3_r=jnp.stack(sh_list),
        wp1_r=wp1.T, wp2_r=wp2_pt[:, :, 0, 0].T, wv_r=wv.T,
        scp1_r=sp1, shp1_r=tp1, scv_r=sv, shv_r=tv,
        wfc_r=wfc_pt,
    )


# ---------------- pure-JAX reference (eval-mode BN folded identically) ----------------
def reference_forward(x_nchw, p):
    hi = lax.Precision.HIGHEST
    x = jnp.transpose(x_nchw, (0, 2, 3, 1)).astype(jnp.float32)

    def conv3(h, w):
        return lax.conv_general_dilated(
            h, w, (1, 1), ((1, 1), (1, 1)),
            dimension_numbers=("NHWC", "HWIO", "NHWC"), precision=hi)

    h = jax.nn.relu(conv3(x, p["w0"]) * p["sc3_r"][0] + p["sh3_r"][0])
    for i in range(NB):
        c = conv3(h, p["wblocks"][i]) * p["sc3_r"][i + 1] + p["sh3_r"][i + 1]
        h = jax.nn.relu(h + c)
    hp = jax.nn.relu(jnp.einsum("bhwc,cd->bhwd", h, p["wp1_r"], precision=hi)
                     * p["scp1_r"] + p["shp1_r"])
    logits = jnp.einsum("bhwc,cd->bhwd", hp, p["wp2_r"], precision=hi).reshape(B, BOARD)
    pol = jax.nn.softmax(logits, axis=-1)
    hv = jax.nn.relu(jnp.einsum("bhwc,cd->bhwd", h, p["wv_r"], precision=hi)
                     * p["scv_r"] + p["shv_r"])
    hv_nchw = jnp.transpose(hv, (0, 3, 1, 2)).reshape(B, 4 * BOARD)   # fc_v flattens NCHW
    val = jnp.tanh(jnp.dot(hv_nchw, p["wfc_r"].T, precision=hi))
    return pol, val


if __name__ == "__main__":
    key = jax.random.PRNGKey(0)
    pkey, xkey = jax.random.split(key)
    params = init_params(pkey)
    x = jax.random.normal(xkey, (B, C_IN, H, W), jnp.float32)   # NCHW, like PyTorch

    p_out, v_out = net_forward(x, params)
    jax.block_until_ready((p_out, v_out))

    assert p_out.shape == (B, BOARD) and v_out.shape == (B, 1)
    p_exp, v_exp = reference_forward(x, params)
    assert np.allclose(np.asarray(p_out), np.asarray(p_exp), rtol=1e-2, atol=1e-3)
    assert np.allclose(np.asarray(v_out), np.asarray(v_exp), rtol=1e-2, atol=1e-3)

    # TODO(synk): BatchNorm is modeled in inference mode (running stats folded into
    # scale/shift); training-mode batch statistics are not reproduced.
    print("KERNEL_OK")
</pallas_src>

<mosaic_0001>
module attributes {stable_mosaic.version = 11 : i64} {
  func.func @net_kernel(%arg0: memref<16x256xf32, #tpu.memory_space<vmem>>, %arg1: memref<112x145xf32, #tpu.memory_space<vmem>>, %arg2: memref<8x384xf32, #tpu.memory_space<vmem>>, %arg3: memref<1x256xf32, #tpu.memory_space<vmem>>, %arg4: memref<2x128xf32, #tpu.memory_space<vmem>>, %arg5: memref<2x1xf32, #tpu.memory_space<vmem>>, %arg6: memref<16x256xf32, #tpu.memory_space<vmem>>, %arg7: memref<128x256xf32, #tpu.memory_space<vmem>>) attributes {dimension_semantics = [], scalar_prefetch = 0 : i64, scratch_operands = 2 : i64, tpu.core_type = #tpu.core_type<tc>} {
    %c0 = arith.constant 0 : index
    %c0_0 = arith.constant 0 : index
    %0 = vector.load %arg3[%c0, %c0_0] : memref<1x256xf32, #tpu.memory_space<vmem>>, vector<1x256xf32>
    %c0_1 = arith.constant 0 : index
    %c0_2 = arith.constant 0 : index
    %1 = vector.load %arg0[%c0_1, %c0_2] : memref<16x256xf32, #tpu.memory_space<vmem>>, vector<16x256xf32>
    %c0_3 = arith.constant 0 : index
    %c0_4 = arith.constant 0 : index
    %2 = vector.load %arg6[%c0_3, %c0_4] : memref<16x256xf32, #tpu.memory_space<vmem>>, vector<16x256xf32>
    tpu.vector_store %arg6[%c0_3, %c0_4], %1 {strides = array<i32>} : memref<16x256xf32, #tpu.memory_space<vmem>>, vector<16x256xf32>,
    %c0_5 = arith.constant 0 : index
    %c0_6 = arith.constant 0 : index
    %3 = vector.load %arg6[%c0_5, %c0_6] : memref<16x256xf32, #tpu.memory_space<vmem>>, vector<16x256xf32>
    %c0_7 = arith.constant 0 : index
    %c0_8 = arith.constant 0 : index
    %4 = vector.load %arg1[%c0_7, %c0_8] : memref<112x145xf32, #tpu.memory_space<vmem>>, vector<16x128xf32>
    %c0_9 = arith.constant 0 : index
    %c128 = arith.constant 128 : index
    %5 = vector.load %arg1[%c0_9, %c128] : memref<112x145xf32, #tpu.memory_space<vmem>>, vector<16x16xf32>
    %c0_10 = arith.constant 0 : index
    %c144 = arith.constant 144 : index
    %6 = vector.load %arg1[%c0_10, %c144] : memref<112x145xf32, #tpu.memory_space<vmem>>, vector<16x1xf32>
    %cst = arith.constant dense<0.000000e+00> : vector<16x256xf32>
    %7 = tpu.matmul %5, %3, %cst {dimension_numbers = #tpu.dot_dimension_numbers<[1], [0], [0], [1], [0, 0, 1, 1], [], []>} : vector<16x16xf32>, vector<16x256xf32>, vector<16x256xf32> -> vector<16x256xf32>
    %c11_i32 = arith.constant 11 : i32
    %8 = tpu.dynamic_rotate %3 by %c11_i32 dim 1 : vector<16x256xf32>, i32 -> vector<16x256xf32>
    %c0_11 = arith.constant 0 : index
    %c0_12 = arith.constant 0 : index
    %9 = vector.load %arg7[%c0_11, %c0_12] : memref<128x256xf32, #tpu.memory_space<vmem>>, vector<16x256xf32>
    tpu.vector_store %arg7[%c0_11, %c0_12], %8 {strides = array<i32>} : memref<128x256xf32, #tpu.memory_space<vmem>>, vector<16x256xf32>,
    %c10_i32 = arith.constant 10 : i32
    %10 = tpu.dynamic_rotate %3 by %c10_i32 dim 1 : vector<16x256xf32>, i32 -> vector<16x256xf32>
    %c16 = arith.constant 16 : index
    %c0_13 = arith.constant 0 : index
    %11 = vector.load %arg7[%c16, %c0_13] : memref<128x256xf32, #tpu.memory_space<vmem>>, vector<16x256xf32>
    tpu.vector_store %arg7[%c16, %c0_13], %10 {strides = array<i32>} : memref<128x256xf32, #tpu.memory_space<vmem>>, vector<16x256xf32>,
    %c9_i32 = arith.constant 9 : i32
    %12 = tpu.dynamic_rotate %3 by %c9_i32 dim 1 : vector<16x256xf32>, i32 -> vector<16x256xf32>
    %c32 = arith.constant 32 : index
    %c0_14 = arith.constant 0 : index
    %13 = vector.load %arg7[%c32, %c0_14] : memref<128x256xf32, #tpu.memory_space<vmem>>, vector<16x256xf32>
    tpu.vector_store %arg7[%c32, %c0_14], %12 {strides = array<i32>} : memref<128x256xf32, #tpu.memory_space<vmem>>, vector<16x256xf32>,
    %c1_i32 = arith.constant 1 : i32
    %14 = tpu.dynamic_rotate %3 by %c1_i32 dim 1 : vector<16x256xf32>, i32 -> vector<16x256xf32>
    %c48 = arith.constant 48 : index
    %c0_15 = arith.constant 0 : index
    %15 = vector.load %arg7[%c48, %c0_15] : memref<128x256xf32, #tpu.memory_space<vmem>>, vector<16x256xf32>
    tpu.vector_store %arg7[%c48, %c0_15], %14 {strides = array<i32>} : memref<128x256xf32, #tpu.memory_space<vmem>>, vector<16x256xf32>,
    %c255_i32 = arith.constant 255 : i32
    %16 = tpu.dynamic_rotate %3 by %c255_i32 dim 1 : vector<16x256xf32>, i32 -> vector<16x256xf32>
    %c64 = arith.constant 64 : index
    %c0_16 = arith.constant 0 : index
    %17 = vector.load %arg7[%c64, %c0_16] : memref<128x256xf32, #tpu.memory_space<vmem>>, vector<16x256xf32>
    tpu.vector_store %arg7[%c64, %c0_16], %16 {strides = array<i32>} : memref<128x256xf32, #tpu.memory_space<vmem>>, vector<16x256xf32>,
    %c247_i32 = arith.constant 247 : i32
    %18 = tpu.dynamic_rotate %3 by %c247_i32 dim 1 : vector<16x256xf32>, i32 -> vector<16x256xf32>
    %c80 = arith.constant 80 : index
    %c0_17 = arith.constant 0 : index
    %19 = vector.load %arg7[%c80, %c0_17] : memref<128x256xf32, #tpu.memory_space<vmem>>, vector<16x256xf32>
    tpu.vector_store %arg7[%c80, %c0_17], %18 {strides = array<i32>} : memref<128x256xf32, #tpu.memory_space<vmem>>, vector<16x256xf32>,
    %c246_i32 = arith.constant 246 : i32
    %20 = tpu.dynamic_rotate %3 by %c246_i32 dim 1 : vector<16x256xf32>, i32 -> vector<16x256xf32>
    %c96 = arith.constant 96 : index
    %c0_18 = arith.constant 0 : index
    %21 = vector.load %arg7[%c96, %c0_18] : memref<128x256xf32, #tpu.memory_space<vmem>>, vector<16x256xf32>
    tpu.vector_store %arg7[%c96, %c0_18], %20 {strides = array<i32>} : memref<128x256xf32, #tpu.memory_space<vmem>>, vector<16x256xf32>,
    %c245_i32 = arith.constant 245 : i32
    %22 = tpu.dynamic_rotate %3 by %c245_i32 dim 1 : vector<16x256xf32>, i32 -> vector<16x256xf32>
    %c112 = arith.constant 112 : index
    %c0_19 = arith.constant 0 : index
    %23 = vector.load %arg7[%c112, %c0_19] : memref<128x256xf32, #tpu.memory_space<vmem>>, vector<16x256xf32>
    tpu.vector_store %arg7[%c112, %c0_19], %22 {strides = array<i32>} : memref<128x256xf32, #tpu.memory_space<vmem>>, vector<16x256xf32>,
    %c0_20 = arith.constant 0 : index
    %c0_21 = arith.constant 0 : index
    %24 = vector.load %arg7[%c0_20, %c0_21] : memref<128x256xf32, #tpu.memory_space<vmem>>, vector<128x256xf32>
    %cst_22 = arith.constant dense<0.000000e+00> : vector<16x256xf32>
    %25 = tpu.matmul %4, %24, %cst_22 {dimension_numbers = #tpu.dot_dimension_numbers<[1], [0], [0], [1], [0, 0, 1, 1], [], []>} : vector<16x128xf32>, vector<128x256xf32>, vector<16x256xf32> -> vector<16x256xf32>
    %26 = arith.addf %7, %25 : vector<16x256xf32>
    %27 = vector.broadcast %6 : vector<16x1xf32> to vector<16x256xf32>
    %28 = arith.addf %26, %27 : vector<16x256xf32>
    %cst_23 = arith.constant 0.000000e+00 : f32
    %29 = vector.broadcast %cst_23 : f32 to vector<16x256xf32>
    %30 = arith.maximumf %28, %29 : vector<16x256xf32>
    %31 = vector.broadcast %0 : vector<1x256xf32> to vector<16x256xf32>
    %32 = arith.mulf %30, %31 : vector<16x256xf32>
    %c0_24 = arith.constant 0 : index
    %c0_25 = arith.constant 0 : index
    %33 = vector.load %arg6[%c0_24, %c0_25] : memref<16x256xf32, #tpu.memory_space<vmem>>, vector<16x256xf32>
    tpu.vector_store %arg6[%c0_24, %c0_25], %32 {strides = array<i32>} : memref<16x256xf32, #tpu.memory_space<vmem>>, vector<16x256xf32>,
    %c0_26 = arith.constant 0 : index
    %c0_27 = arith.constant 0 : index
    %34 = vector.load %arg6[%c0_26, %c0_27] : memref<16x256xf32, #tpu.memory_space<vmem>>, vector<16x256xf32>
    %c16_28 = arith.constant 16 : index
    %c0_29 = arith.constant 0 : index
    %35 = vector.load %arg1[%c16_28, %c0_29] : memref<112x145xf32, #tpu.memory_space<vmem>>, vector<16x128xf32>
    %c16_30 = arith.constant 16 : index
    %c128_31 = arith.constant 128 : index
    %36 = vector.load %arg1[%c16_30, %c128_31] : memref<112x145xf32, #tpu.memory_space<vmem>>, vector<16x16xf32>
    %c16_32 = arith.constant 16 : index
    %c144_33 = arith.constant 144 : index
    %37 = vector.load %arg1[%c16_32, %c144_33] : memref<112x145xf32, #tpu.memory_space<vmem>>, vector<16x1xf32>
    %cst_34 = arith.constant dense<0.000000e+00> : vector<16x256xf32>
    %38 = tpu.matmul %36, %34, %cst_34 {dimension_numbers = #tpu.dot_dimension_numbers<[1], [0], [0], [1], [0, 0, 1, 1], [], []>} : vector<16x16xf32>, vector<16x256xf32>, vector<16x256xf32> -> vector<16x256xf32>
    %c11_i32_35 = arith.constant 11 : i32
    %39 = tpu.dynamic_rotate %34 by %c11_i32_35 dim 1 : vector<16x256xf32>, i32 -> vector<16x256xf32>
    %c0_36 = arith.constant 0 : index
    %c0_37 = arith.constant 0 : index
    %40 = vector.load %arg7[%c0_36, %c0_37] : memref<128x256xf32, #tpu.memory_space<vmem>>, vector<16x256xf32>
    tpu.vector_store %arg7[%c0_36, %c0_37], %39 {strides = array<i32>} : memref<128x256xf32, #tpu.memory_space<vmem>>, vector<16x256xf32>,
    %c10_i32_38 = arith.constant 10 : i32
    %41 = tpu.dynamic_rotate %34 by %c10_i32_38 dim 1 : vector<16x256xf32>, i32 -> vector<16x256xf32>
    %c16_39 = arith.constant 16 : index
    %c0_40 = arith.constant 0 : index
    %42 = vector.load %arg7[%c16_39, %c0_40] : memref<128x256xf32, #tpu.memory_space<vmem>>, vector<16x256xf32>
    tpu.vector_store %arg7[%c16_39, %c0_40], %41 {strides = array<i32>} : memref<128x256xf32, #tpu.memory_space<vmem>>, vector<16x256xf32>,
    %c9_i32_41 = arith.constant 9 : i32
    %43 = tpu.dynamic_rotate %34 by %c9_i32_41 dim 1 : vector<16x256xf32>, i32 -> vector<16x256xf32>
    %c32_42 = arith.constant 32 : index
    %c0_43 = arith.constant 0 : index
    %44 = vector.load %arg7[%c32_42, %c0_43] : memref<128x256xf32, #tpu.memory_space<vmem>>, vector<16x256xf32>
    tpu.vector_store %arg7[%c32_42, %c0_43], %43 {strides = array<i32>} : memref<128x256xf32, #tpu.memory_space<vmem>>, vector<16x256xf32>,
    %c1_i32_44 = arith.constant 1 : i32
    %45 = tpu.dynamic_rotate %34 by %c1_i32_44 dim 1 : vector<16x256xf32>, i32 -> vector<16x256xf32>
    %c48_45 = arith.constant 48 : index
    %c0_46 = arith.constant 0 : index
    %46 = vector.load %arg7[%c48_45, %c0_46] : memref<128x256xf32, #tpu.memory_space<vmem>>, vector<16x256xf32>
    tpu.vector_store %arg7[%c48_45, %c0_46], %45 {strides = array<i32>} : memref<128x256xf32, #tpu.memory_space<vmem>>, vector<16x256xf32>,
    %c255_i32_47 = arith.constant 255 : i32
    %47 = tpu.dynamic_rotate %34 by %c255_i32_47 dim 1 : vector<16x256xf32>, i32 -> vector<16x256xf32>
    %c64_48 = arith.constant 64 : index
    %c0_49 = arith.constant 0 : index
    %48 = vector.load %arg7[%c64_48, %c0_49] : memref<128x256xf32, #tpu.memory_space<vmem>>, vector<16x256xf32>
    tpu.vector_store %arg7[%c64_48, %c0_49], %47 {strides = array<i32>} : memref<128x256xf32, #tpu.memory_space<vmem>>, vector<16x256xf32>,
    %c247_i32_50 = arith.constant 247 : i32
    %49 = tpu.dynamic_rotate %34 by %c247_i32_50 dim 1 : vector<16x256xf32>, i32 -> vector<16x256xf32>
    %c80_51 = arith.constant 80 : index
    %c0_52 = arith.constant 0 : index
    %50 = vector.load %arg7[%c80_51, %c0_52] : memref<128x256xf32, #tpu.memory_space<vmem>>, vector<16x256xf32>
    tpu.vector_store %arg7[%c80_51, %c0_52], %49 {strides = array<i32>} : memref<128x256xf32, #tpu.memory_space<vmem>>, vector<16x256xf32>,
    %c246_i32_53 = arith.constant 246 : i32
    %51 = tpu.dynamic_rotate %34 by %c246_i32_53 dim 1 : vector<16x256xf32>, i32 -> vector<16x256xf32>
    %c96_54 = arith.constant 96 : index
    %c0_55 = arith.constant 0 : index
    %52 = vector.load %arg7[%c96_54, %c0_55] : memref<128x256xf32, #tpu.memory_space<vmem>>, vector<16x256xf32>
    tpu.vector_store %arg7[%c96_54, %c0_55], %51 {strides = array<i32>} : memref<128x256xf32, #tpu.memory_space<vmem>>, vector<16x256xf32>,
    %c245_i32_56 = arith.constant 245 : i32
    %53 = tpu.dynamic_rotate %34 by %c245_i32_56 dim 1 : vector<16x256xf32>, i32 -> vector<16x256xf32>
    %c112_57 = arith.constant 112 : index
    %c0_58 = arith.constant 0 : index
    %54 = vector.load %arg7[%c112_57, %c0_58] : memref<128x256xf32, #tpu.memory_space<vmem>>, vector<16x256xf32>
    tpu.vector_store %arg7[%c112_57, %c0_58], %53 {strides = array<i32>} : memref<128x256xf32, #tpu.memory_space<vmem>>, vector<16x256xf32>,
    %c0_59 = arith.constant 0 : index
    %c0_60 = arith.constant 0 : index
    %55 = vector.load %arg7[%c0_59, %c0_60] : memref<128x256xf32, #tpu.memory_space<vmem>>, vector<128x256xf32>
    %cst_61 = arith.constant dense<0.000000e+00> : vector<16x256xf32>
    %56 = tpu.matmul %35, %55, %cst_61 {dimension_numbers = #tpu.dot_dimension_numbers<[1], [0], [0], [1], [0, 0, 1, 1], [], []>} : vector<16x128xf32>, vector<128x256xf32>, vector<16x256xf32> -> vector<16x256xf32>
    %57 = arith.addf %38, %56 : vector<16x256xf32>
    %58 = vector.broadcast %37 : vector<16x1xf32> to vector<16x256xf32>
    %59 = arith.addf %57, %58 : vector<16x256xf32>
    %60 = arith.addf %34, %59 : vector<16x256xf32>
    %cst_62 = arith.constant 0.000000e+00 : f32
    %61 = vector.broadcast %cst_62 : f32 to vector<16x256xf32>
    %62 = arith.maximumf %60, %61 : vector<16x256xf32>
    %63 = vector.broadcast %0 : vector<1x256xf32> to vector<16x256xf32>
    %64 = arith.mulf %62, %63 : vector<16x256xf32>
    %c0_63 = arith.constant 0 : index
    %c0_64 = arith.constant 0 : index
    %65 = vector.load %arg6[%c0_63, %c0_64] : memref<16x256xf32, #tpu.memory_space<vmem>>, vector<16x256xf32>
    tpu.vector_store %arg6[%c0_63, %c0_64], %64 {strides = array<i32>} : memref<16x256xf32, #tpu.memory_space<vmem>>, vector<16x256xf32>,
    %c0_65 = arith.constant 0 : index
    %c0_66 = arith.constant 0 : index
    %66 = vector.load %arg6[%c0_65, %c0_66] : memref<16x256xf32, #tpu.memory_space<vmem>>, vector<16x256xf32>
    %c32_67 = arith.constant 32 : index
    %c0_68 = arith.constant 0 : index
    %67 = vector.load %arg1[%c32_67, %c0_68] : memref<112x145xf32, #tpu.memory_space<vmem>>, vector<16x128xf32>
    %c32_69 = arith.constant 32 : index
    %c128_70 = arith.constant 128 : index
    %68 = vector.load %arg1[%c32_69, %c128_70] : memref<112x145xf32, #tpu.memory_space<vmem>>, vector<16x16xf32>
    %c32_71 = arith.constant 32 : index
    %c144_72 = arith.constant 144 : index
    %69 = vector.load %arg1[%c32_71, %c144_72] : memref<112x145xf32, #tpu.memory_space<vmem>>, vector<16x1xf32>
    %cst_73 = arith.constant dense<0.000000e+00> : vector<16x256xf32>
    %70 = tpu.matmul %68, %66, %cst_73 {dimension_numbers = #tpu.dot_dimension_numbers<[1], [0], [0], [1], [0, 0, 1, 1], [], []>} : vector<16x16xf32>, vector<16x256xf32>, vector<16x256xf32> -> vector<16x256xf32>
    %c11_i32_74 = arith.constant 11 : i32
    %71 = tpu.dynamic_rotate %66 by %c11_i32_74 dim 1 : vector<16x256xf32>, i32 -> vector<16x256xf32>
    %c0_75 = arith.constant 0 : index
    %c0_76 = arith.constant 0 : index
    %72 = vector.load %arg7[%c0_75, %c0_76] : memref<128x256xf32, #tpu.memory_space<vmem>>, vector<16x256xf32>
    tpu.vector_store %arg7[%c0_75, %c0_76], %71 {strides = array<i32>} : memref<128x256xf32, #tpu.memory_space<vmem>>, vector<16x256xf32>,
    %c10_i32_77 = arith.constant 10 : i32
    %73 = tpu.dynamic_rotate %66 by %c10_i32_77 dim 1 : vector<16x256xf32>, i32 -> vector<16x256xf32>
    %c16_78 = arith.constant 16 : index
    %c0_79 = arith.constant 0 : index
    %74 = vector.load %arg7[%c16_78, %c0_79] : memref<128x256xf32, #tpu.memory_space<vmem>>, vector<16x256xf32>
    tpu.vector_store %arg7[%c16_78, %c0_79], %73 {strides = array<i32>} : memref<128x256xf32, #tpu.memory_space<vmem>>, vector<16x256xf32>,
    %c9_i32_80 = arith.constant 9 : i32
    %75 = tpu.dynamic_rotate %66 by %c9_i32_80 dim 1 : vector<16x256xf32>, i32 -> vector<16x256xf32>
    %c32_81 = arith.constant 32 : index
    %c0_82 = arith.constant 0 : index
    %76 = vector.load %arg7[%c32_81, %c0_82] : memref<128x256xf32, #tpu.memory_space<vmem>>, vector<16x256xf32>
    tpu.vector_store %arg7[%c32_81, %c0_82], %75 {strides = array<i32>} : memref<128x256xf32, #tpu.memory_space<vmem>>, vector<16x256xf32>,
    %c1_i32_83 = arith.constant 1 : i32
    %77 = tpu.dynamic_rotate %66 by %c1_i32_83 dim 1 : vector<16x256xf32>, i32 -> vector<16x256xf32>
    %c48_84 = arith.constant 48 : index
    %c0_85 = arith.constant 0 : index
    %78 = vector.load %arg7[%c48_84, %c0_85] : memref<128x256xf32, #tpu.memory_space<vmem>>, vector<16x256xf32>
    tpu.vector_store %arg7[%c48_84, %c0_85], %77 {strides = array<i32>} : memref<128x256xf32, #tpu.memory_space<vmem>>, vector<16x256xf32>,
    %c255_i32_86 = arith.constant 255 : i32
    %79 = tpu.dynamic_rotate %66 by %c255_i32_86 dim 1 : vector<16x256xf32>, i32 -> vector<16x256xf32>
    %c64_87 = arith.constant 64 : index
    %c0_88 = arith.constant 0 : index
    %80 = vector.load %arg7[%c64_87, %c0_88] : memref<128x256xf32, #tpu.memory_space<vmem>>, vector<16x256xf32>
    tpu.vector_store %arg7[%c64_87, %c0_88], %79 {strides = array<i32>} : memref<128x256xf32, #tpu.memory_space<vmem>>, vector<16x256xf32>,
    %c247_i32_89 = arith.constant 247 : i32
    %81 = tpu.dynamic_rotate %66 by %c247_i32_89 dim 1 : vector<16x256xf32>, i32 -> vector<16x256xf32>
    %c80_90 = arith.constant 80 : index
    %c0_91 = arith.constant 0 : index
    %82 = vector.load %arg7[%c80_90, %c0_91] : memref<128x256xf32, #tpu.memory_space<vmem>>, vector<16x256xf32>
    tpu.vector_store %arg7[%c80_90, %c0_91], %81 {strides = array<i32>} : memref<128x256xf32, #tpu.memory_space<vmem>>, vector<16x256xf32>,
    %c246_i32_92 = arith.constant 246 : i32
    %83 = tpu.dynamic_rotate %66 by %c246_i32_92 dim 1 : vector<16x256xf32>, i32 -> vector<16x256xf32>
    %c96_93 = arith.constant 96 : index
    %c0_94 = arith.constant 0 : index
    %84 = vector.load %arg7[%c96_93, %c0_94] : memref<128x256xf32, #tpu.memory_space<vmem>>, vector<16x256xf32>
    tpu.vector_store %arg7[%c96_93, %c0_94], %83 {strides = array<i32>} : memref<128x256xf32, #tpu.memory_space<vmem>>, vector<16x256xf32>,
    %c245_i32_95 = arith.constant 245 : i32
    %85 = tpu.dynamic_rotate %66 by %c245_i32_95 dim 1 : vector<16x256xf32>, i32 -> vector<16x256xf32>
    %c112_96 = arith.constant 112 : index
    %c0_97 = arith.constant 0 : index
    %86 = vector.load %arg7[%c112_96, %c0_97] : memref<128x256xf32, #tpu.memory_space<vmem>>, vector<16x256xf32>
    tpu.vector_store %arg7[%c112_96, %c0_97], %85 {strides = array<i32>} : memref<128x256xf32, #tpu.memory_space<vmem>>, vector<16x256xf32>,
    %c0_98 = arith.constant 0 : index
    %c0_99 = arith.constant 0 : index
    %87 = vector.load %arg7[%c0_98, %c0_99] : memref<128x256xf32, #tpu.memory_space<vmem>>, vector<128x256xf32>
    %cst_100 = arith.constant dense<0.000000e+00> : vector<16x256xf32>
    %88 = tpu.matmul %67, %87, %cst_100 {dimension_numbers = #tpu.dot_dimension_numbers<[1], [0], [0], [1], [0, 0, 1, 1], [], []>} : vector<16x128xf32>, vector<128x256xf32>, vector<16x256xf32> -> vector<16x256xf32>
    %89 = arith.addf %70, %88 : vector<16x256xf32>
    %90 = vector.broadcast %69 : vector<16x1xf32> to vector<16x256xf32>
    %91 = arith.addf %89, %90 : vector<16x256xf32>
    %92 = arith.addf %66, %91 : vector<16x256xf32>
    %cst_101 = arith.constant 0.000000e+00 : f32
    %93 = vector.broadcast %cst_101 : f32 to vector<16x256xf32>
    %94 = arith.maximumf %92, %93 : vector<16x256xf32>
    %95 = vector.broadcast %0 : vector<1x256xf32> to vector<16x256xf32>
    %96 = arith.mulf %94, %95 : vector<16x256xf32>
    %c0_102 = arith.constant 0 : index
    %c0_103 = arith.constant 0 : index
    %97 = vector.load %arg6[%c0_102, %c0_103] : memref<16x256xf32, #tpu.memory_space<vmem>>, vector<16x256xf32>
    tpu.vector_store %arg6[%c0_102, %c0_103], %96 {strides = array<i32>} : memref<16x256xf32, #tpu.memory_space<vmem>>, vector<16x256xf32>,
    %c0_104 = arith.constant 0 : index
    %c0_105 = arith.constant 0 : index
    %98 = vector.load %arg6[%c0_104, %c0_105] : memref<16x256xf32, #tpu.memory_space<vmem>>, vector<16x256xf32>
    %c48_106 = arith.constant 48 : index
    %c0_107 = arith.constant 0 : index
    %99 = vector.load %arg1[%c48_106, %c0_107] : memref<112x145xf32, #tpu.memory_space<vmem>>, vector<16x128xf32>
    %c48_108 = arith.constant 48 : index
    %c128_109 = arith.constant 128 : index
    %100 = vector.load %arg1[%c48_108, %c128_109] : memref<112x145xf32, #tpu.memory_space<vmem>>, vector<16x16xf32>
    %c48_110 = arith.constant 48 : index
    %c144_111 = arith.constant 144 : index
    %101 = vector.load %arg1[%c48_110, %c144_111] : memref<112x145xf32, #tpu.memory_space<vmem>>, vector<16x1xf32>
    %cst_112 = arith.constant dense<0.000000e+00> : vector<16x256xf32>
    %102 = tpu.matmul %100, %98, %cst_112 {dimension_numbers = #tpu.dot_dimension_numbers<[1], [0], [0], [1], [0, 0, 1, 1], [], []>} : vector<16x16xf32>, vector<16x256xf32>, vector<16x256xf32> -> vector<16x256xf32>
    %c11_i32_113 = arith.constant 11 : i32
    %103 = tpu.dynamic_rotate %98 by %c11_i32_113 dim 1 : vector<16x256xf32>, i32 -> vector<16x256xf32>
    %c0_114 = arith.constant 0 : index
    %c0_115 = arith.constant 0 : index
    %104 = vector.load %arg7[%c0_114, %c0_115] : memref<128x256xf32, #tpu.memory_space<vmem>>, vector<16x256xf32>
    tpu.vector_store %arg7[%c0_114, %c0_115], %103 {strides = array<i32>} : memref<128x256xf32, #tpu.memory_space<vmem>>, vector<16x256xf32>,
    %c10_i32_116 = arith.constant 10 : i32
    %105 = tpu.dynamic_rotate %98 by %c10_i32_116 dim 1 : vector<16x256xf32>, i32 -> vector<16x256xf32>
    %c16_117 = arith.constant 16 : index
    %c0_118 = arith.constant 0 : index
    %106 = vector.load %arg7[%c16_117, %c0_118] : memref<128x256xf32, #tpu.memory_space<vmem>>, vector<16x256xf32>
    tpu.vector_store %arg7[%c16_117, %c0_118], %105 {strides = array<i32>} : memref<128x256xf32, #tpu.memory_space<vmem>>, vector<16x256xf32>,
    %c9_i32_119 = arith.constant 9 : i32
    %107 = tpu.dynamic_rotate %98 by %c9_i32_119 dim 1 : vector<16x256xf32>, i32 -> vector<16x256xf32>
    %c32_120 = arith.constant 32 : index
    %c0_121 = arith.constant 0 : index
    %108 = vector.load %arg7[%c32_120, %c0_121] : memref<128x256xf32, #tpu.memory_space<vmem>>, vector<16x256xf32>
    tpu.vector_store %arg7[%c32_120, %c0_121], %107 {strides = array<i32>} : memref<128x256xf32, #tpu.memory_space<vmem>>, vector<16x256xf32>,
    %c1_i32_122 = arith.constant 1 : i32
    %109 = tpu.dynamic_rotate %98 by %c1_i32_122 dim 1 : vector<16x256xf32>, i32 -> vector<16x256xf32>
    %c48_123 = arith.constant 48 : index
    %c0_124 = arith.constant 0 : index
    %110 = vector.load %arg7[%c48_123, %c0_124] : memref<128x256xf32, #tpu.memory_space<vmem>>, vector<16x256xf32>
    tpu.vector_store %arg7[%c48_123, %c0_124], %109 {strides = array<i32>} : memref<128x256xf32, #tpu.memory_space<vmem>>, vector<16x256xf32>,
    %c255_i32_125 = arith.constant 255 : i32
    %111 = tpu.dynamic_rotate %98 by %c255_i32_125 dim 1 : vector<16x256xf32>, i32 -> vector<16x256xf32>
    %c64_126 = arith.constant 64 : index
    %c0_127 = arith.constant 0 : index
    %112 = vector.load %arg7[%c64_126, %c0_127] : memref<128x256xf32, #tpu.memory_space<vmem>>, vector<16x256xf32>
    tpu.vector_store %arg7[%c64_126, %c0_127], %111 {strides = array<i32>} : memref<128x256xf32, #tpu.memory_space<vmem>>, vector<16x256xf32>,
    %c247_i32_128 = arith.constant 247 : i32
    %113 = tpu.dynamic_rotate %98 by %c247_i32_128 dim 1 : vector<16x256xf32>, i32 -> vector<16x256xf32>
    %c80_129 = arith.constant 80 : index
    %c0_130 = arith.constant 0 : index
    %114 = vector.load %arg7[%c80_129, %c0_130] : memref<128x256xf32, #tpu.memory_space<vmem>>, vector<16x256xf32>
    tpu.vector_store %arg7[%c80_129, %c0_130], %113 {strides = array<i32>} : memref<128x256xf32, #tpu.memory_space<vmem>>, vector<16x256xf32>,
    %c246_i32_131 = arith.constant 246 : i32
    %115 = tpu.dynamic_rotate %98 by %c246_i32_131 dim 1 : vector<16x256xf32>, i32 -> vector<16x256xf32>
    %c96_132 = arith.constant 96 : index
    %c0_133 = arith.constant 0 : index
    %116 = vector.load %arg7[%c96_132, %c0_133] : memref<128x256xf32, #tpu.memory_space<vmem>>, vector<16x256xf32>
    tpu.vector_store %arg7[%c96_132, %c0_133], %115 {strides = array<i32>} : memref<128x256xf32, #tpu.memory_space<vmem>>, vector<16x256xf32>,
    %c245_i32_134 = arith.constant 245 : i32
    %117 = tpu.dynamic_rotate %98 by %c245_i32_134 dim 1 : vector<16x256xf32>, i32 -> vector<16x256xf32>
    %c112_135 = arith.constant 112 : index
    %c0_136 = arith.constant 0 : index
    %118 = vector.load %arg7[%c112_135, %c0_136] : memref<128x256xf32, #tpu.memory_space<vmem>>, vector<16x256xf32>
    tpu.vector_store %arg7[%c112_135, %c0_136], %117 {strides = array<i32>} : memref<128x256xf32, #tpu.memory_space<vmem>>, vector<16x256xf32>,
    %c0_137 = arith.constant 0 : index
    %c0_138 = arith.constant 0 : index
    %119 = vector.load %arg7[%c0_137, %c0_138] : memref<128x256xf32, #tpu.memory_space<vmem>>, vector<128x256xf32>
    %cst_139 = arith.constant dense<0.000000e+00> : vector<16x256xf32>
    %120 = tpu.matmul %99, %119, %cst_139 {dimension_numbers = #tpu.dot_dimension_numbers<[1], [0], [0], [1], [0, 0, 1, 1], [], []>} : vector<16x128xf32>, vector<128x256xf32>, vector<16x256xf32> -> vector<16x256xf32>
    %121 = arith.addf %102, %120 : vector<16x256xf32>
    %122 = vector.broadcast %101 : vector<16x1xf32> to vector<16x256xf32>
    %123 = arith.addf %121, %122 : vector<16x256xf32>
    %124 = arith.addf %98, %123 : vector<16x256xf32>
    %cst_140 = arith.constant 0.000000e+00 : f32
    %125 = vector.broadcast %cst_140 : f32 to vector<16x256xf32>
    %126 = arith.maximumf %124, %125 : vector<16x256xf32>
    %127 = vector.broadcast %0 : vector<1x256xf32> to vector<16x256xf32>
    %128 = arith.mulf %126, %127 : vector<16x256xf32>
    %c0_141 = arith.constant 0 : index
    %c0_142 = arith.constant 0 : index
    %129 = vector.load %arg6[%c0_141, %c0_142] : memref<16x256xf32, #tpu.memory_space<vmem>>, vector<16x256xf32>
    tpu.vector_store %arg6[%c0_141, %c0_142], %128 {strides = array<i32>} : memref<16x256xf32, #tpu.memory_space<vmem>>, vector<16x256xf32>,
    %c0_143 = arith.constant 0 : index
    %c0_144 = arith.constant 0 : index
    %130 = vector.load %arg6[%c0_143, %c0_144] : memref<16x256xf32, #tpu.memory_space<vmem>>, vector<16x256xf32>
    %c64_145 = arith.constant 64 : index
    %c0_146 = arith.constant 0 : index
    %131 = vector.load %arg1[%c64_145, %c0_146] : memref<112x145xf32, #tpu.memory_space<vmem>>, vector<16x128xf32>
    %c64_147 = arith.constant 64 : index
    %c128_148 = arith.constant 128 : index
    %132 = vector.load %arg1[%c64_147, %c128_148] : memref<112x145xf32, #tpu.memory_space<vmem>>, vector<16x16xf32>
    %c64_149 = arith.constant 64 : index
    %c144_150 = arith.constant 144 : index
    %133 = vector.load %arg1[%c64_149, %c144_150] : memref<112x145xf32, #tpu.memory_space<vmem>>, vector<16x1xf32>
    %cst_151 = arith.constant dense<0.000000e+00> : vector<16x256xf32>
    %134 = tpu.matmul %132, %130, %cst_151 {dimension_numbers = #tpu.dot_dimension_numbers<[1], [0], [0], [1], [0, 0, 1, 1], [], []>} : vector<16x16xf32>, vector<16x256xf32>, vector<16x256xf32> -> vector<16x256xf32>
    %c11_i32_152 = arith.constant 11 : i32
    %135 = tpu.dynamic_rotate %130 by %c11_i32_152 dim 1 : vector<16x256xf32>, i32 -> vector<16x256xf32>
    %c0_153 = arith.constant 0 : index
    %c0_154 = arith.constant 0 : index
    %136 = vector.load %arg7[%c0_153, %c0_154] : memref<128x256xf32, #tpu.memory_space<vmem>>, vector<16x256xf32>
    tpu.vector_store %arg7[%c0_153, %c0_154], %135 {strides = array<i32>} : memref<128x256xf32, #tpu.memory_space<vmem>>, vector<16x256xf32>,
    %c10_i32_155 = arith.constant 10 : i32
    %137 = tpu.dynamic_rotate %130 by %c10_i32_155 dim 1 : vector<16x256xf32>, i32 -> vector<16x256xf32>
    %c16_156 = arith.constant 16 : index
    %c0_157 = arith.constant 0 : index
    %138 = vector.load %arg7[%c16_156, %c0_157] : memref<128x256xf32, #tpu.memory_space<vmem>>, vector<16x256xf32>
    tpu.vector_store %arg7[%c16_156, %c0_157], %137 {strides = array<i32>} : memref<128x256xf32, #tpu.memory_space<vmem>>, vector<16x256xf32>,
    %c9_i32_158 = arith.constant 9 : i32
    %139 = tpu.dynamic_rotate %130 by %c9_i32_158 dim 1 : vector<16x256xf32>, i32 -> vector<16x256xf32>
    %c32_159 = arith.constant 32 : index
    %c0_160 = arith.constant 0 : index
    %140 = vector.load %arg7[%c32_159, %c0_160] : memref<128x256xf32, #tpu.memory_space<vmem>>, vector<16x256xf32>
    tpu.vector_store %arg7[%c32_159, %c0_160], %139 {strides = array<i32>} : memref<128x256xf32, #tpu.memory_space<vmem>>, vector<16x256xf32>,
    %c1_i32_161 = arith.constant 1 : i32
    %141 = tpu.dynamic_rotate %130 by %c1_i32_161 dim 1 : vector<16x256xf32>, i32 -> vector<16x256xf32>
    %c48_162 = arith.constant 48 : index
    %c0_163 = arith.constant 0 : index
    %142 = vector.load %arg7[%c48_162, %c0_163] : memref<128x256xf32, #tpu.memory_space<vmem>>, vector<16x256xf32>
    tpu.vector_store %arg7[%c48_162, %c0_163], %141 {strides = array<i32>} : memref<128x256xf32, #tpu.memory_space<vmem>>, vector<16x256xf32>,
    %c255_i32_164 = arith.constant 255 : i32
    %143 = tpu.dynamic_rotate %130 by %c255_i32_164 dim 1 : vector<16x256xf32>, i32 -> vector<16x256xf32>
    %c64_165 = arith.constant 64 : index
    %c0_166 = arith.constant 0 : index
    %144 = vector.load %arg7[%c64_165, %c0_166] : memref<128x256xf32, #tpu.memory_space<vmem>>, vector<16x256xf32>
    tpu.vector_store %arg7[%c64_165, %c0_166], %143 {strides = array<i32>} : memref<128x256xf32, #tpu.memory_space<vmem>>, vector<16x256xf32>,
    %c247_i32_167 = arith.constant 247 : i32
    %145 = tpu.dynamic_rotate %130 by %c247_i32_167 dim 1 : vector<16x256xf32>, i32 -> vector<16x256xf32>
    %c80_168 = arith.constant 80 : index
    %c0_169 = arith.constant 0 : index
    %146 = vector.load %arg7[%c80_168, %c0_169] : memref<128x256xf32, #tpu.memory_space<vmem>>, vector<16x256xf32>
    tpu.vector_store %arg7[%c80_168, %c0_169], %145 {strides = array<i32>} : memref<128x256xf32, #tpu.memory_space<vmem>>, vector<16x256xf32>,
    %c246_i32_170 = arith.constant 246 : i32
    %147 = tpu.dynamic_rotate %130 by %c246_i32_170 dim 1 : vector<16x256xf32>, i32 -> vector<16x256xf32>
    %c96_171 = arith.constant 96 : index
    %c0_172 = arith.constant 0 : index
    %148 = vector.load %arg7[%c96_171, %c0_172] : memref<128x256xf32, #tpu.memory_space<vmem>>, vector<16x256xf32>
    tpu.vector_store %arg7[%c96_171, %c0_172], %147 {strides = array<i32>} : memref<128x256xf32, #tpu.memory_space<vmem>>, vector<16x256xf32>,
    %c245_i32_173 = arith.constant 245 : i32
    %149 = tpu.dynamic_rotate %130 by %c245_i32_173 dim 1 : vector<16x256xf32>, i32 -> vector<16x256xf32>
    %c112_174 = arith.constant 112 : index
    %c0_175 = arith.constant 0 : index
    %150 = vector.load %arg7[%c112_174, %c0_175] : memref<128x256xf32, #tpu.memory_space<vmem>>, vector<16x256xf32>
    tpu.vector_store %arg7[%c112_174, %c0_175], %149 {strides = array<i32>} : memref<128x256xf32, #tpu.memory_space<vmem>>, vector<16x256xf32>,
    %c0_176 = arith.constant 0 : index
    %c0_177 = arith.constant 0 : index
    %151 = vector.load %arg7[%c0_176, %c0_177] : memref<128x256xf32, #tpu.memory_space<vmem>>, vector<128x256xf32>
    %cst_178 = arith.constant dense<0.000000e+00> : vector<16x256xf32>
    %152 = tpu.matmul %131, %151, %cst_178 {dimension_numbers = #tpu.dot_dimension_numbers<[1], [0], [0], [1], [0, 0, 1, 1], [], []>} : vector<16x128xf32>, vector<128x256xf32>, vector<16x256xf32> -> vector<16x256xf32>
    %153 = arith.addf %134, %152 : vector<16x256xf32>
    %154 = vector.broadcast %133 : vector<16x1xf32> to vector<16x256xf32>
    %155 = arith.addf %153, %154 : vector<16x256xf32>
    %156 = arith.addf %130, %155 : vector<16x256xf32>
    %cst_179 = arith.constant 0.000000e+00 : f32
    %157 = vector.broadcast %cst_179 : f32 to vector<16x256xf32>
    %158 = arith.maximumf %156, %157 : vector<16x256xf32>
    %159 = vector.broadcast %0 : vector<1x256xf32> to vector<16x256xf32>
    %160 = arith.mulf %158, %159 : vector<16x256xf32>
    %c0_180 = arith.constant 0 : index
    %c0_181 = arith.constant 0 : index
    %161 = vector.load %arg6[%c0_180, %c0_181] : memref<16x256xf32, #tpu.memory_space<vmem>>, vector<16x256xf32>
    tpu.vector_store %arg6[%c0_180, %c0_181], %160 {strides = array<i32>} : memref<16x256xf32, #tpu.memory_space<vmem>>, vector<16x256xf32>,
    %c0_182 = arith.constant 0 : index
    %c0_183 = arith.constant 0 : index
    %162 = vector.load %arg6[%c0_182, %c0_183] : memref<16x256xf32, #tpu.memory_space<vmem>>, vector<16x256xf32>
    %c80_184 = arith.constant 80 : index
    %c0_185 = arith.constant 0 : index
    %163 = vector.load %arg1[%c80_184, %c0_185] : memref<112x145xf32, #tpu.memory_space<vmem>>, vector<16x128xf32>
    %c80_186 = arith.constant 80 : index
    %c128_187 = arith.constant 128 : index
    %164 = vector.load %arg1[%c80_186, %c128_187] : memref<112x145xf32, #tpu.memory_space<vmem>>, vector<16x16xf32>
    %c80_188 = arith.constant 80 : index
    %c144_189 = arith.constant 144 : index
    %165 = vector.load %arg1[%c80_188, %c144_189] : memref<112x145xf32, #tpu.memory_space<vmem>>, vector<16x1xf32>
    %cst_190 = arith.constant dense<0.000000e+00> : vector<16x256xf32>
    %166 = tpu.matmul %164, %162, %cst_190 {dimension_numbers = #tpu.dot_dimension_numbers<[1], [0], [0], [1], [0, 0, 1, 1], [], []>} : vector<16x16xf32>, vector<16x256xf32>, vector<16x256xf32> -> vector<16x256xf32>
    %c11_i32_191 = arith.constant 11 : i32
    %167 = tpu.dynamic_rotate %162 by %c11_i32_191 dim 1 : vector<16x256xf32>, i32 -> vector<16x256xf32>
    %c0_192 = arith.constant 0 : index
    %c0_193 = arith.constant 0 : index
    %168 = vector.load %arg7[%c0_192, %c0_193] : memref<128x256xf32, #tpu.memory_space<vmem>>, vector<16x256xf32>
    tpu.vector_store %arg7[%c0_192, %c0_193], %167 {strides = array<i32>} : memref<128x256xf32, #tpu.memory_space<vmem>>, vector<16x256xf32>,
    %c10_i32_194 = arith.constant 10 : i32
    %169 = tpu.dynamic_rotate %162 by %c10_i32_194 dim 1 : vector<16x256xf32>, i32 -> vector<16x256xf32>
    %c16_195 = arith.constant 16 : index
    %c0_196 = arith.constant 0 : index
    %170 = vector.load %arg7[%c16_195, %c0_196] : memref<128x256xf32, #tpu.memory_space<vmem>>, vector<16x256xf32>
    tpu.vector_store %arg7[%c16_195, %c0_196], %169 {strides = array<i32>} : memref<128x256xf32, #tpu.memory_space<vmem>>, vector<16x256xf32>,
    %c9_i32_197 = arith.constant 9 : i32
    %171 = tpu.dynamic_rotate %162 by %c9_i32_197 dim 1 : vector<16x256xf32>, i32 -> vector<16x256xf32>
    %c32_198 = arith.constant 32 : index
    %c0_199 = arith.constant 0 : index
    %172 = vector.load %arg7[%c32_198, %c0_199] : memref<128x256xf32, #tpu.memory_space<vmem>>, vector<16x256xf32>
    tpu.vector_store %arg7[%c32_198, %c0_199], %171 {strides = array<i32>} : memref<128x256xf32, #tpu.memory_space<vmem>>, vector<16x256xf32>,
    %c1_i32_200 = arith.constant 1 : i32
    %173 = tpu.dynamic_rotate %162 by %c1_i32_200 dim 1 : vector<16x256xf32>, i32 -> vector<16x256xf32>
    %c48_201 = arith.constant 48 : index
    %c0_202 = arith.constant 0 : index
    %174 = vector.load %arg7[%c48_201, %c0_202] : memref<128x256xf32, #tpu.memory_space<vmem>>, vector<16x256xf32>
    tpu.vector_store %arg7[%c48_201, %c0_202], %173 {strides = array<i32>} : memref<128x256xf32, #tpu.memory_space<vmem>>, vector<16x256xf32>,
    %c255_i32_203 = arith.constant 255 : i32
    %175 = tpu.dynamic_rotate %162 by %c255_i32_203 dim 1 : vector<16x256xf32>, i32 -> vector<16x256xf32>
    %c64_204 = arith.constant 64 : index
    %c0_205 = arith.constant 0 : index
    %176 = vector.load %arg7[%c64_204, %c0_205] : memref<128x256xf32, #tpu.memory_space<vmem>>, vector<16x256xf32>
    tpu.vector_store %arg7[%c64_204, %c0_205], %175 {strides = array<i32>} : memref<128x256xf32, #tpu.memory_space<vmem>>, vector<16x256xf32>,
    %c247_i32_206 = arith.constant 247 : i32
    %177 = tpu.dynamic_rotate %162 by %c247_i32_206 dim 1 : vector<16x256xf32>, i32 -> vector<16x256xf32>
    %c80_207 = arith.constant 80 : index
    %c0_208 = arith.constant 0 : index
    %178 = vector.load %arg7[%c80_207, %c0_208] : memref<128x256xf32, #tpu.memory_space<vmem>>, vector<16x256xf32>
    tpu.vector_store %arg7[%c80_207, %c0_208], %177 {strides = array<i32>} : memref<128x256xf32, #tpu.memory_space<vmem>>, vector<16x256xf32>,
    %c246_i32_209 = arith.constant 246 : i32
    %179 = tpu.dynamic_rotate %162 by %c246_i32_209 dim 1 : vector<16x256xf32>, i32 -> vector<16x256xf32>
    %c96_210 = arith.constant 96 : index
    %c0_211 = arith.constant 0 : index
    %180 = vector.load %arg7[%c96_210, %c0_211] : memref<128x256xf32, #tpu.memory_space<vmem>>, vector<16x256xf32>
    tpu.vector_store %arg7[%c96_210, %c0_211], %179 {strides = array<i32>} : memref<128x256xf32, #tpu.memory_space<vmem>>, vector<16x256xf32>,
    %c245_i32_212 = arith.constant 245 : i32
    %181 = tpu.dynamic_rotate %162 by %c245_i32_212 dim 1 : vector<16x256xf32>, i32 -> vector<16x256xf32>
    %c112_213 = arith.constant 112 : index
    %c0_214 = arith.constant 0 : index
    %182 = vector.load %arg7[%c112_213, %c0_214] : memref<128x256xf32, #tpu.memory_space<vmem>>, vector<16x256xf32>
    tpu.vector_store %arg7[%c112_213, %c0_214], %181 {strides = array<i32>} : memref<128x256xf32, #tpu.memory_space<vmem>>, vector<16x256xf32>,
    %c0_215 = arith.constant 0 : index
    %c0_216 = arith.constant 0 : index
    %183 = vector.load %arg7[%c0_215, %c0_216] : memref<128x256xf32, #tpu.memory_space<vmem>>, vector<128x256xf32>
    %cst_217 = arith.constant dense<0.000000e+00> : vector<16x256xf32>
    %184 = tpu.matmul %163, %183, %cst_217 {dimension_numbers = #tpu.dot_dimension_numbers<[1], [0], [0], [1], [0, 0, 1, 1], [], []>} : vector<16x128xf32>, vector<128x256xf32>, vector<16x256xf32> -> vector<16x256xf32>
    %185 = arith.addf %166, %184 : vector<16x256xf32>
    %186 = vector.broadcast %165 : vector<16x1xf32> to vector<16x256xf32>
    %187 = arith.addf %185, %186 : vector<16x256xf32>
    %188 = arith.addf %162, %187 : vector<16x256xf32>
    %cst_218 = arith.constant 0.000000e+00 : f32
    %189 = vector.broadcast %cst_218 : f32 to vector<16x256xf32>
    %190 = arith.maximumf %188, %189 : vector<16x256xf32>
    %191 = vector.broadcast %0 : vector<1x256xf32> to vector<16x256xf32>
    %192 = arith.mulf %190, %191 : vector<16x256xf32>
    %c0_219 = arith.constant 0 : index
    %c0_220 = arith.constant 0 : index
    %193 = vector.load %arg6[%c0_219, %c0_220] : memref<16x256xf32, #tpu.memory_space<vmem>>, vector<16x256xf32>
    tpu.vector_store %arg6[%c0_219, %c0_220], %192 {strides = array<i32>} : memref<16x256xf32, #tpu.memory_space<vmem>>, vector<16x256xf32>,
    %c0_221 = arith.constant 0 : index
    %c0_222 = arith.constant 0 : index
    %194 = vector.load %arg6[%c0_221, %c0_222] : memref<16x256xf32, #tpu.memory_space<vmem>>, vector<16x256xf32>
    %c96_223 = arith.constant 96 : index
    %c0_224 = arith.constant 0 : index
    %195 = vector.load %arg1[%c96_223, %c0_224] : memref<112x145xf32, #tpu.memory_space<vmem>>, vector<16x128xf32>
    %c96_225 = arith.constant 96 : index
    %c128_226 = arith.constant 128 : index
    %196 = vector.load %arg1[%c96_225, %c128_226] : memref<112x145xf32, #tpu.memory_space<vmem>>, vector<16x16xf32>
    %c96_227 = arith.constant 96 : index
    %c144_228 = arith.constant 144 : index
    %197 = vector.load %arg1[%c96_227, %c144_228] : memref<112x145xf32, #tpu.memory_space<vmem>>, vector<16x1xf32>
    %cst_229 = arith.constant dense<0.000000e+00> : vector<16x256xf32>
    %198 = tpu.matmul %196, %194, %cst_229 {dimension_numbers = #tpu.dot_dimension_numbers<[1], [0], [0], [1], [0, 0, 1, 1], [], []>} : vector<16x16xf32>, vector<16x256xf32>, vector<16x256xf32> -> vector<16x256xf32>
    %c11_i32_230 = arith.constant 11 : i32
    %199 = tpu.dynamic_rotate %194 by %c11_i32_230 dim 1 : vector<16x256xf32>, i32 -> vector<16x256xf32>
    %c0_231 = arith.constant 0 : index
    %c0_232 = arith.constant 0 : index
    %200 = vector.load %arg7[%c0_231, %c0_232] : memref<128x256xf32, #tpu.memory_space<vmem>>, vector<16x256xf32>
    tpu.vector_store %arg7[%c0_231, %c0_232], %199 {strides = array<i32>} : memref<128x256xf32, #tpu.memory_space<vmem>>, vector<16x256xf32>,
    %c10_i32_233 = arith.constant 10 : i32
    %201 = tpu.dynamic_rotate %194 by %c10_i32_233 dim 1 : vector<16x256xf32>, i32 -> vector<16x256xf32>
    %c16_234 = arith.constant 16 : index
    %c0_235 = arith.constant 0 : index
    %202 = vector.load %arg7[%c16_234, %c0_235] : memref<128x256xf32, #tpu.memory_space<vmem>>, vector<16x256xf32>
    tpu.vector_store %arg7[%c16_234, %c0_235], %201 {strides = array<i32>} : memref<128x256xf32, #tpu.memory_space<vmem>>, vector<16x256xf32>,
    %c9_i32_236 = arith.constant 9 : i32
    %203 = tpu.dynamic_rotate %194 by %c9_i32_236 dim 1 : vector<16x256xf32>, i32 -> vector<16x256xf32>
    %c32_237 = arith.constant 32 : index
    %c0_238 = arith.constant 0 : index
    %204 = vector.load %arg7[%c32_237, %c0_238] : memref<128x256xf32, #tpu.memory_space<vmem>>, vector<16x256xf32>
    tpu.vector_store %arg7[%c32_237, %c0_238], %203 {strides = array<i32>} : memref<128x256xf32, #tpu.memory_space<vmem>>, vector<16x256xf32>,
    %c1_i32_239 = arith.constant 1 : i32
    %205 = tpu.dynamic_rotate %194 by %c1_i32_239 dim 1 : vector<16x256xf32>, i32 -> vector<16x256xf32>
    %c48_240 = arith.constant 48 : index
    %c0_241 = arith.constant 0 : index
    %206 = vector.load %arg7[%c48_240, %c0_241] : memref<128x256xf32, #tpu.memory_space<vmem>>, vector<16x256xf32>
    tpu.vector_store %arg7[%c48_240, %c0_241], %205 {strides = array<i32>} : memref<128x256xf32, #tpu.memory_space<vmem>>, vector<16x256xf32>,
    %c255_i32_242 = arith.constant 255 : i32
    %207 = tpu.dynamic_rotate %194 by %c255_i32_242 dim 1 : vector<16x256xf32>, i32 -> vector<16x256xf32>
    %c64_243 = arith.constant 64 : index
    %c0_244 = arith.constant 0 : index
    %208 = vector.load %arg7[%c64_243, %c0_244] : memref<128x256xf32, #tpu.memory_space<vmem>>, vector<16x256xf32>
    tpu.vector_store %arg7[%c64_243, %c0_244], %207 {strides = array<i32>} : memref<128x256xf32, #tpu.memory_space<vmem>>, vector<16x256xf32>,
    %c247_i32_245 = arith.constant 247 : i32
    %209 = tpu.dynamic_rotate %194 by %c247_i32_245 dim 1 : vector<16x256xf32>, i32 -> vector<16x256xf32>
    %c80_246 = arith.constant 80 : index
    %c0_247 = arith.constant 0 : index
    %210 = vector.load %arg7[%c80_246, %c0_247] : memref<128x256xf32, #tpu.memory_space<vmem>>, vector<16x256xf32>
    tpu.vector_store %arg7[%c80_246, %c0_247], %209 {strides = array<i32>} : memref<128x256xf32, #tpu.memory_space<vmem>>, vector<16x256xf32>,
    %c246_i32_248 = arith.constant 246 : i32
    %211 = tpu.dynamic_rotate %194 by %c246_i32_248 dim 1 : vector<16x256xf32>, i32 -> vector<16x256xf32>
    %c96_249 = arith.constant 96 : index
    %c0_250 = arith.constant 0 : index
    %212 = vector.load %arg7[%c96_249, %c0_250] : memref<128x256xf32, #tpu.memory_space<vmem>>, vector<16x256xf32>
    tpu.vector_store %arg7[%c96_249, %c0_250], %211 {strides = array<i32>} : memref<128x256xf32, #tpu.memory_space<vmem>>, vector<16x256xf32>,
    %c245_i32_251 = arith.constant 245 : i32
    %213 = tpu.dynamic_rotate %194 by %c245_i32_251 dim 1 : vector<16x256xf32>, i32 -> vector<16x256xf32>
    %c112_252 = arith.constant 112 : index
    %c0_253 = arith.constant 0 : index
    %214 = vector.load %arg7[%c112_252, %c0_253] : memref<128x256xf32, #tpu.memory_space<vmem>>, vector<16x256xf32>
    tpu.vector_store %arg7[%c112_252, %c0_253], %213 {strides = array<i32>} : memref<128x256xf32, #tpu.memory_space<vmem>>, vector<16x256xf32>,
    %c0_254 = arith.constant 0 : index
    %c0_255 = arith.constant 0 : index
    %215 = vector.load %arg7[%c0_254, %c0_255] : memref<128x256xf32, #tpu.memory_space<vmem>>, vector<128x256xf32>
    %cst_256 = arith.constant dense<0.000000e+00> : vector<16x256xf32>
    %216 = tpu.matmul %195, %215, %cst_256 {dimension_numbers = #tpu.dot_dimension_numbers<[1], [0], [0], [1], [0, 0, 1, 1], [], []>} : vector<16x128xf32>, vector<128x256xf32>, vector<16x256xf32> -> vector<16x256xf32>
    %217 = arith.addf %198, %216 : vector<16x256xf32>
    %218 = vector.broadcast %197 : vector<16x1xf32> to vector<16x256xf32>
    %219 = arith.addf %217, %218 : vector<16x256xf32>
    %220 = arith.addf %194, %219 : vector<16x256xf32>
    %cst_257 = arith.constant 0.000000e+00 : f32
    %221 = vector.broadcast %cst_257 : f32 to vector<16x256xf32>
    %222 = arith.maximumf %220, %221 : vector<16x256xf32>
    %223 = vector.broadcast %0 : vector<1x256xf32> to vector<16x256xf32>
    %224 = arith.mulf %222, %223 : vector<16x256xf32>
    %c0_258 = arith.constant 0 : index
    %c0_259 = arith.constant 0 : index
    %225 = vector.load %arg6[%c0_258, %c0_259] : memref<16x256xf32, #tpu.memory_space<vmem>>, vector<16x256xf32>
    tpu.vector_store %arg6[%c0_258, %c0_259], %224 {strides = array<i32>} : memref<16x256xf32, #tpu.memory_space<vmem>>, vector<16x256xf32>,
    %c0_260 = arith.constant 0 : index
    %c0_261 = arith.constant 0 : index
    %226 = vector.load %arg6[%c0_260, %c0_261] : memref<16x256xf32, #tpu.memory_space<vmem>>, vector<16x256xf32>
    %c0_262 = arith.constant 0 : index
    %c0_263 = arith.constant 0 : index
    %227 = vector.load %arg2[%c0_262, %c0_263] : memref<8x384xf32, #tpu.memory_space<vmem>>, vector<8x16xf32>
    %c0_264 = arith.constant 0 : index
    %c16_265 = arith.constant 16 : index
    %228 = vector.load %arg2[%c0_264, %c16_265] : memref<8x384xf32, #tpu.memory_space<vmem>>, vector<8x1xf32>
    %c0_266 = arith.constant 0 : index
    %c17 = arith.constant 17 : index
    %229 = vector.load %arg2[%c0_266, %c17] : memref<8x384xf32, #tpu.memory_space<vmem>>, vector<8x1xf32>
    %c0_267 = arith.constant 0 : index
    %c128_268 = arith.constant 128 : index
    %230 = vector.load %arg2[%c0_267, %c128_268] : memref<8x384xf32, #tpu.memory_space<vmem>>, vector<8x256xf32>
    %cst_269 = arith.constant dense<0.000000e+00> : vector<8x256xf32>
    %231 = tpu.matmul %227, %226, %cst_269 {dimension_numbers = #tpu.dot_dimension_numbers<[1], [0], [0], [1], [0, 0, 1, 1], [], []>} : vector<8x16xf32>, vector<16x256xf32>, vector<8x256xf32> -> vector<8x256xf32>
    %232 = vector.broadcast %228 : vector<8x1xf32> to vector<8x256xf32>
    %233 = arith.addf %231, %232 : vector<8x256xf32>
    %cst_270 = arith.constant 0.000000e+00 : f32
    %234 = vector.broadcast %cst_270 : f32 to vector<8x256xf32>
    %235 = arith.maximumf %233, %234 : vector<8x256xf32>
    %236 = vector.broadcast %229 : vector<8x1xf32> to vector<8x256xf32>
    %237 = arith.mulf %235, %236 : vector<8x256xf32>
    %cst_271 = arith.constant dense<0.000000e+00> : vector<256xf32>
    %238 = vector.multi_reduction <add>, %237, %cst_271 [0] : vector<8x256xf32> to vector<256xf32>
    %239 = vector.shape_cast %238 : vector<256xf32> to vector<1x256xf32>
    %240 = arith.mulf %235, %230 : vector<8x256xf32>
    %cst_272 = arith.constant dense<0.000000e+00> : vector<256xf32>
    %241 = vector.multi_reduction <add>, %240, %cst_272 [0] : vector<8x256xf32> to vector<256xf32>
    %242 = vector.shape_cast %241 : vector<256xf32> to vector<1x256xf32>
    %cst_273 = arith.constant 0.000000e+00 : f32
    %243 = vector.broadcast %cst_273 : f32 to vector<1x256xf32>
    %244 = arith.cmpf ogt, %0, %243 : vector<1x256xf32>
    %cst_274 = arith.constant -1.000000e+30 : f32
    %245 = vector.broadcast %cst_274 : f32 to vector<1x256xf32>
    %246 = arith.select %244, %239, %245 : vector<1x256xi1>, vector<1x256xf32>
    %247 = vector.extract_strided_slice %246 {offsets = [0, 0], sizes = [1, 128], strides = [1, 1]} : vector<1x256xf32> to vector<1x128xf32>
    %cst_275 = arith.constant dense<0xFF800000> : vector<1xf32>
    %248 = vector.multi_reduction <maximumf>, %247, %cst_275 [1] : vector<1x128xf32> to vector<1xf32>
    %249 = vector.shape_cast %248 : vector<1xf32> to vector<1x1xf32>
    %250 = vector.broadcast %249 : vector<1x1xf32> to vector<1x128xf32>
    %251 = arith.subf %247, %250 : vector<1x128xf32>
    %252 = math.exp %251 : vector<1x128xf32>
    %cst_276 = arith.constant dense<0.000000e+00> : vector<1xf32>
    %253 = vector.multi_reduction <add>, %252, %cst_276 [1] : vector<1x128xf32> to vector<1xf32>
    %254 = vector.shape_cast %253 : vector<1xf32> to vector<1x1xf32>
    %255 = tpu.reciprocal %254 {approx = true} : vector<1x1xf32> -> vector<1x1xf32>
    %256 = vector.broadcast %255 : vector<1x1xf32> to vector<1x128xf32>
    %257 = arith.mulf %252, %256 : vector<1x128xf32>
    %c0_277 = arith.constant 0 : index
    %c0_278 = arith.constant 0 : index
    %258 = vector.load %arg4[%c0_277, %c0_278] : memref<2x128xf32, #tpu.memory_space<vmem>>, vector<1x128xf32>
    tpu.vector_store %arg4[%c0_277, %c0_278], %257 {strides = array<i32>} : memref<2x128xf32, #tpu.memory_space<vmem>>, vector<1x128xf32>,
    %259 = vector.extract_strided_slice %242 {offsets = [0, 0], sizes = [1, 128], strides = [1, 1]} : vector<1x256xf32> to vector<1x128xf32>
    %cst_279 = arith.constant dense<0.000000e+00> : vector<1xf32>
    %260 = vector.multi_reduction <add>, %259, %cst_279 [1] : vector<1x128xf32> to vector<1xf32>
    %261 = vector.shape_cast %260 : vector<1xf32> to vector<1x1xf32>
    %262 = math.tanh %261 : vector<1x1xf32>
    %c0_280 = arith.constant 0 : index
    %c0_281 = arith.constant 0 : index
    %263 = vector.load %arg5[%c0_280, %c0_281] : memref<2x1xf32, #tpu.memory_space<vmem>>, vector<1x1xf32>
    tpu.vector_store %arg5[%c0_280, %c0_281], %262 {strides = array<i32>} : memref<2x1xf32, #tpu.memory_space<vmem>>, vector<1x1xf32>,
    %264 = vector.extract_strided_slice %246 {offsets = [0, 128], sizes = [1, 128], strides = [1, 1]} : vector<1x256xf32> to vector<1x128xf32>
    %cst_282 = arith.constant dense<0xFF800000> : vector<1xf32>
    %265 = vector.multi_reduction <maximumf>, %264, %cst_282 [1] : vector<1x128xf32> to vector<1xf32>
    %266 = vector.shape_cast %265 : vector<1xf32> to vector<1x1xf32>
    %267 = vector.broadcast %266 : vector<1x1xf32> to vector<1x128xf32>
    %268 = arith.subf %264, %267 : vector<1x128xf32>
    %269 = math.exp %268 : vector<1x128xf32>
    %cst_283 = arith.constant dense<0.000000e+00> : vector<1xf32>
    %270 = vector.multi_reduction <add>, %269, %cst_283 [1] : vector<1x128xf32> to vector<1xf32>
    %271 = vector.shape_cast %270 : vector<1xf32> to vector<1x1xf32>
    %272 = tpu.reciprocal %271 {approx = true} : vector<1x1xf32> -> vector<1x1xf32>
    %273 = vector.broadcast %272 : vector<1x1xf32> to vector<1x128xf32>
    %274 = arith.mulf %269, %273 : vector<1x128xf32>
    %c1 = arith.constant 1 : index
    %c0_284 = arith.constant 0 : index
    %275 = vector.load %arg4[%c1, %c0_284] : memref<2x128xf32, #tpu.memory_space<vmem>>, vector<1x128xf32>
    tpu.vector_store %arg4[%c1, %c0_284], %274 {strides = array<i32>} : memref<2x128xf32, #tpu.memory_space<vmem>>, vector<1x128xf32>,
    %276 = vector.extract_strided_slice %242 {offsets = [0, 128], sizes = [1, 128], strides = [1, 1]} : vector<1x256xf32> to vector<1x128xf32>
    %cst_285 = arith.constant dense<0.000000e+00> : vector<1xf32>
    %277 = vector.multi_reduction <add>, %276, %cst_285 [1] : vector<1x128xf32> to vector<1xf32>
    %278 = vector.shape_cast %277 : vector<1xf32> to vector<1x1xf32>
    %279 = math.tanh %278 : vector<1x1xf32>
    %c1_286 = arith.constant 1 : index
    %c0_287 = arith.constant 0 : index
    %280 = vector.load %arg5[%c1_286, %c0_287] : memref<2x1xf32, #tpu.memory_space<vmem>>, vector<1x1xf32>
    tpu.vector_store %arg5[%c1_286, %c0_287], %279 {strides = array<i32>} : memref<2x1xf32, #tpu.memory_space<vmem>>, vector<1x1xf32>,
    return
  }
}

</mosaic_0001>

<llo_original>
// kernel: net_forward.1
$region0: #{net_forward.1}
  #allocation0 [shape = 'u32[]', space=smem, size = 0x4, offset = 0x4, fixed_abs, tag = 'smem constant byte address 0x4 - core index']
  #allocation1 [shape = 'u32[144,128]{1,0:T(1,128)}', space=vmem, size = 0x12000, scoped, tag = 'internal scratch']
  #allocation2 [shape = 'f32[16,256]{1,0:T(8,128)}', space=vmem, size = 0x4000, scoped, tag = 'scratch operand']
  #allocation3 [shape = 'f32[128,256]{1,0:T(8,128)}', space=vmem, size = 0x20000, scoped, tag = 'scratch operand']
  %s0 = inlined_call_operand.vmem [shape: f32[16,256], index: 0, kind: input, shape index: {}]
  %s1 = inlined_call_operand.vmem [shape: f32[112,145], index: 1, kind: input, shape index: {}]
  %s2 = inlined_call_operand.vmem [shape: f32[8,384], index: 2, kind: input, shape index: {}]
  %s3 = inlined_call_operand.vmem [shape: f32[1,256], index: 3, kind: input, shape index: {}]
  %s4 = inlined_call_operand.vmem [shape: f32[2,128], index: 4, kind: output, shape index: {0}]
  %s5 = inlined_call_operand.vmem [shape: f32[2,1], index: 5, kind: output, shape index: {1}]
  %6 = xla_tuple %s4, %s5
  %s7 = sld [smem:[#allocation0]]
  $region34: #{net_forward.1} parent=0
    _
  %s9 = ssub.s32 1, %s7
  %s10 = scalar_select 0, %s9, %s7
  // Predicated region
  $region2: #{net_forward.1} parent=0 // pred_check
    _
  $region3: #{net_forward.1} parent=0 // pred_check_branch
    %12 = sbr.rel (0) target = $region5
  $region4: #{net_forward.1} parent=0 // pred_region
    _
  $region5: #{net_forward.1} parent=0 // pred_fallthru
    _
  // Predicated region
  $region6: #{net_forward.1} parent=0 // pred_check
    _
  $region7: #{net_forward.1} parent=0 // pred_check_branch
    %14 = sbr.rel (0) target = $region9
  $region8: #{net_forward.1} parent=0 // pred_region
    _
  $region9: #{net_forward.1} parent=0 // pred_fallthru
    _
  // Predicated region
  $region10: #{net_forward.1} parent=0 // pred_check
    _
  $region11: #{net_forward.1} parent=0 // pred_check_branch
    %16 = sbr.rel (0) target = $region13
  $region12: #{net_forward.1} parent=0 // pred_region
    _
  $region13: #{net_forward.1} parent=0 // pred_fallthru
    _
  // Predicated region
  $region14: #{net_forward.1} parent=0 // pred_check
    _
  $region15: #{net_forward.1} parent=0 // pred_check_branch
    %18 = sbr.rel (0) target = $region17
  $region16: #{net_forward.1} parent=0 // pred_region
    _
  $region17: #{net_forward.1} parent=0 // pred_fallthru
    _
  %v19 = vld [vmem:[%s3] sm:$0x3]
  %v20 = vld [vmem:[%s0] sm:$0xff]
  %v21 = vld [vmem:[%s0 + $0x8] sm:$0xff]
  %v22 = vld [vmem:[%s0 + $0x10] sm:$0xff]
  %v23 = vld [vmem:[%s0 + $0x18] sm:$0xff]
  %24 = vst [vmem:[#allocation2] sm:$0xff] %v20
  %25 = vst [vmem:[#allocation2 + $0x8] sm:$0xff] %v21
  %26 = vst [vmem:[#allocation2 + $0x10] sm:$0xff] %v22
  %27 = vst [vmem:[#allocation2 + $0x18] sm:$0xff] %v23
  %v28 = vld [vmem:[#allocation2] sm:$0xff]
  %v29 = vld [vmem:[#allocation2 + $0x8] sm:$0xff]
  %v30 = vld [vmem:[#allocation2 + $0x10] sm:$0xff]
  %v31 = vld [vmem:[#allocation2 + $0x18] sm:$0xff]
  %v32 = vld [vmem:[%s1] sm:$0xff]
  %v33 = vld [vmem:[%s1 + $0x10] sm:$0xff]
  %v34 = vld [vmem:[%s1 + $0x8] sm:$0xff]
  %v35 = vld [vmem:[%s1 + $0x18] sm:$0xff]
  %36 = vrot.lane.b32.xlu0 %v28, 11
  %v37 = vpop.permute.xlu0 %36
  %38 = vrot.lane.b32.xlu0 %v30, 11
  %v39 = vpop.permute.xlu0 %38
  %40 = vrot.lane.b32.xlu0 %v29, 11
  %v41 = vpop.permute.xlu0 %40
  %42 = vrot.lane.b32.xlu0 %v31, 11
  %v43 = vpop.permute.xlu0 %42
  %v44 = vlaneseq
  %v45 = vand.u32 %v44, 127
  %vm46 = vcmp.lt.s32.totalorder %v45, 11
  %v47 = vsel %vm46, %v37, %v41
  %v48 = vsel %vm46, %v39, %v43
  %v49 = vsel %vm46, %v41, %v37
  %v50 = vsel %vm46, %v43, %v39
  %51 = vst [vmem:[#allocation3] sm:$0xff] %v49
  %52 = vst [vmem:[#allocation3 + $0x8] sm:$0xff] %v47
  %53 = vst [vmem:[#allocation3 + $0x10] sm:$0xff] %v50
  %54 = vst [vmem:[#allocation3 + $0x18] sm:$0xff] %v48
  %55 = vrot.lane.b32.xlu0 %v28, 10
  %v56 = vpop.permute.xlu0 %55
  %57 = vrot.lane.b32.xlu0 %v30, 10
  %v58 = vpop.permute.xlu0 %57
  %59 = vrot.lane.b32.xlu0 %v29, 10
  %v60 = vpop.permute.xlu0 %59
  %61 = vrot.lane.b32.xlu0 %v31, 10
  %v62 = vpop.permute.xlu0 %61
  %vm63 = vcmp.lt.s32.totalorder %v45, 10
  %v64 = vsel %vm63, %v56, %v60
  %v65 = vsel %vm63, %v58, %v62
  %v66 = vsel %vm63, %v60, %v56
  %v67 = vsel %vm63, %v62, %v58
  %68 = vst [vmem:[#allocation3 + $0x20] sm:$0xff] %v66
  %69 = vst [vmem:[#allocation3 + $0x28] sm:$0xff] %v64
  %70 = vst [vmem:[#allocation3 + $0x30] sm:$0xff] %v67
  %71 = vst [vmem:[#allocation3 + $0x38] sm:$0xff] %v65
  %72 = vrot.lane.b32.xlu0 %v28, 9
  %v73 = vpop.permute.xlu0 %72
  %74 = vrot.lane.b32.xlu0 %v30, 9
  %v75 = vpop.permute.xlu0 %74
  %76 = vrot.lane.b32.xlu0 %v29, 9
  %v77 = vpop.permute.xlu0 %76
  %78 = vrot.lane.b32.xlu0 %v31, 9
  %v79 = vpop.permute.xlu0 %78
  %vm80 = vcmp.lt.s32.totalorder %v45, 9
  %v81 = vsel %vm80, %v73, %v77
  %v82 = vsel %vm80, %v75, %v79
  %v83 = vsel %vm80, %v77, %v73
  %v84 = vsel %vm80, %v79, %v75
  %85 = vst [vmem:[#allocation3 + $0x40] sm:$0xff] %v83
  %86 = vst [vmem:[#allocation3 + $0x48] sm:$0xff] %v81
  %87 = vst [vmem:[#allocation3 + $0x50] sm:$0xff] %v84
  %88 = vst [vmem:[#allocation3 + $0x58] sm:$0xff] %v82
  %89 = vrot.lane.b32.xlu0 %v28, 1
  %v90 = vpop.permute.xlu0 %89
  %91 = vrot.lane.b32.xlu0 %v30, 1
  %v92 = vpop.permute.xlu0 %91
  %93 = vrot.lane.b32.xlu0 %v29, 1
  %v94 = vpop.permute.xlu0 %93
  %95 = vrot.lane.b32.xlu0 %v31, 1
  %v96 = vpop.permute.xlu0 %95
  %vm97 = vcmp.lt.s32.totalorder %v45, 1
  %v98 = vsel %vm97, %v90, %v94
  %v99 = vsel %vm97, %v92, %v96
  %v100 = vsel %vm97, %v94, %v90
  %v101 = vsel %vm97, %v96, %v92
  %102 = vst [vmem:[#allocation3 + $0x60] sm:$0xff] %v100
  %103 = vst [vmem:[#allocation3 + $0x68] sm:$0xff] %v98
  %104 = vst [vmem:[#allocation3 + $0x70] sm:$0xff] %v101
  %105 = vst [vmem:[#allocation3 + $0x78] sm:$0xff] %v99
  %106 = vrot.lane.b32.xlu0 %v28, 127
  %v107 = vpop.permute.xlu0 %106
  %108 = vrot.lane.b32.xlu0 %v30, 127
  %v109 = vpop.permute.xlu0 %108
  %110 = vrot.lane.b32.xlu0 %v29, 127
  %v111 = vpop.permute.xlu0 %110
  %112 = vrot.lane.b32.xlu0 %v31, 127
  %v113 = vpop.permute.xlu0 %112
  %vm114 = vcmp.lt.s32.totalorder %v45, 127
  %v115 = vsel %vm114, %v107, %v111
  %v116 = vsel %vm114, %v109, %v113
  %v117 = vsel %vm114, %v111, %v107
  %v118 = vsel %vm114, %v113, %v109
  %119 = vst [vmem:[#allocation3 + $0x80] sm:$0xff] %v115
  %120 = vst [vmem:[#allocation3 + $0x88] sm:$0xff] %v117
  %121 = vst [vmem:[#allocation3 + $0x90] sm:$0xff] %v116
  %122 = vst [vmem:[#allocation3 + $0x98] sm:$0xff] %v118
  %123 = vrot.lane.b32.xlu0 %v28, 119
  %v124 = vpop.permute.xlu0 %123
  %125 = vrot.lane.b32.xlu0 %v30, 119
  %v126 = vpop.permute.xlu0 %125
  %127 = vrot.lane.b32.xlu0 %v29, 119
  %v128 = vpop.permute.xlu0 %127
  %129 = vrot.lane.b32.xlu0 %v31, 119
  %v130 = vpop.permute.xlu0 %129
  %vm131 = vcmp.lt.s32.totalorder %v45, 119
  %v132 = vsel %vm131, %v124, %v128
  %v133 = vsel %vm131, %v126, %v130
  %v134 = vsel %vm131, %v128, %v124
  %v135 = vsel %vm131, %v130, %v126
  %136 = vst [vmem:[#allocation3 + $0xa0] sm:$0xff] %v132
  %137 = vst [vmem:[#allocation3 + $0xa8] sm:$0xff] %v134
  %138 = vst [vmem:[#allocation3 + $0xb0] sm:$0xff] %v133
  %139 = vst [vmem:[#allocation3 + $0xb8] sm:$0xff] %v135
  %140 = vrot.lane.b32.xlu0 %v28, 118
  %v141 = vpop.permute.xlu0 %140
  %142 = vrot.lane.b32.xlu0 %v30, 118
  %v143 = vpop.permute.xlu0 %142
  %144 = vrot.lane.b32.xlu0 %v29, 118
  %v145 = vpop.permute.xlu0 %144
  %146 = vrot.lane.b32.xlu0 %v31, 118
  %v147 = vpop.permute.xlu0 %146
  %vm148 = vcmp.lt.s32.totalorder %v45, 118
  %v149 = vsel %vm148, %v141, %v145
  %v150 = vsel %vm148, %v143, %v147
  %v151 = vsel %vm148, %v145, %v141
  %v152 = vsel %vm148, %v147, %v143
  %153 = vst [vmem:[#allocation3 + $0xc0] sm:$0xff] %v149
  %154 = vst [vmem:[#allocation3 + $0xc8] sm:$0xff] %v151
  %155 = vst [vmem:[#allocation3 + $0xd0] sm:$0xff] %v150
  %156 = vst [vmem:[#allocation3 + $0xd8] sm:$0xff] %v152
  %157 = vrot.lane.b32.xlu0 %v28, 117
  %v158 = vpop.permute.xlu0 %157
  %159 = vrot.lane.b32.xlu0 %v30, 117
  %v160 = vpop.permute.xlu0 %159
  %161 = vrot.lane.b32.xlu0 %v29, 117
  %v162 = vpop.permute.xlu0 %161
  %163 = vrot.lane.b32.xlu0 %v31, 117
  %v164 = vpop.permute.xlu0 %163
  %vm165 = vcmp.lt.s32.totalorder %v45, 117
  %v166 = vsel %vm165, %v158, %v162
  %v167 = vsel %vm165, %v160, %v164
  %v168 = vsel %vm165, %v162, %v158
  %v169 = vsel %vm165, %v164, %v160
  %170 = vst [vmem:[#allocation3 + $0xe0] sm:$0xff] %v166
  %171 = vst [vmem:[#allocation3 + $0xe8] sm:$0xff] %v168
  %172 = vst [vmem:[#allocation3 + $0xf0] sm:$0xff] %v167
  %173 = vst [vmem:[#allocation3 + $0xf8] sm:$0xff] %v169
  %v174 = vld [vmem:[#allocation3] sm:$0xff]
  %v175 = vld [vmem:[#allocation3 + $0x8] sm:$0xff]
  %v176 = vld [vmem:[#allocation3 + $0x10] sm:$0xff]
  %v177 = vld [vmem:[#allocation3 + $0x18] sm:$0xff]
  %v178 = vld [vmem:[#allocation3 + $0x20] sm:$0xff]
  %v179 = vld [vmem:[#allocation3 + $0x28] sm:$0xff]
  %v180 = vld [vmem:[#allocation3 + $0x30] sm:$0xff]
  %v181 = vld [vmem:[#allocation3 + $0x38] sm:$0xff]
  %v182 = vld [vmem:[#allocation3 + $0x40] sm:$0xff]
  %v183 = vld [vmem:[#allocation3 + $0x48] sm:$0xff]
  %v184 = vld [vmem:[#allocation3 + $0x50] sm:$0xff]
  %v185 = vld [vmem:[#allocation3 + $0x58] sm:$0xff]
  %v186 = vld [vmem:[#allocation3 + $0x60] sm:$0xff]
  %v187 = vld [vmem:[#allocation3 + $0x68] sm:$0xff]
  %v188 = vld [vmem:[#allocation3 + $0x70] sm:$0xff]
  %v189 = vld [vmem:[#allocation3 + $0x78] sm:$0xff]
  %v190 = vld [vmem:[#allocation3 + $0x80] sm:$0xff]
  %v191 = vld [vmem:[#allocation3 + $0x88] sm:$0xff]
  %v192 = vld [vmem:[#allocation3 + $0x90] sm:$0xff]
  %v193 = vld [vmem:[#allocation3 + $0x98] sm:$0xff]
  %v194 = vld [vmem:[#allocation3 + $0xa0] sm:$0xff]
  %v195 = vld [vmem:[#allocation3 + $0xa8] sm:$0xff]
  %v196 = vld [vmem:[#allocation3 + $0xb0] sm:$0xff]
  %v197 = vld [vmem:[#allocation3 + $0xb8] sm:$0xff]
  %v198 = vld [vmem:[#allocation3 + $0xc0] sm:$0xff]
  %v199 = vld [vmem:[#allocation3 + $0xc8] sm:$0xff]
  %v200 = vld [vmem:[#allocation3 + $0xd0] sm:$0xff]
  %v201 = vld [vmem:[#allocation3 + $0xd8] sm:$0xff]
  %v202 = vld [vmem:[#allocation3 + $0xe0] sm:$0xff]
  %v203 = vld [vmem:[#allocation3 + $0xe8] sm:$0xff]
  %v204 = vld [vmem:[#allocation3 + $0xf0] sm:$0xff]
  %v205 = vld [vmem:[#allocation3 + $0xf8] sm:$0xff]
  %206 = vmatprep.subr.mxu0 %v205
  %207 = vmatpush1.msra.mxu0 %v204
  %208 = vmatprep.subr.mxu0 %v203
  %209 = vmatpush1.msra.mxu0 %v202
  %210 = vmatprep.subr.mxu0 %v201
  %211 = vmatpush1.msra.mxu0 %v200
  %212 = vmatprep.subr.mxu0 %v199
  %213 = vmatpush1.msra.mxu0 %v198
  %214 = vmatprep.subr.mxu0 %v197
  %215 = vmatpush1.msra.mxu0 %v196
  %216 = vmatprep.subr.mxu0 %v195
  %217 = vmatpush1.msra.mxu0 %v194
  %218 = vmatprep.subr.mxu0 %v193
  %219 = vmatpush1.msra.mxu0 %v192
  %220 = vmatprep.subr.mxu0 %v191
  %221 = vmatpush1.msra.mxu0 %v190
  %222 = vmatprep.subr.mxu0 %v189
  %223 = vmatpush1.msra.mxu0 %v188
  %224 = vmatprep.subr.mxu0 %v187
  %225 = vmatpush1.msra.mxu0 %v186
  %226 = vmatprep.subr.mxu0 %v185
  %227 = vmatpush1.msra.mxu0 %v184
  %228 = vmatprep.subr.mxu0 %v183
  %229 = vmatpush1.msra.mxu0 %v182
  %230 = vmatprep.subr.mxu0 %v181
  %231 = vmatpush1.msra.mxu0 %v180
  %232 = vmatprep.subr.mxu0 %v179
  %233 = vmatpush1.msra.mxu0 %v178
  %234 = vmatprep.subr.mxu0 %v177
  %235 = vmatpush1.msra.mxu0 %v176
  %236 = vmatprep.subr.mxu0 %v175
  %237 = vmatpush1.msra.mxu0 %v174
  %238 = vmatprep.subr.mxu0 0.0
  %239 = vmatpush2.msra.mxu0 0.0
  %240 = vmatprep.subr.mxu0 0.0
  %241 = vmatpush2.msra.mxu0 0.0
  %242 = vmatprep.subr.mxu0 0.0
  %243 = vmatpush2.msra.mxu0 0.0
  %244 = vmatprep.subr.mxu0 0.0
  %245 = vmatpush2.msra.mxu0 0.0
  %246 = vmatprep.subr.mxu0 0.0
  %247 = vmatpush2.msra.mxu0 0.0
  %248 = vmatprep.subr.mxu0 0.0
  %249 = vmatpush2.msra.mxu0 0.0
  %250 = vmatprep.subr.mxu0 0.0
  %251 = vmatpush2.msra.mxu0 0.0
  %252 = vmatprep.subr.mxu0 0.0
  %253 = vmatpush2.msra.mxu0 0.0
  %254 = vmatprep.subr.mxu0 0.0
  %255 = vmatpush2.msra.mxu0 0.0
  %256 = vmatprep.subr.mxu0 0.0
  %257 = vmatpush2.msra.mxu0 0.0
  %258 = vmatprep.subr.mxu0 0.0
  %259 = vmatpush2.msra.mxu0 0.0
  %260 = vmatprep.subr.mxu0 0.0
  %261 = vmatpush2.msra.mxu0 0.0
  %262 = vmatprep.subr.mxu0 0.0
  %263 = vmatpush2.msra.mxu0 0.0
  %264 = vmatprep.subr.mxu0 0.0
  %265 = vmatpush2.msra.mxu0 0.0
  %266 = vmatprep.subr.mxu0 0.0
  %267 = vmatpush2.msra.mxu0 0.0
  %268 = vmatprep.subr.mxu0 0.0
  %269 = vmatpush2.msra.mxu0 0.0
  %270 = vmatprep.mubr.f32.mxu0 0.0
  %271 = vmatmul.mubr.f32.gmra.mxu0 %v32
  %v272 = vpop.f32.mrf.mxu0
  %v273 = vadd.f32 0.0, %v272
  %v274 = vpop.f32.mrf.mxu0
  %v275 = vadd.f32 0.0, %v274
  %276 = vmatprep.mubr.f32.mxu0 0.0
  %277 = vmatmul.mubr.f32.gmra.mxu0 %v33
  %v278 = vpop.f32.mrf.mxu0
  %v279 = vadd.f32 0.0, %v278
  %v280 = vpop.f32.mrf.mxu0
  %v281 = vadd.f32 0.0, %v280
  %282 = vdwg.mxu0
  %vm283 = vcmask 130048
  %v285 = vsel %vm283, %v34, 0
  %v288 = vsel %vm283, %v35, 0
  %290 = vmatprep.subr.mxu0 0.0
  %291 = vmatpush1.msra.mxu0 0.0
  %292 = vmatprep.subr.mxu0 0.0
  %293 = vmatpush1.msra.mxu0 0.0
  %294 = vmatprep.subr.mxu0 0.0
  %295 = vmatpush1.msra.mxu0 0.0
  %296 = vmatprep.subr.mxu0 0.0
  %297 = vmatpush1.msra.mxu0 0.0
  %298 = vmatprep.subr.mxu0 0.0
  %299 = vmatpush1.msra.mxu0 0.0
  %300 = vmatprep.subr.mxu0 0.0
  %301 = vmatpush1.msra.mxu0 0.0
  %302 = vmatprep.subr.mxu0 0.0
  %303 = vmatpush1.msra.mxu0 0.0
  %304 = vmatprep.subr.mxu0 0.0
  %305 = vmatpush1.msra.mxu0 0.0
  %306 = vmatprep.subr.mxu0 0.0
  %307 = vmatpush1.msra.mxu0 0.0
  %308 = vmatprep.subr.mxu0 0.0
  %309 = vmatpush1.msra.mxu0 0.0
  %310 = vmatprep.subr.mxu0 0.0
  %311 = vmatpush1.msra.mxu0 0.0
  %312 = vmatprep.subr.mxu0 0.0
  %313 = vmatpush1.msra.mxu0 0.0
  %314 = vmatprep.subr.mxu0 0.0
  %315 = vmatpush1.msra.mxu0 0.0
  %316 = vmatprep.subr.mxu0 0.0
  %317 = vmatpush1.msra.mxu0 0.0
  %318 = vmatprep.subr.mxu0 %v31
  %319 = vmatpush1.msra.mxu0 %v30
  %320 = vmatprep.subr.mxu0 %v29
  %321 = vmatpush1.msra.mxu0 %v28
  %322 = vmatprep.subr.mxu0 0.0
  %323 = vmatpush2.msra.mxu0 0.0
  %324 = vmatprep.subr.mxu0 0.0
  %325 = vmatpush2.msra.mxu0 0.0
  %326 = vmatprep.subr.mxu0 0.0
  %327 = vmatpush2.msra.mxu0 0.0
  %328 = vmatprep.subr.mxu0 0.0
  %329 = vmatpush2.msra.mxu0 0.0
  %330 = vmatprep.subr.mxu0 0.0
  %331 = vmatpush2.msra.mxu0 0.0
  %332 = vmatprep.subr.mxu0 0.0
  %333 = vmatpush2.msra.mxu0 0.0
  %334 = vmatprep.subr.mxu0 0.0
  %335 = vmatpush2.msra.mxu0 0.0
  %336 = vmatprep.subr.mxu0 0.0
  %337 = vmatpush2.msra.mxu0 0.0
  %338 = vmatprep.subr.mxu0 0.0
  %339 = vmatpush2.msra.mxu0 0.0
  %340 = vmatprep.subr.mxu0 0.0
  %341 = vmatpush2.msra.mxu0 0.0
  %342 = vmatprep.subr.mxu0 0.0
  %343 = vmatpush2.msra.mxu0 0.0
  %344 = vmatprep.subr.mxu0 0.0
  %345 = vmatpush2.msra.mxu0 0.0
  %346 = vmatprep.subr.mxu0 0.0
  %347 = vmatpush2.msra.mxu0 0.0
  %348 = vmatprep.subr.mxu0 0.0
  %349 = vmatpush2.msra.mxu0 0.0
  %350 = vmatprep.subr.mxu0 0.0
  %351 = vmatpush2.msra.mxu0 0.0
  %352 = vmatprep.subr.mxu0 0.0
  %353 = vmatpush2.msra.mxu0 0.0
  %354 = vmatprep.mubr.f32.mxu0 0.0
  %355 = vmatmul.mubr.f32.gmra.mxu0 %v285
  %v356 = vpop.f32.mrf.mxu0
  %v357 = vadd.f32 %v273, %v356
  %v358 = vpop.f32.mrf.mxu0
  %v359 = vadd.f32 %v275, %v358
  %360 = vmatprep.mubr.f32.mxu0 0.0
  %361 = vmatmul.mubr.f32.gmra.mxu0 %v288
  %v362 = vpop.f32.mrf.mxu0
  %v363 = vadd.f32 %v279, %v362
  %v364 = vpop.f32.mrf.mxu0
  %v365 = vadd.f32 %v281, %v364
  %366 = vdwg.mxu0
  %367 = vset.pattern.permute.xlu0 16
  %368 = vperm.xlu0 %367, %v34
  %v369 = vpop.permute.xlu0 %368
  %371 = vset.pattern.permute.xlu0 16
  %372 = vperm.xlu0 %371, %v35
  %v373 = vpop.permute.xlu0 %372
  %v375 = vadd.f32 %v357, %v369
  %v376 = vadd.f32 %v359, %v369
  %v377 = vadd.f32 %v363, %v373
  %v378 = vadd.f32 %v365, %v373
  %v379 = vmax.f32 %v375, 0.0
  %v380 = vmax.f32 %v376, 0.0
  %v381 = vmax.f32 %v377, 0.0
  %v382 = vmax.f32 %v378, 0.0
  %v384 = vlaneseq
  %v385 = vshrl.u32 %v384, 7
  %v386 = vsub.s32 0, %v385
  %v387 = vrot.slane %v19, %v386
  %v388 = vlaneseq
  %v389 = vshrl.u32 %v388, 7
  %v390 = vsub.s32 1, %v389
  %v391 = vrot.slane %v19, %v390
  %v394 = vmul.f32 %v379, %v387
  %v395 = vmul.f32 %v380, %v391
  %v396 = vmul.f32 %v381, %v387
  %v397 = vmul.f32 %v382, %v391
  %398 = vst [vmem:[#allocation2] sm:$0xff] %v394
  %399 = vst [vmem:[#allocation2 + $0x8] sm:$0xff] %v395
  %400 = vst [vmem:[#allocation2 + $0x10] sm:$0xff] %v396
  %401 = vst [vmem:[#allocation2 + $0x18] sm:$0xff] %v397
  %v402 = vld [vmem:[#allocation2] sm:$0xff]
  %v403 = vld [vmem:[#allocation2 + $0x8] sm:$0xff]
  %v404 = vld [vmem:[#allocation2 + $0x10] sm:$0xff]
  %v405 = vld [vmem:[#allocation2 + $0x18] sm:$0xff]
  %v406 = vld [vmem:[%s1 + $0x20] sm:$0xff]
  %v407 = vld [vmem:[%s1 + $0x30] sm:$0xff]
  %v408 = vld [vmem:[%s1 + $0x28] sm:$0xff]
  %v409 = vld [vmem:[%s1 + $0x38] sm:$0xff]
  %410 = vrot.lane.b32.xlu0 %v402, 11
  %v411 = vpop.permute.xlu0 %410
  %412 = vrot.lane.b32.xlu0 %v404, 11
  %v413 = vpop.permute.xlu0 %412
  %414 = vrot.lane.b32.xlu0 %v403, 11
  %v415 = vpop.permute.xlu0 %414
  %416 = vrot.lane.b32.xlu0 %v405, 11
  %v417 = vpop.permute.xlu0 %416
  %v418 = vsel %vm46, %v411, %v415
  %v419 = vsel %vm46, %v413, %v417
  %v420 = vsel %vm46, %v415, %v411
  %v421 = vsel %vm46, %v417, %v413
  %422 = vst [vmem:[#allocation3] sm:$0xff] %v420
  %423 = vst [vmem:[#allocation3 + $0x8] sm:$0xff] %v418
  %424 = vst [vmem:[#allocation3 + $0x10] sm:$0xff] %v421
  %425 = vst [vmem:[#allocation3 + $0x18] sm:$0xff] %v419
  %426 = vrot.lane.b32.xlu0 %v402, 10
  %v427 = vpop.permute.xlu0 %426
  %428 = vrot.lane.b32.xlu0 %v404, 10
  %v429 = vpop.permute.xlu0 %428
  %430 = vrot.lane.b32.xlu0 %v403, 10
  %v431 = vpop.permute.xlu0 %430
  %432 = vrot.lane.b32.xlu0 %v405, 10
  %v433 = vpop.permute.xlu0 %432
  %v434 = vsel %vm63, %v427, %v431
  %v435 = vsel %vm63, %v429, %v433
  %v436 = vsel %vm63, %v431, %v427
  %v437 = vsel %vm63, %v433, %v429
  %438 = vst [vmem:[#allocation3 + $0x20] sm:$0xff] %v436
  %439 = vst [vmem:[#allocation3 + $0x28] sm:$0xff] %v434
  %440 = vst [vmem:[#allocation3 + $0x30] sm:$0xff] %v437
  %441 = vst [vmem:[#allocation3 + $0x38] sm:$0xff] %v435
  %442 = vrot.lane.b32.xlu0 %v402, 9
  %v443 = vpop.permute.xlu0 %442
  %444 = vrot.lane.b32.xlu0 %v404, 9
  %v445 = vpop.permute.xlu0 %444
  %446 = vrot.lane.b32.xlu0 %v403, 9
  %v447 = vpop.permute.xlu0 %446
  %448 = vrot.lane.b32.xlu0 %v405, 9
  %v449 = vpop.permute.xlu0 %448
  %v450 = vsel %vm80, %v443, %v447
  %v451 = vsel %vm80, %v445, %v449
  %v452 = vsel %vm80, %v447, %v443
  %v453 = vsel %vm80, %v449, %v445
  %454 = vst [vmem:[#allocation3 + $0x40] sm:$0xff] %v452
  %455 = vst [vmem:[#allocation3 + $0x48] sm:$0xff] %v450
  %456 = vst [vmem:[#allocation3 + $0x50] sm:$0xff] %v453
  %457 = vst [vmem:[#allocation3 + $0x58] sm:$0xff] %v451
  %458 = vrot.lane.b32.xlu0 %v402, 1
  %v459 = vpop.permute.xlu0 %458
  %460 = vrot.lane.b32.xlu0 %v404, 1
  %v461 = vpop.permute.xlu0 %460
  %462 = vrot.lane.b32.xlu0 %v403, 1
  %v463 = vpop.permute.xlu0 %462
  %464 = vrot.lane.b32.xlu0 %v405, 1
  %v465 = vpop.permute.xlu0 %464
  %v466 = vsel %vm97, %v459, %v463
  %v467 = vsel %vm97, %v461, %v465
  %v468 = vsel %vm97, %v463, %v459
  %v469 = vsel %vm97, %v465, %v461
  %470 = vst [vmem:[#allocation3 + $0x60] sm:$0xff] %v468
  %471 = vst [vmem:[#allocation3 + $0x68] sm:$0xff] %v466
  %472 = vst [vmem:[#allocation3 + $0x70] sm:$0xff] %v469
  %473 = vst [vmem:[#allocation3 + $0x78] sm:$0xff] %v467
  %474 = vrot.lane.b32.xlu0 %v402, 127
  %v475 = vpop.permute.xlu0 %474
  %476 = vrot.lane.b32.xlu0 %v404, 127
  %v477 = vpop.permute.xlu0 %476
  %478 = vrot.lane.b32.xlu0 %v403, 127
  %v479 = vpop.permute.xlu0 %478
  %480 = vrot.lane.b32.xlu0 %v405, 127
  %v481 = vpop.permute.xlu0 %480
  %v482 = vsel %vm114, %v475, %v479
  %v483 = vsel %vm114, %v477, %v481
  %v484 = vsel %vm114, %v479, %v475
  %v485 = vsel %vm114, %v481, %v477
  %486 = vst [vmem:[#allocation3 + $0x80] sm:$0xff] %v482
  %487 = vst [vmem:[#allocation3 + $0x88] sm:$0xff] %v484
  %488 = vst [vmem:[#allocation3 + $0x90] sm:$0xff] %v483
  %489 = vst [vmem:[#allocation3 + $0x98] sm:$0xff] %v485
  %490 = vrot.lane.b32.xlu0 %v402, 119
  %v491 = vpop.permute.xlu0 %490
  %492 = vrot.lane.b32.xlu0 %v404, 119
  %v493 = vpop.permute.xlu0 %492
  %494 = vrot.lane.b32.xlu0 %v403, 119
  %v495 = vpop.permute.xlu0 %494
  %496 = vrot.lane.b32.xlu0 %v405, 119
  %v497 = vpop.permute.xlu0 %496
  %v498 = vsel %vm131, %v491, %v495
  %v499 = vsel %vm131, %v493, %v497
  %v500 = vsel %vm131, %v495, %v491
  %v501 = vsel %vm131, %v497, %v493
  %502 = vst [vmem:[#allocation3 + $0xa0] sm:$0xff] %v498
  %503 = vst [vmem:[#allocation3 + $0xa8] sm:$0xff] %v500
  %504 = vst [vmem:[#allocation3 + $0xb0] sm:$0xff] %v499
  %505 = vst [vmem:[#allocation3 + $0xb8] sm:$0xff] %v501
  %506 = vrot.lane.b32.xlu0 %v402, 118
  %v507 = vpop.permute.xlu0 %506
  %508 = vrot.lane.b32.xlu0 %v404, 118
  %v509 = vpop.permute.xlu0 %508
  %510 = vrot.lane.b32.xlu0 %v403, 118
  %v511 = vpop.permute.xlu0 %510
  %512 = vrot.lane.b32.xlu0 %v405, 118
  %v513 = vpop.permute.xlu0 %512
  %v514 = vsel %vm148, %v507, %v511
  %v515 = vsel %vm148, %v509, %v513
  %v516 = vsel %vm148, %v511, %v507
  %v517 = vsel %vm148, %v513, %v509
  %518 = vst [vmem:[#allocation3 + $0xc0] sm:$0xff] %v514
  %519 = vst [vmem:[#allocation3 + $0xc8] sm:$0xff] %v516
  %520 = vst [vmem:[#allocation3 + $0xd0] sm:$0xff] %v515
  %521 = vst [vmem:[#allocation3 + $0xd8] sm:$0xff] %v517
  %522 = vrot.lane.b32.xlu0 %v402, 117
  %v523 = vpop.permute.xlu0 %522
  %524 = vrot.lane.b32.xlu0 %v404, 117
  %v525 = vpop.permute.xlu0 %524
  %526 = vrot.lane.b32.xlu0 %v403, 117
  %v527 = vpop.permute.xlu0 %526
  %528 = vrot.lane.b32.xlu0 %v405, 117
  %v529 = vpop.permute.xlu0 %528
  %v530 = vsel %vm165, %v523, %v527
  %v531 = vsel %vm165, %v525, %v529
  %v532 = vsel %vm165, %v527, %v523
  %v533 = vsel %vm165, %v529, %v525
  %534 = vst [vmem:[#allocation3 + $0xe0] sm:$0xff] %v530
  %535 = vst [vmem:[#allocation3 + $0xe8] sm:$0xff] %v532
  %536 = vst [vmem:[#allocation3 + $0xf0] sm:$0xff] %v531
  %537 = vst [vmem:[#allocation3 + $0xf8] sm:$0xff] %v533
  %v538 = vld [vmem:[#allocation3] sm:$0xff]
  %v539 = vld [vmem:[#allocation3 + $0x8] sm:$0xff]
  %v540 = vld [vmem:[#allocation3 + $0x10] sm:$0xff]
  %v541 = vld [vmem:[#allocation3 + $0x18] sm:$0xff]
  %v542 = vld [vmem:[#allocation3 + $0x20] sm:$0xff]
  %v543 = vld [vmem:[#allocation3 + $0x28] sm:$0xff]
  %v544 = vld [vmem:[#allocation3 + $0x30] sm:$0xff]
  %v545 = vld [vmem:[#allocation3 + $0x38] sm:$0xff]
  %v546 = vld [vmem:[#allocation3 + $0x40] sm:$0xff]
  %v547 = vld [vmem:[#allocation3 + $0x48] sm:$0xff]
  %v548 = vld [vmem:[#allocation3 + $0x50] sm:$0xff]
  %v549 = vld [vmem:[#allocation3 + $0x58] sm:$0xff]
  %v550 = vld [vmem:[#allocation3 + $0x60] sm:$0xff]
  %v551 = vld [vmem:[#allocation3 + $0x68] sm:$0xff]
  %v552 = vld [vmem:[#allocation3 + $0x70] sm:$0xff]
  %v553 = vld [vmem:[#allocation3 + $0x78] sm:$0xff]
  %v554 = vld [vmem:[#allocation3 + $0x80] sm:$0xff]
  %v555 = vld [vmem:[#allocation3 + $0x88] sm:$0xff]
  %v556 = vld [vmem:[#allocation3 + $0x90] sm:$0xff]
  %v557 = vld [vmem:[#allocation3 + $0x98] sm:$0xff]
  %v558 = vld [vmem:[#allocation3 + $0xa0] sm:$0xff]
  %v559 = vld [vmem:[#allocation3 + $0xa8] sm:$0xff]
  %v560 = vld [vmem:[#allocation3 + $0xb0] sm:$0xff]
  %v561 = vld [vmem:[#allocation3 + $0xb8] sm:$0xff]
  %v562 = vld [vmem:[#allocation3 + $0xc0] sm:$0xff]
  %v563 = vld [vmem:[#allocation3 + $0xc8] sm:$0xff]
  %v564 = vld [vmem:[#allocation3 + $0xd0] sm:$0xff]
  %v565 = vld [vmem:[#allocation3 + $0xd8] sm:$0xff]
  %v566 = vld [vmem:[#allocation3 + $0xe0] sm:$0xff]
  %v567 = vld [vmem:[#allocation3 + $0xe8] sm:$0xff]
  %v568 = vld [vmem:[#allocation3 + $0xf0] sm:$0xff]
  %v569 = vld [vmem:[#allocation3 + $0xf8] sm:$0xff]
  %570 = vmatprep.subr.mxu0 %v569
  %571 = vmatpush1.msra.mxu0 %v568
  %572 = vmatprep.subr.mxu0 %v567
  %573 = vmatpush1.msra.mxu0 %v566
  %574 = vmatprep.subr.mxu0 %v565
  %575 = vmatpush1.msra.mxu0 %v564
  %576 = vmatprep.subr.mxu0 %v563
  %577 = vmatpush1.msra.mxu0 %v562
  %578 = vmatprep.subr.mxu0 %v561
  %579 = vmatpush1.msra.mxu0 %v560
  %580 = vmatprep.subr.mxu0 %v559
  %581 = vmatpush1.msra.mxu0 %v558
  %582 = vmatprep.subr.mxu0 %v557
  %583 = vmatpush1.msra.mxu0 %v556
  %584 = vmatprep.subr.mxu0 %v555
  %585 = vmatpush1.msra.mxu0 %v554
  %586 = vmatprep.subr.mxu0 %v553
  %587 = vmatpush1.msra.mxu0 %v552
  %588 = vmatprep.subr.mxu0 %v551
  %589 = vmatpush1.msra.mxu0 %v550
  %590 = vmatprep.subr.mxu0 %v549
  %591 = vmatpush1.msra.mxu0 %v548
  %592 = vmatprep.subr.mxu0 %v547
  %593 = vmatpush1.msra.mxu0 %v546
  %594 = vmatprep.subr.mxu0 %v545
  %595 = vmatpush1.msra.mxu0 %v544
  %596 = vmatprep.subr.mxu0 %v543
  %597 = vmatpush1.msra.mxu0 %v542
  %598 = vmatprep.subr.mxu0 %v541
  %599 = vmatpush1.msra.mxu0 %v540
  %600 = vmatprep.subr.mxu0 %v539
  %601 = vmatpush1.msra.mxu0 %v538
  %602 = vmatprep.subr.mxu0 0.0
  %603 = vmatpush2.msra.mxu0 0.0
  %604 = vmatprep.subr.mxu0 0.0
  %605 = vmatpush2.msra.mxu0 0.0
  %606 = vmatprep.subr.mxu0 0.0
  %607 = vmatpush2.msra.mxu0 0.0
  %608 = vmatprep.subr.mxu0 0.0
  %609 = vmatpush2.msra.mxu0 0.0
  %610 = vmatprep.subr.mxu0 0.0
  %611 = vmatpush2.msra.mxu0 0.0
  %612 = vmatprep.subr.mxu0 0.0
  %613 = vmatpush2.msra.mxu0 0.0
  %614 = vmatprep.subr.mxu0 0.0
  %615 = vmatpush2.msra.mxu0 0.0
  %616 = vmatprep.subr.mxu0 0.0
  %617 = vmatpush2.msra.mxu0 0.0
  %618 = vmatprep.subr.mxu0 0.0
  %619 = vmatpush2.msra.mxu0 0.0
  %620 = vmatprep.subr.mxu0 0.0
  %621 = vmatpush2.msra.mxu0 0.0
  %622 = vmatprep.subr.mxu0 0.0
  %623 = vmatpush2.msra.mxu0 0.0
  %624 = vmatprep.subr.mxu0 0.0
  %625 = vmatpush2.msra.mxu0 0.0
  %626 = vmatprep.subr.mxu0 0.0
  %627 = vmatpush2.msra.mxu0 0.0
  %628 = vmatprep.subr.mxu0 0.0
  %629 = vmatpush2.msra.mxu0 0.0
  %630 = vmatprep.subr.mxu0 0.0
  %631 = vmatpush2.msra.mxu0 0.0
  %632 = vmatprep.subr.mxu0 0.0
  %633 = vmatpush2.msra.mxu0 0.0
  %634 = vmatprep.mubr.f32.mxu0 0.0
  %635 = vmatmul.mubr.f32.gmra.mxu0 %v406
  %v636 = vpop.f32.mrf.mxu0
  %v637 = vadd.f32 0.0, %v636
  %v638 = vpop.f32.mrf.mxu0
  %v639 = vadd.f32 0.0, %v638
  %640 = vmatprep.mubr.f32.mxu0 0.0
  %641 = vmatmul.mubr.f32.gmra.mxu0 %v407
  %v642 = vpop.f32.mrf.mxu0
  %v643 = vadd.f32 0.0, %v642
  %v644 = vpop.f32.mrf.mxu0
  %v645 = vadd.f32 0.0, %v644
  %646 = vdwg.mxu0
  %v648 = vsel %vm283, %v408, 0
  %v651 = vsel %vm283, %v409, 0
  %653 = vmatprep.subr.mxu0 0.0
  %654 = vmatpush1.msra.mxu0 0.0
  %655 = vmatprep.subr.mxu0 0.0
  %656 = vmatpush1.msra.mxu0 0.0
  %657 = vmatprep.subr.mxu0 0.0
  %658 = vmatpush1.msra.mxu0 0.0
  %659 = vmatprep.subr.mxu0 0.0
  %660 = vmatpush1.msra.mxu0 0.0
  %661 = vmatprep.subr.mxu0 0.0
  %662 = vmatpush1.msra.mxu0 0.0
  %663 = vmatprep.subr.mxu0 0.0
  %664 = vmatpush1.msra.mxu0 0.0
  %665 = vmatprep.subr.mxu0 0.0
  %666 = vmatpush1.msra.mxu0 0.0
  %667 = vmatprep.subr.mxu0 0.0
  %668 = vmatpush1.msra.mxu0 0.0
  %669 = vmatprep.subr.mxu0 0.0
  %670 = vmatpush1.msra.mxu0 0.0
  %671 = vmatprep.subr.mxu0 0.0
  %672 = vmatpush1.msra.mxu0 0.0
  %673 = vmatprep.subr.mxu0 0.0
  %674 = vmatpush1.msra.mxu0 0.0
  %675 = vmatprep.subr.mxu0 0.0
  %676 = vmatpush1.msra.mxu0 0.0
  %677 = vmatprep.subr.mxu0 0.0
  %678 = vmatpush1.msra.mxu0 0.0
  %679 = vmatprep.subr.mxu0 0.0
  %680 = vmatpush1.msra.mxu0 0.0
  %681 = vmatprep.subr.mxu0 %v405
  %682 = vmatpush1.msra.mxu0 %v404
  %683 = vmatprep.subr.mxu0 %v403
  %684 = vmatpush1.msra.mxu0 %v402
  %685 = vmatprep.subr.mxu0 0.0
  %686 = vmatpush2.msra.mxu0 0.0
  %687 = vmatprep.subr.mxu0 0.0
  %688 = vmatpush2.msra.mxu0 0.0
  %689 = vmatprep.subr.mxu0 0.0
  %690 = vmatpush2.msra.mxu0 0.0
  %691 = vmatprep.subr.mxu0 0.0
  %692 = vmatpush2.msra.mxu0 0.0
  %693 = vmatprep.subr.mxu0 0.0
  %694 = vmatpush2.msra.mxu0 0.0
  %695 = vmatprep.subr.mxu0 0.0
  %696 = vmatpush2.msra.mxu0 0.0
  %697 = vmatprep.subr.mxu0 0.0
  %698 = vmatpush2.msra.mxu0 0.0
  %699 = vmatprep.subr.mxu0 0.0
  %700 = vmatpush2.msra.mxu0 0.0
  %701 = vmatprep.subr.mxu0 0.0
  %702 = vmatpush2.msra.mxu0 0.0
  %703 = vmatprep.subr.mxu0 0.0
  %704 = vmatpush2.msra.mxu0 0.0
  %705 = vmatprep.subr.mxu0 0.0
  %706 = vmatpush2.msra.mxu0 0.0
  %707 = vmatprep.subr.mxu0 0.0
  %708 = vmatpush2.msra.mxu0 0.0
  %709 = vmatprep.subr.mxu0 0.0
  %710 = vmatpush2.msra.mxu0 0.0
  %711 = vmatprep.subr.mxu0 0.0
  %712 = vmatpush2.msra.mxu0 0.0
  %713 = vmatprep.subr.mxu0 0.0
  %714 = vmatpush2.msra.mxu0 0.0
  %715 = vmatprep.subr.mxu0 0.0
  %716 = vmatpush2.msra.mxu0 0.0
  %717 = vmatprep.mubr.f32.mxu0 0.0
  %718 = vmatmul.mubr.f32.gmra.mxu0 %v648
  %v719 = vpop.f32.mrf.mxu0
  %v720 = vadd.f32 %v637, %v719
  %v721 = vpop.f32.mrf.mxu0
  %v722 = vadd.f32 %v639, %v721
  %723 = vmatprep.mubr.f32.mxu0 0.0
  %724 = vmatmul.mubr.f32.gmra.mxu0 %v651
  %v725 = vpop.f32.mrf.mxu0
  %v726 = vadd.f32 %v643, %v725
  %v727 = vpop.f32.mrf.mxu0
  %v728 = vadd.f32 %v645, %v727
  %729 = vdwg.mxu0
  %730 = vset.pattern.permute.xlu0 16
  %731 = vperm.xlu0 %730, %v408
  %v732 = vpop.permute.xlu0 %731
  %734 = vset.pattern.permute.xlu0 16
  %735 = vperm.xlu0 %734, %v409
  %v736 = vpop.permute.xlu0 %735
  %v738 = vadd.f32 %v720, %v732
  %v739 = vadd.f32 %v722, %v732
  %v740 = vadd.f32 %v726, %v736
  %v741 = vadd.f32 %v728, %v736
  %v742 = vadd.f32 %v402, %v738
  %v743 = vadd.f32 %v403, %v739
  %v744 = vadd.f32 %v404, %v740
  %v745 = vadd.f32 %v405, %v741
  %v746 = vmax.f32 %v742, 0.0
  %v747 = vmax.f32 %v743, 0.0
  %v748 = vmax.f32 %v744, 0.0
  %v749 = vmax.f32 %v745, 0.0
  %v750 = vmul.f32 %v746, %v387
  %v751 = vmul.f32 %v747, %v391
  %v752 = vmul.f32 %v748, %v387
  %v753 = vmul.f32 %v749, %v391
  %754 = vst [vmem:[#allocation2] sm:$0xff] %v750
  %755 = vst [vmem:[#allocation2 + $0x8] sm:$0xff] %v751
  %756 = vst [vmem:[#allocation2 + $0x10] sm:$0xff] %v752
  %757 = vst [vmem:[#allocation2 + $0x18] sm:$0xff] %v753
  %v758 = vld [vmem:[#allocation2] sm:$0xff]
  %v759 = vld [vmem:[#allocation2 + $0x8] sm:$0xff]
  %v760 = vld [vmem:[#allocation2 + $0x10] sm:$0xff]
  %v761 = vld [vmem:[#allocation2 + $0x18] sm:$0xff]
  %v762 = vld [vmem:[%s1 + $0x40] sm:$0xff]
  %v763 = vld [vmem:[%s1 + $0x50] sm:$0xff]
  %v764 = vld [vmem:[%s1 + $0x48] sm:$0xff]
  %v765 = vld [vmem:[%s1 + $0x58] sm:$0xff]
  %766 = vrot.lane.b32.xlu0 %v758, 11
  %v767 = vpop.permute.xlu0 %766
  %768 = vrot.lane.b32.xlu0 %v760, 11
  %v769 = vpop.permute.xlu0 %768
  %770 = vrot.lane.b32.xlu0 %v759, 11
  %v771 = vpop.permute.xlu0 %770
  %772 = vrot.lane.b32.xlu0 %v761, 11
  %v773 = vpop.permute.xlu0 %772
  %v774 = vsel %vm46, %v767, %v771
  %v775 = vsel %vm46, %v769, %v773
  %v776 = vsel %vm46, %v771, %v767
  %v777 = vsel %vm46, %v773, %v769
  %778 = vst [vmem:[#allocation3] sm:$0xff] %v776
  %779 = vst [vmem:[#allocation3 + $0x8] sm:$0xff] %v774
  %780 = vst [vmem:[#allocation3 + $0x10] sm:$0xff] %v777
  %781 = vst [vmem:[#allocation3 + $0x18] sm:$0xff] %v775
  %782 = vrot.lane.b32.xlu0 %v758, 10
  %v783 = vpop.permute.xlu0 %782
  %784 = vrot.lane.b32.xlu0 %v760, 10
  %v785 = vpop.permute.xlu0 %784
  %786 = vrot.lane.b32.xlu0 %v759, 10
  %v787 = vpop.permute.xlu0 %786
  %788 = vrot.lane.b32.xlu0 %v761, 10
  %v789 = vpop.permute.xlu0 %788
  %v790 = vsel %vm63, %v783, %v787
  %v791 = vsel %vm63, %v785, %v789
  %v792 = vsel %vm63, %v787, %v783
  %v793 = vsel %vm63, %v789, %v785
  %794 = vst [vmem:[#allocation3 + $0x20] sm:$0xff] %v792
  %795 = vst [vmem:[#allocation3 + $0x28] sm:$0xff] %v790
  %796 = vst [vmem:[#allocation3 + $0x30] sm:$0xff] %v793
  %797 = vst [vmem:[#allocation3 + $0x38] sm:$0xff] %v791
  %798 = vrot.lane.b32.xlu0 %v758, 9
  %v799 = vpop.permute.xlu0 %798
  %800 = vrot.lane.b32.xlu0 %v760, 9
  %v801 = vpop.permute.xlu0 %800
  %802 = vrot.lane.b32.xlu0 %v759, 9
  %v803 = vpop.permute.xlu0 %802
  %804 = vrot.lane.b32.xlu0 %v761, 9
  %v805 = vpop.permute.xlu0 %804
  %v806 = vsel %vm80, %v799, %v803
  %v807 = vsel %vm80, %v801, %v805
  %v808 = vsel %vm80, %v803, %v799
  %v809 = vsel %vm80, %v805, %v801
  %810 = vst [vmem:[#allocation3 + $0x40] sm:$0xff] %v808
  %811 = vst [vmem:[#allocation3 + $0x48] sm:$0xff] %v806
  %812 = vst [vmem:[#allocation3 + $0x50] sm:$0xff] %v809
  %813 = vst [vmem:[#allocation3 + $0x58] sm:$0xff] %v807
  %814 = vrot.lane.b32.xlu0 %v758, 1
  %v815 = vpop.permute.xlu0 %814
  %816 = vrot.lane.b32.xlu0 %v760, 1
  %v817 = vpop.permute.xlu0 %816
  %818 = vrot.lane.b32.xlu0 %v759, 1
  %v819 = vpop.permute.xlu0 %818
  %820 = vrot.lane.b32.xlu0 %v761, 1
  %v821 = vpop.permute.xlu0 %820
  %v822 = vsel %vm97, %v815, %v819
  %v823 = vsel %vm97, %v817, %v821
  %v824 = vsel %vm97, %v819, %v815
  %v825 = vsel %vm97, %v821, %v817
  %826 = vst [vmem:[#allocation3 + $0x60] sm:$0xff] %v824
  %827 = vst [vmem:[#allocation3 + $0x68] sm:$0xff] %v822
  %828 = vst [vmem:[#allocation3 + $0x70] sm:$0xff] %v825
  %829 = vst [vmem:[#allocation3 + $0x78] sm:$0xff] %v823
  %830 = vrot.lane.b32.xlu0 %v758, 127
  %v831 = vpop.permute.xlu0 %830
  %832 = vrot.lane.b32.xlu0 %v760, 127
  %v833 = vpop.permute.xlu0 %832
  %834 = vrot.lane.b32.xlu0 %v759, 127
  %v835 = vpop.permute.xlu0 %834
  %836 = vrot.lane.b32.xlu0 %v761, 127
  %v837 = vpop.permute.xlu0 %836
  %v838 = vsel %vm114, %v831, %v835
  %v839 = vsel %vm114, %v833, %v837
  %v840 = vsel %vm114, %v835, %v831
  %v841 = vsel %vm114, %v837, %v833
  %842 = vst [vmem:[#allocation3 + $0x80] sm:$0xff] %v838
  %843 = vst [vmem:[#allocation3 + $0x88] sm:$0xff] %v840
  %844 = vst [vmem:[#allocation3 + $0x90] sm:$0xff] %v839
  %845 = vst [vmem:[#allocation3 + $0x98] sm:$0xff] %v841
  %846 = vrot.lane.b32.xlu0 %v758, 119
  %v847 = vpop.permute.xlu0 %846
  %848 = vrot.lane.b32.xlu0 %v760, 119
  %v849 = vpop.permute.xlu0 %848
  %850 = vrot.lane.b32.xlu0 %v759, 119
  %v851 = vpop.permute.xlu0 %850
  %852 = vrot.lane.b32.xlu0 %v761, 119
  %v853 = vpop.permute.xlu0 %852
  %v854 = vsel %vm131, %v847, %v851
  %v855 = vsel %vm131, %v849, %v853
  %v856 = vsel %vm131, %v851, %v847
  %v857 = vsel %vm131, %v853, %v849
  %858 = vst [vmem:[#allocation3 + $0xa0] sm:$0xff] %v854
  %859 = vst [vmem:[#allocation3 + $0xa8] sm:$0xff] %v856
  %860 = vst [vmem:[#allocation3 + $0xb0] sm:$0xff] %v855
  %861 = vst [vmem:[#allocation3 + $0xb8] sm:$0xff] %v857
  %862 = vrot.lane.b32.xlu0 %v758, 118
  %v863 = vpop.permute.xlu0 %862
  %864 = vrot.lane.b32.xlu0 %v760, 118
  %v865 = vpop.permute.xlu0 %864
  %866 = vrot.lane.b32.xlu0 %v759, 118
  %v867 = vpop.permute.xlu0 %866
  %868 = vrot.lane.b32.xlu0 %v761, 118
  %v869 = vpop.permute.xlu0 %868
  %v870 = vsel %vm148, %v863, %v867
  %v871 = vsel %vm148, %v865, %v869
  %v872 = vsel %vm148, %v867, %v863
  %v873 = vsel %vm148, %v869, %v865
  %874 = vst [vmem:[#allocation3 + $0xc0] sm:$0xff] %v870
  %875 = vst [vmem:[#allocation3 + $0xc8] sm:$0xff] %v872
  %876 = vst [vmem:[#allocation3 + $0xd0] sm:$0xff] %v871
  %877 = vst [vmem:[#allocation3 + $0xd8] sm:$0xff] %v873
  %878 = vrot.lane.b32.xlu0 %v758, 117
  %v879 = vpop.permute.xlu0 %878
  %880 = vrot.lane.b32.xlu0 %v760, 117
  %v881 = vpop.permute.xlu0 %880
  %882 = vrot.lane.b32.xlu0 %v759, 117
  %v883 = vpop.permute.xlu0 %882
  %884 = vrot.lane.b32.xlu0 %v761, 117
  %v885 = vpop.permute.xlu0 %884
  %v886 = vsel %vm165, %v879, %v883
  %v887 = vsel %vm165, %v881, %v885
  %v888 = vsel %vm165, %v883, %v879
  %v889 = vsel %vm165, %v885, %v881
  %890 = vst [vmem:[#allocation3 + $0xe0] sm:$0xff] %v886
  %891 = vst [vmem:[#allocation3 + $0xe8] sm:$0xff] %v888
  %892 = vst [vmem:[#allocation3 + $0xf0] sm:$0xff] %v887
  %893 = vst [vmem:[#allocation3 + $0xf8] sm:$0xff] %v889
  %v894 = vld [vmem:[#allocation3] sm:$0xff]
  %v895 = vld [vmem:[#allocation3 + $0x8] sm:$0xff]
  %v896 = vld [vmem:[#allocation3 + $0x10] sm:$0xff]
  %v897 = vld [vmem:[#allocation3 + $0x18] sm:$0xff]
  %v898 = vld [vmem:[#allocation3 + $0x20] sm:$0xff]
  %v899 = vld [vmem:[#allocation3 + $0x28] sm:$0xff]
  %v900 = vld [vmem:[#allocation3 + $0x30] sm:$0xff]
  %v901 = vld [vmem:[#allocation3 + $0x38] sm:$0xff]
  %v902 = vld [vmem:[#allocation3 + $0x40] sm:$0xff]
  %v903 = vld [vmem:[#allocation3 + $0x48] sm:$0xff]
  %v904 = vld [vmem:[#allocation3 + $0x50] sm:$0xff]
  %v905 = vld [vmem:[#allocation3 + $0x58] sm:$0xff]
  %v906 = vld [vmem:[#allocation3 + $0x60] sm:$0xff]
  %v907 = vld [vmem:[#allocation3 + $0x68] sm:$0xff]
  %v908 = vld [vmem:[#allocation3 + $0x70] sm:$0xff]
  %v909 = vld [vmem:[#allocation3 + $0x78] sm:$0xff]
  %v910 = vld [vmem:[#allocation3 + $0x80] sm:$0xff]
  %v911 = vld [vmem:[#allocation3 + $0x88] sm:$0xff]
  %v912 = vld [vmem:[#allocation3 + $0x90] sm:$0xff]
  %v913 = vld [vmem:[#allocation3 + $0x98] sm:$0xff]
  %v914 = vld [vmem:[#allocation3 + $0xa0] sm:$0xff]
  %v915 = vld [vmem:[#allocation3 + $0xa8] sm:$0xff]
  %v916 = vld [vmem:[#allocation3 + $0xb0] sm:$0xff]
  %v917 = vld [vmem:[#allocation3 + $0xb8] sm:$0xff]
  %v918 = vld [vmem:[#allocation3 + $0xc0] sm:$0xff]
  %v919 = vld [vmem:[#allocation3 + $0xc8] sm:$0xff]
  %v920 = vld [vmem:[#allocation3 + $0xd0] sm:$0xff]
  %v921 = vld [vmem:[#allocation3 + $0xd8] sm:$0xff]
  %v922 = vld [vmem:[#allocation3 + $0xe0] sm:$0xff]
  %v923 = vld [vmem:[#allocation3 + $0xe8] sm:$0xff]
  %v924 = vld [vmem:[#allocation3 + $0xf0] sm:$0xff]
  %v925 = vld [vmem:[#allocation3 + $0xf8] sm:$0xff]
  %926 = vmatprep.subr.mxu0 %v925
  %927 = vmatpush1.msra.mxu0 %v924
  %928 = vmatprep.subr.mxu0 %v923
  %929 = vmatpush1.msra.mxu0 %v922
  %930 = vmatprep.subr.mxu0 %v921
  %931 = vmatpush1.msra.mxu0 %v920
  %932 = vmatprep.subr.mxu0 %v919
  %933 = vmatpush1.msra.mxu0 %v918
  %934 = vmatprep.subr.mxu0 %v917
  %935 = vmatpush1.msra.mxu0 %v916
  %936 = vmatprep.subr.mxu0 %v915
  %937 = vmatpush1.msra.mxu0 %v914
  %938 = vmatprep.subr.mxu0 %v913
  %939 = vmatpush1.msra.mxu0 %v912
  %940 = vmatprep.subr.mxu0 %v911
  %941 = vmatpush1.msra.mxu0 %v910
  %942 = vmatprep.subr.mxu0 %v909
  %943 = vmatpush1.msra.mxu0 %v908
  %944 = vmatprep.subr.mxu0 %v907
  %945 = vmatpush1.msra.mxu0 %v906
  %946 = vmatprep.subr.mxu0 %v905
  %947 = vmatpush1.msra.mxu0 %v904
  %948 = vmatprep.subr.mxu0 %v903
  %949 = vmatpush1.msra.mxu0 %v902
  %950 = vmatprep.subr.mxu0 %v901
  %951 = vmatpush1.msra.mxu0 %v900
  %952 = vmatprep.subr.mxu0 %v899
  %953 = vmatpush1.msra.mxu0 %v898
  %954 = vmatprep.subr.mxu0 %v897
  %955 = vmatpush1.msra.mxu0 %v896
  %956 = vmatprep.subr.mxu0 %v895
  %957 = vmatpush1.msra.mxu0 %v894
  %958 = vmatprep.subr.mxu0 0.0
  %959 = vmatpush2.msra.mxu0 0.0
  %960 = vmatprep.subr.mxu0 0.0
  %961 = vmatpush2.msra.mxu0 0.0
  %962 = vmatprep.subr.mxu0 0.0
  %963 = vmatpush2.msra.mxu0 0.0
  %964 = vmatprep.subr.mxu0 0.0
  %965 = vmatpush2.msra.mxu0 0.0
  %966 = vmatprep.subr.mxu0 0.0
  %967 = vmatpush2.msra.mxu0 0.0
  %968 = vmatprep.subr.mxu0 0.0
  %969 = vmatpush2.msra.mxu0 0.0
  %970 = vmatprep.subr.mxu0 0.0
  %971 = vmatpush2.msra.mxu0 0.0
  %972 = vmatprep.subr.mxu0 0.0
  %973 = vmatpush2.msra.mxu0 0.0
  %974 = vmatprep.subr.mxu0 0.0
  %975 = vmatpush2.msra.mxu0 0.0
  %976 = vmatprep.subr.mxu0 0.0
  %977 = vmatpush2.msra.mxu0 0.0
  %978 = vmatprep.subr.mxu0 0.0
  %979 = vmatpush2.msra.mxu0 0.0
  %980 = vmatprep.subr.mxu0 0.0
  %981 = vmatpush2.msra.mxu0 0.0
  %982 = vmatprep.subr.mxu0 0.0
  %983 = vmatpush2.msra.mxu0 0.0
  %984 = vmatprep.subr.mxu0 0.0
  %985 = vmatpush2.msra.mxu0 0.0
  %986 = vmatprep.subr.mxu0 0.0
  %987 = vmatpush2.msra.mxu0 0.0
  %988 = vmatprep.subr.mxu0 0.0
  %989 = vmatpush2.msra.mxu0 0.0
  %990 = vmatprep.mubr.f32.mxu0 0.0
  %991 = vmatmul.mubr.f32.gmra.mxu0 %v762
  %v992 = vpop.f32.mrf.mxu0
  %v993 = vadd.f32 0.0, %v992
  %v994 = vpop.f32.mrf.mxu0
  %v995 = vadd.f32 0.0, %v994
  %996 = vmatprep.mubr.f32.mxu0 0.0
  %997 = vmatmul.mubr.f32.gmra.mxu0 %v763
  %v998 = vpop.f32.mrf.mxu0
  %v999 = vadd.f32 0.0, %v998
  %v1000 = vpop.f32.mrf.mxu0
  %v1001 = vadd.f32 0.0, %v1000
  %1002 = vdwg.mxu0
  %v1004 = vsel %vm283, %v764, 0
  %v1007 = vsel %vm283, %v765, 0
  %1009 = vmatprep.subr.mxu0 0.0
  %1010 = vmatpush1.msra.mxu0 0.0
  %1011 = vmatprep.subr.mxu0 0.0
  %1012 = vmatpush1.msra.mxu0 0.0
  %1013 = vmatprep.subr.mxu0 0.0
  %1014 = vmatpush1.msra.mxu0 0.0
  %1015 = vmatprep.subr.mxu0 0.0
  %1016 = vmatpush1.msra.mxu0 0.0
  %1017 = vmatprep.subr.mxu0 0.0
  %1018 = vmatpush1.msra.mxu0 0.0
  %1019 = vmatprep.subr.mxu0 0.0
  %1020 = vmatpush1.msra.mxu0 0.0
  %1021 = vmatprep.subr.mxu0 0.0
  %1022 = vmatpush1.msra.mxu0 0.0
  %1023 = vmatprep.subr.mxu0 0.0
  %1024 = vmatpush1.msra.mxu0 0.0
  %1025 = vmatprep.subr.mxu0 0.0
  %1026 = vmatpush1.msra.mxu0 0.0
  %1027 = vmatprep.subr.mxu0 0.0
  %1028 = vmatpush1.msra.mxu0 0.0
  %1029 = vmatprep.subr.mxu0 0.0
  %1030 = vmatpush1.msra.mxu0 0.0
  %1031 = vmatprep.subr.mxu0 0.0
  %1032 = vmatpush1.msra.mxu0 0.0
  %1033 = vmatprep.subr.mxu0 0.0
  %1034 = vmatpush1.msra.mxu0 0.0
  %1035 = vmatprep.subr.mxu0 0.0
  %1036 = vmatpush1.msra.mxu0 0.0
  %1037 = vmatprep.subr.mxu0 %v761
  %1038 = vmatpush1.msra.mxu0 %v760
  %1039 = vmatprep.subr.mxu0 %v759
  %1040 = vmatpush1.msra.mxu0 %v758
  %1041 = vmatprep.subr.mxu0 0.0
  %1042 = vmatpush2.msra.mxu0 0.0
  %1043 = vmatprep.subr.mxu0 0.0
  %1044 = vmatpush2.msra.mxu0 0.0
  %1045 = vmatprep.subr.mxu0 0.0
  %1046 = vmatpush2.msra.mxu0 0.0
  %1047 = vmatprep.subr.mxu0 0.0
  %1048 = vmatpush2.msra.mxu0 0.0
  %1049 = vmatprep.subr.mxu0 0.0
  %1050 = vmatpush2.msra.mxu0 0.0
  %1051 = vmatprep.subr.mxu0 0.0
  %1052 = vmatpush2.msra.mxu0 0.0
  %1053 = vmatprep.subr.mxu0 0.0
  %1054 = vmatpush2.msra.mxu0 0.0
  %1055 = vmatprep.subr.mxu0 0.0
  %1056 = vmatpush2.msra.mxu0 0.0
  %1057 = vmatprep.subr.mxu0 0.0
  %1058 = vmatpush2.msra.mxu0 0.0
  %1059 = vmatprep.subr.mxu0 0.0
  %1060 = vmatpush2.msra.mxu0 0.0
  %1061 = vmatprep.subr.mxu0 0.0
  %1062 = vmatpush2.msra.mxu0 0.0
  %1063 = vmatprep.subr.mxu0 0.0
  %1064 = vmatpush2.msra.mxu0 0.0
  %1065 = vmatprep.subr.mxu0 0.0
  %1066 = vmatpush2.msra.mxu0 0.0
  %1067 = vmatprep.subr.mxu0 0.0
  %1068 = vmatpush2.msra.mxu0 0.0
  %1069 = vmatprep.subr.mxu0 0.0
  %1070 = vmatpush2.msra.mxu0 0.0
  %1071 = vmatprep.subr.mxu0 0.0
  %1072 = vmatpush2.msra.mxu0 0.0
  %1073 = vmatprep.mubr.f32.mxu0 0.0
  %1074 = vmatmul.mubr.f32.gmra.mxu0 %v1004
  %v1075 = vpop.f32.mrf.mxu0
  %v1076 = vadd.f32 %v993, %v1075
  %v1077 = vpop.f32.mrf.mxu0
  %v1078 = vadd.f32 %v995, %v1077
  %1079 = vmatprep.mubr.f32.mxu0 0.0
  %1080 = vmatmul.mubr.f32.gmra.mxu0 %v1007
  %v1081 = vpop.f32.mrf.mxu0
  %v1082 = vadd.f32 %v999, %v1081
  %v1083 = vpop.f32.mrf.mxu0
  %v1084 = vadd.f32 %v1001, %v1083
  %1085 = vdwg.mxu0
  %1086 = vset.pattern.permute.xlu0 16
  %1087 = vperm.xlu0 %1086, %v764
  %v1088 = vpop.permute.xlu0 %1087
  %1090 = vset.pattern.permute.xlu0 16
  %1091 = vperm.xlu0 %1090, %v765
  %v1092 = vpop.permute.xlu0 %1091
  %v1094 = vadd.f32 %v1076, %v1088
  %v1095 = vadd.f32 %v1078, %v1088
  %v1096 = vadd.f32 %v1082, %v1092
  %v1097 = vadd.f32 %v1084, %v1092
  %v1098 = vadd.f32 %v758, %v1094
  %v1099 = vadd.f32 %v759, %v1095
  %v1100 = vadd.f32 %v760, %v1096
  %v1101 = vadd.f32 %v761, %v1097
  %v1102 = vmax.f32 %v1098, 0.0
  %v1103 = vmax.f32 %v1099, 0.0
  %v1104 = vmax.f32 %v1100, 0.0
  %v1105 = vmax.f32 %v1101, 0.0
  %v1106 = vmul.f32 %v1102, %v387
  %v1107 = vmul.f32 %v1103, %v391
  %v1108 = vmul.f32 %v1104, %v387
  %v1109 = vmul.f32 %v1105, %v391
  %1110 = vst [vmem:[#allocation2] sm:$0xff] %v1106
  %1111 = vst [vmem:[#allocation2 + $0x8] sm:$0xff] %v1107
  %1112 = vst [vmem:[#allocation2 + $0x10] sm:$0xff] %v1108
  %1113 = vst [vmem:[#allocation2 + $0x18] sm:$0xff] %v1109
  %v1114 = vld [vmem:[#allocation2] sm:$0xff]
  %v1115 = vld [vmem:[#allocation2 + $0x8] sm:$0xff]
  %v1116 = vld [vmem:[#allocation2 + $0x10] sm:$0xff]
  %v1117 = vld [vmem:[#allocation2 + $0x18] sm:$0xff]
  %v1118 = vld [vmem:[%s1 + $0x60] sm:$0xff]
  %v1119 = vld [vmem:[%s1 + $0x70] sm:$0xff]
  %v1120 = vld [vmem:[%s1 + $0x68] sm:$0xff]
  %v1121 = vld [vmem:[%s1 + $0x78] sm:$0xff]
  %1122 = vrot.lane.b32.xlu0 %v1114, 11
  %v1123 = vpop.permute.xlu0 %1122
  %1124 = vrot.lane.b32.xlu0 %v1116, 11
  %v1125 = vpop.permute.xlu0 %1124
  %1126 = vrot.lane.b32.xlu0 %v1115, 11
  %v1127 = vpop.permute.xlu0 %1126
  %1128 = vrot.lane.b32.xlu0 %v1117, 11
  %v1129 = vpop.permute.xlu0 %1128
  %v1130 = vsel %vm46, %v1123, %v1127
  %v1131 = vsel %vm46, %v1125, %v1129
  %v1132 = vsel %vm46, %v1127, %v1123
  %v1133 = vsel %vm46, %v1129, %v1125
  %1134 = vst [vmem:[#allocation3] sm:$0xff] %v1132
  %1135 = vst [vmem:[#allocation3 + $0x8] sm:$0xff] %v1130
  %1136 = vst [vmem:[#allocation3 + $0x10] sm:$0xff] %v1133
  %1137 = vst [vmem:[#allocation3 + $0x18] sm:$0xff] %v1131
  %1138 = vrot.lane.b32.xlu0 %v1114, 10
  %v1139 = vpop.permute.xlu0 %1138
  %1140 = vrot.lane.b32.xlu0 %v1116, 10
  %v1141 = vpop.permute.xlu0 %1140
  %1142 = vrot.lane.b32.xlu0 %v1115, 10
  %v1143 = vpop.permute.xlu0 %1142
  %1144 = vrot.lane.b32.xlu0 %v1117, 10
  %v1145 = vpop.permute.xlu0 %1144
  %v1146 = vsel %vm63, %v1139, %v1143
  %v1147 = vsel %vm63, %v1141, %v1145
  %v1148 = vsel %vm63, %v1143, %v1139
  %v1149 = vsel %vm63, %v1145, %v1141
  %1150 = vst [vmem:[#allocation3 + $0x20] sm:$0xff] %v1148
  %1151 = vst [vmem:[#allocation3 + $0x28] sm:$0xff] %v1146
  %1152 = vst [vmem:[#allocation3 + $0x30] sm:$0xff] %v1149
  %1153 = vst [vmem:[#allocation3 + $0x38] sm:$0xff] %v1147
  %1154 = vrot.lane.b32.xlu0 %v1114, 9
  %v1155 = vpop.permute.xlu0 %1154
  %1156 = vrot.lane.b32.xlu0 %v1116, 9
  %v1157 = vpop.permute.xlu0 %1156
  %1158 = vrot.lane.b32.xlu0 %v1115, 9
  %v1159 = vpop.permute.xlu0 %1158
  %1160 = vrot.lane.b32.xlu0 %v1117, 9
  %v1161 = vpop.permute.xlu0 %1160
  %v1162 = vsel %vm80, %v1155, %v1159
  %v1163 = vsel %vm80, %v1157, %v1161
  %v1164 = vsel %vm80, %v1159, %v1155
  %v1165 = vsel %vm80, %v1161, %v1157
  %1166 = vst [vmem:[#allocation3 + $0x40] sm:$0xff] %v1164
  %1167 = vst [vmem:[#allocation3 + $0x48] sm:$0xff] %v1162
  %1168 = vst [vmem:[#allocation3 + $0x50] sm:$0xff] %v1165
  %1169 = vst [vmem:[#allocation3 + $0x58] sm:$0xff] %v1163
  %1170 = vrot.lane.b32.xlu0 %v1114, 1
  %v1171 = vpop.permute.xlu0 %1170
  %1172 = vrot.lane.b32.xlu0 %v1116, 1
  %v1173 = vpop.permute.xlu0 %1172
  %1174 = vrot.lane.b32.xlu0 %v1115, 1
  %v1175 = vpop.permute.xlu0 %1174
  %1176 = vrot.lane.b32.xlu0 %v1117, 1
  %v1177 = vpop.permute.xlu0 %1176
  %v1178 = vsel %vm97, %v1171, %v1175
  %v1179 = vsel %vm97, %v1173, %v1177
  %v1180 = vsel %vm97, %v1175, %v1171
  %v1181 = vsel %vm97, %v1177, %v1173
  %1182 = vst [vmem:[#allocation3 + $0x60] sm:$0xff] %v1180
  %1183 = vst [vmem:[#allocation3 + $0x68] sm:$0xff] %v1178
  %1184 = vst [vmem:[#allocation3 + $0x70] sm:$0xff] %v1181
  %1185 = vst [vmem:[#allocation3 + $0x78] sm:$0xff] %v1179
  %1186 = vrot.lane.b32.xlu0 %v1114, 127
  %v1187 = vpop.permute.xlu0 %1186
  %1188 = vrot.lane.b32.xlu0 %v1116, 127
  %v1189 = vpop.permute.xlu0 %1188
  %1190 = vrot.lane.b32.xlu0 %v1115, 127
  %v1191 = vpop.permute.xlu0 %1190
  %1192 = vrot.lane.b32.xlu0 %v1117, 127
  %v1193 = vpop.permute.xlu0 %1192
  %v1194 = vsel %vm114, %v1187, %v1191
  %v1195 = vsel %vm114, %v1189, %v1193
  %v1196 = vsel %vm114, %v1191, %v1187
  %v1197 = vsel %vm114, %v1193, %v1189
  %1198 = vst [vmem:[#allocation3 + $0x80] sm:$0xff] %v1194
  %1199 = vst [vmem:[#allocation3 + $0x88] sm:$0xff] %v1196
  %1200 = vst [vmem:[#allocation3 + $0x90] sm:$0xff] %v1195
  %1201 = vst [vmem:[#allocation3 + $0x98] sm:$0xff] %v1197
  %1202 = vrot.lane.b32.xlu0 %v1114, 119
  %v1203 = vpop.permute.xlu0 %1202
  %1204 = vrot.lane.b32.xlu0 %v1116, 119
  %v1205 = vpop.permute.xlu0 %1204
  %1206 = vrot.lane.b32.xlu0 %v1115, 119
  %v1207 = vpop.permute.xlu0 %1206
  %1208 = vrot.lane.b32.xlu0 %v1117, 119
  %v1209 = vpop.permute.xlu0 %1208
  %v1210 = vsel %vm131, %v1203, %v1207
  %v1211 = vsel %vm131, %v1205, %v1209
  %v1212 = vsel %vm131, %v1207, %v1203
  %v1213 = vsel %vm131, %v1209, %v1205
  %1214 = vst [vmem:[#allocation3 + $0xa0] sm:$0xff] %v1210
  %1215 = vst [vmem:[#allocation3 + $0xa8] sm:$0xff] %v1212
  %1216 = vst [vmem:[#allocation3 + $0xb0] sm:$0xff] %v1211
  %1217 = vst [vmem:[#allocation3 + $0xb8] sm:$0xff] %v1213
  %1218 = vrot.lane.b32.xlu0 %v1114, 118
  %v1219 = vpop.permute.xlu0 %1218
  %1220 = vrot.lane.b32.xlu0 %v1116, 118
  %v1221 = vpop.permute.xlu0 %1220
  %1222 = vrot.lane.b32.xlu0 %v1115, 118
  %v1223 = vpop.permute.xlu0 %1222
  %1224 = vrot.lane.b32.xlu0 %v1117, 118
  %v1225 = vpop.permute.xlu0 %1224
  %v1226 = vsel %vm148, %v1219, %v1223
  %v1227 = vsel %vm148, %v1221, %v1225
  %v1228 = vsel %vm148, %v1223, %v1219
  %v1229 = vsel %vm148, %v1225, %v1221
  %1230 = vst [vmem:[#allocation3 + $0xc0] sm:$0xff] %v1226
  %1231 = vst [vmem:[#allocation3 + $0xc8] sm:$0xff] %v1228
  %1232 = vst [vmem:[#allocation3 + $0xd0] sm:$0xff] %v1227
  %1233 = vst [vmem:[#allocation3 + $0xd8] sm:$0xff] %v1229
  %1234 = vrot.lane.b32.xlu0 %v1114, 117
  %v1235 = vpop.permute.xlu0 %1234
  %1236 = vrot.lane.b32.xlu0 %v1116, 117
  %v1237 = vpop.permute.xlu0 %1236
  %1238 = vrot.lane.b32.xlu0 %v1115, 117
  %v1239 = vpop.permute.xlu0 %1238
  %1240 = vrot.lane.b32.xlu0 %v1117, 117
  %v1241 = vpop.permute.xlu0 %1240
  %v1242 = vsel %vm165, %v1235, %v1239
  %v1243 = vsel %vm165, %v1237, %v1241
  %v1244 = vsel %vm165, %v1239, %v1235
  %v1245 = vsel %vm165, %v1241, %v1237
  %1246 = vst [vmem:[#allocation3 + $0xe0] sm:$0xff] %v1242
  %1247 = vst [vmem:[#allocation3 + $0xe8] sm:$0xff] %v1244
  %1248 = vst [vmem:[#allocation3 + $0xf0] sm:$0xff] %v1243
  %1249 = vst [vmem:[#allocation3 + $0xf8] sm:$0xff] %v1245
  %v1250 = vld [vmem:[#allocation3] sm:$0xff]
  %v1251 = vld [vmem:[#allocation3 + $0x8] sm:$0xff]
  %v1252 = vld [vmem:[#allocation3 + $0x10] sm:$0xff]
  %v1253 = vld [vmem:[#allocation3 + $0x18] sm:$0xff]
  %v1254 = vld [vmem:[#allocation3 + $0x20] sm:$0xff]
  %v1255 = vld [vmem:[#allocation3 + $0x28] sm:$0xff]
  %v1256 = vld [vmem:[#allocation3 + $0x30] sm:$0xff]
  %v1257 = vld [vmem:[#allocation3 + $0x38] sm:$0xff]
  %v1258 = vld [vmem:[#allocation3 + $0x40] sm:$0xff]
  %v1259 = vld [vmem:[#allocation3 + $0x48] sm:$0xff]
  %v1260 = vld [vmem:[#allocation3 + $0x50] sm:$0xff]
  %v1261 = vld [vmem:[#allocation3 + $0x58] sm:$0xff]
  %v1262 = vld [vmem:[#allocation3 + $0x60] sm:$0xff]
  %v1263 = vld [vmem:[#allocation3 + $0x68] sm:$0xff]
  %v1264 = vld [vmem:[#allocation3 + $0x70] sm:$0xff]
  %v1265 = vld [vmem:[#allocation3 + $0x78] sm:$0xff]
  %v1266 = vld [vmem:[#allocation3 + $0x80] sm:$0xff]
  %v1267 = vld [vmem:[#allocation3 + $0x88] sm:$0xff]
  %v1268 = vld [vmem:[#allocation3 + $0x90] sm:$0xff]
  %v1269 = vld [vmem:[#allocation3 + $0x98] sm:$0xff]
  %v1270 = vld [vmem:[#allocation3 + $0xa0] sm:$0xff]
  %v1271 = vld [vmem:[#allocation3 + $0xa8] sm:$0xff]
  %v1272 = vld [vmem:[#allocation3 + $0xb0] sm:$0xff]
  %v1273 = vld [vmem:[#allocation3 + $0xb8] sm:$0xff]
  %v1274 = vld [vmem:[#allocation3 + $0xc0] sm:$0xff]
  %v1275 = vld [vmem:[#allocation3 + $0xc8] sm:$0xff]
  %v1276 = vld [vmem:[#allocation3 + $0xd0] sm:$0xff]
  %v1277 = vld [vmem:[#allocation3 + $0xd8] sm:$0xff]
  %v1278 = vld [vmem:[#allocation3 + $0xe0] sm:$0xff]
  %v1279 = vld [vmem:[#allocation3 + $0xe8] sm:$0xff]
  %v1280 = vld [vmem:[#allocation3 + $0xf0] sm:$0xff]
  %v1281 = vld [vmem:[#allocation3 + $0xf8] sm:$0xff]
  %1282 = vmatprep.subr.mxu0 %v1281
  %1283 = vmatpush1.msra.mxu0 %v1280
  %1284 = vmatprep.subr.mxu0 %v1279
  %1285 = vmatpush1.msra.mxu0 %v1278
  %1286 = vmatprep.subr.mxu0 %v1277
  %1287 = vmatpush1.msra.mxu0 %v1276
  %1288 = vmatprep.subr.mxu0 %v1275
  %1289 = vmatpush1.msra.mxu0 %v1274
  %1290 = vmatprep.subr.mxu0 %v1273
  %1291 = vmatpush1.msra.mxu0 %v1272
  %1292 = vmatprep.subr.mxu0 %v1271
  %1293 = vmatpush1.msra.mxu0 %v1270
  %1294 = vmatprep.subr.mxu0 %v1269
  %1295 = vmatpush1.msra.mxu0 %v1268
  %1296 = vmatprep.subr.mxu0 %v1267
  %1297 = vmatpush1.msra.mxu0 %v1266
  %1298 = vmatprep.subr.mxu0 %v1265
  %1299 = vmatpush1.msra.mxu0 %v1264
  %1300 = vmatprep.subr.mxu0 %v1263
  %1301 = vmatpush1.msra.mxu0 %v1262
  %1302 = vmatprep.subr.mxu0 %v1261
  %1303 = vmatpush1.msra.mxu0 %v1260
  %1304 = vmatprep.subr.mxu0 %v1259
  %1305 = vmatpush1.msra.mxu0 %v1258
  %1306 = vmatprep.subr.mxu0 %v1257
  %1307 = vmatpush1.msra.mxu0 %v1256
  %1308 = vmatprep.subr.mxu0 %v1255
  %1309 = vmatpush1.msra.mxu0 %v1254
  %1310 = vmatprep.subr.mxu0 %v1253
  %1311 = vmatpush1.msra.mxu0 %v1252
  %1312 = vmatprep.subr.mxu0 %v1251
  %1313 = vmatpush1.msra.mxu0 %v1250
  %1314 = vmatprep.subr.mxu0 0.0
  %1315 = vmatpush2.msra.mxu0 0.0
  %1316 = vmatprep.subr.mxu0 0.0
  %1317 = vmatpush2.msra.mxu0 0.0
  %1318 = vmatprep.subr.mxu0 0.0
  %1319 = vmatpush2.msra.mxu0 0.0
  %1320 = vmatprep.subr.mxu0 0.0
  %1321 = vmatpush2.msra.mxu0 0.0
  %1322 = vmatprep.subr.mxu0 0.0
  %1323 = vmatpush2.msra.mxu0 0.0
  %1324 = vmatprep.subr.mxu0 0.0
  %1325 = vmatpush2.msra.mxu0 0.0
  %1326 = vmatprep.subr.mxu0 0.0
  %1327 = vmatpush2.msra.mxu0 0.0
  %1328 = vmatprep.subr.mxu0 0.0
  %1329 = vmatpush2.msra.mxu0 0.0
  %1330 = vmatprep.subr.mxu0 0.0
  %1331 = vmatpush2.msra.mxu0 0.0
  %1332 = vmatprep.subr.mxu0 0.0
  %1333 = vmatpush2.msra.mxu0 0.0
  %1334 = vmatprep.subr.mxu0 0.0
  %1335 = vmatpush2.msra.mxu0 0.0
  %1336 = vmatprep.subr.mxu0 0.0
  %1337 = vmatpush2.msra.mxu0 0.0
  %1338 = vmatprep.subr.mxu0 0.0
  %1339 = vmatpush2.msra.mxu0 0.0
  %1340 = vmatprep.subr.mxu0 0.0
  %1341 = vmatpush2.msra.mxu0 0.0
  %1342 = vmatprep.subr.mxu0 0.0
  %1343 = vmatpush2.msra.mxu0 0.0
  %1344 = vmatprep.subr.mxu0 0.0
  %1345 = vmatpush2.msra.mxu0 0.0
  %1346 = vmatprep.mubr.f32.mxu0 0.0
  %1347 = vmatmul.mubr.f32.gmra.mxu0 %v1118
  %v1348 = vpop.f32.mrf.mxu0
  %v1349 = vadd.f32 0.0, %v1348
  %v1350 = vpop.f32.mrf.mxu0
  %v1351 = vadd.f32 0.0, %v1350
  %1352 = vmatprep.mubr.f32.mxu0 0.0
  %1353 = vmatmul.mubr.f32.gmra.mxu0 %v1119
  %v1354 = vpop.f32.mrf.mxu0
  %v1355 = vadd.f32 0.0, %v1354
  %v1356 = vpop.f32.mrf.mxu0
  %v1357 = vadd.f32 0.0, %v1356
  %1358 = vdwg.mxu0
  %v1360 = vsel %vm283, %v1120, 0
  %v1363 = vsel %vm283, %v1121, 0
  %1365 = vmatprep.subr.mxu0 0.0
  %1366 = vmatpush1.msra.mxu0 0.0
  %1367 = vmatprep.subr.mxu0 0.0
  %1368 = vmatpush1.msra.mxu0 0.0
  %1369 = vmatprep.subr.mxu0 0.0
  %1370 = vmatpush1.msra.mxu0 0.0
  %1371 = vmatprep.subr.mxu0 0.0
  %1372 = vmatpush1.msra.mxu0 0.0
  %1373 = vmatprep.subr.mxu0 0.0
  %1374 = vmatpush1.msra.mxu0 0.0
  %1375 = vmatprep.subr.mxu0 0.0
  %1376 = vmatpush1.msra.mxu0 0.0
  %1377 = vmatprep.subr.mxu0 0.0
  %1378 = vmatpush1.msra.mxu0 0.0
  %1379 = vmatprep.subr.mxu0 0.0
  %1380 = vmatpush1.msra.mxu0 0.0
  %1381 = vmatprep.subr.mxu0 0.0
  %1382 = vmatpush1.msra.mxu0 0.0
  %1383 = vmatprep.subr.mxu0 0.0
  %1384 = vmatpush1.msra.mxu0 0.0
  %1385 = vmatprep.subr.mxu0 0.0
  %1386 = vmatpush1.msra.mxu0 0.0
  %1387 = vmatprep.subr.mxu0 0.0
  %1388 = vmatpush1.msra.mxu0 0.0
  %1389 = vmatprep.subr.mxu0 0.0
  %1390 = vmatpush1.msra.mxu0 0.0
  %1391 = vmatprep.subr.mxu0 0.0
  %1392 = vmatpush1.msra.mxu0 0.0
  %1393 = vmatprep.subr.mxu0 %v1117
  %1394 = vmatpush1.msra.mxu0 %v1116
  %1395 = vmatprep.subr.mxu0 %v1115
  %1396 = vmatpush1.msra.mxu0 %v1114
  %1397 = vmatprep.subr.mxu0 0.0
  %1398 = vmatpush2.msra.mxu0 0.0
  %1399 = vmatprep.subr.mxu0 0.0
  %1400 = vmatpush2.msra.mxu0 0.0
  %1401 = vmatprep.subr.mxu0 0.0
  %1402 = vmatpush2.msra.mxu0 0.0
  %1403 = vmatprep.subr.mxu0 0.0
  %1404 = vmatpush2.msra.mxu0 0.0
  %1405 = vmatprep.subr.mxu0 0.0
  %1406 = vmatpush2.msra.mxu0 0.0
  %1407 = vmatprep.subr.mxu0 0.0
  %1408 = vmatpush2.msra.mxu0 0.0
  %1409 = vmatprep.subr.mxu0 0.0
  %1410 = vmatpush2.msra.mxu0 0.0
  %1411 = vmatprep.subr.mxu0 0.0
  %1412 = vmatpush2.msra.mxu0 0.0
  %1413 = vmatprep.subr.mxu0 0.0
  %1414 = vmatpush2.msra.mxu0 0.0
  %1415 = vmatprep.subr.mxu0 0.0
  %1416 = vmatpush2.msra.mxu0 0.0
  %1417 = vmatprep.subr.mxu0 0.0
  %1418 = vmatpush2.msra.mxu0 0.0
  %1419 = vmatprep.subr.mxu0 0.0
  %1420 = vmatpush2.msra.mxu0 0.0
  %1421 = vmatprep.subr.mxu0 0.0
  %1422 = vmatpush2.msra.mxu0 0.0
  %1423 = vmatprep.subr.mxu0 0.0
  %1424 = vmatpush2.msra.mxu0 0.0
  %1425 = vmatprep.subr.mxu0 0.0
  %1426 = vmatpush2.msra.mxu0 0.0
  %1427 = vmatprep.subr.mxu0 0.0
  %1428 = vmatpush2.msra.mxu0 0.0
  %1429 = vmatprep.mubr.f32.mxu0 0.0
  %1430 = vmatmul.mubr.f32.gmra.mxu0 %v1360
  %v1431 = vpop.f32.mrf.mxu0
  %v1432 = vadd.f32 %v1349, %v1431
  %v1433 = vpop.f32.mrf.mxu0
  %v1434 = vadd.f32 %v1351, %v1433
  %1435 = vmatprep.mubr.f32.mxu0 0.0
  %1436 = vmatmul.mubr.f32.gmra.mxu0 %v1363
  %v1437 = vpop.f32.mrf.mxu0
  %v1438 = vadd.f32 %v1355, %v1437
  %v1439 = vpop.f32.mrf.mxu0
  %v1440 = vadd.f32 %v1357, %v1439
  %1441 = vdwg.mxu0
  %1442 = vset.pattern.permute.xlu0 16
  %1443 = vperm.xlu0 %1442, %v1120
  %v1444 = vpop.permute.xlu0 %1443
  %1446 = vset.pattern.permute.xlu0 16
  %1447 = vperm.xlu0 %1446, %v1121
  %v1448 = vpop.permute.xlu0 %1447
  %v1450 = vadd.f32 %v1432, %v1444
  %v1451 = vadd.f32 %v1434, %v1444
  %v1452 = vadd.f32 %v1438, %v1448
  %v1453 = vadd.f32 %v1440, %v1448
  %v1454 = vadd.f32 %v1114, %v1450
  %v1455 = vadd.f32 %v1115, %v1451
  %v1456 = vadd.f32 %v1116, %v1452
  %v1457 = vadd.f32 %v1117, %v1453
  %v1458 = vmax.f32 %v1454, 0.0
  %v1459 = vmax.f32 %v1455, 0.0
  %v1460 = vmax.f32 %v1456, 0.0
  %v1461 = vmax.f32 %v1457, 0.0
  %v1462 = vmul.f32 %v1458, %v387
  %v1463 = vmul.f32 %v1459, %v391
  %v1464 = vmul.f32 %v1460, %v387
  %v1465 = vmul.f32 %v1461, %v391
  %1466 = vst [vmem:[#allocation2] sm:$0xff] %v1462
  %1467 = vst [vmem:[#allocation2 + $0x8] sm:$0xff] %v1463
  %1468 = vst [vmem:[#allocation2 + $0x10] sm:$0xff] %v1464
  %1469 = vst [vmem:[#allocation2 + $0x18] sm:$0xff] %v1465
  %v1470 = vld [vmem:[#allocation2] sm:$0xff]
  %v1471 = vld [vmem:[#allocation2 + $0x8] sm:$0xff]
  %v1472 = vld [vmem:[#allocation2 + $0x10] sm:$0xff]
  %v1473 = vld [vmem:[#allocation2 + $0x18] sm:$0xff]
  %v1474 = vld [vmem:[%s1 + $0x80] sm:$0xff]
  %v1475 = vld [vmem:[%s1 + $0x90] sm:$0xff]
  %v1476 = vld [vmem:[%s1 + $0x88] sm:$0xff]
  %v1477 = vld [vmem:[%s1 + $0x98] sm:$0xff]
  %1478 = vrot.lane.b32.xlu0 %v1470, 11
  %v1479 = vpop.permute.xlu0 %1478
  %1480 = vrot.lane.b32.xlu0 %v1472, 11
  %v1481 = vpop.permute.xlu0 %1480
  %1482 = vrot.lane.b32.xlu0 %v1471, 11
  %v1483 = vpop.permute.xlu0 %1482
  %1484 = vrot.lane.b32.xlu0 %v1473, 11
  %v1485 = vpop.permute.xlu0 %1484
  %v1486 = vsel %vm46, %v1479, %v1483
  %v1487 = vsel %vm46, %v1481, %v1485
  %v1488 = vsel %vm46, %v1483, %v1479
  %v1489 = vsel %vm46, %v1485, %v1481
  %1490 = vst [vmem:[#allocation3] sm:$0xff] %v1488
  %1491 = vst [vmem:[#allocation3 + $0x8] sm:$0xff] %v1486
  %1492 = vst [vmem:[#allocation3 + $0x10] sm:$0xff] %v1489
  %1493 = vst [vmem:[#allocation3 + $0x18] sm:$0xff] %v1487
  %1494 = vrot.lane.b32.xlu0 %v1470, 10
  %v1495 = vpop.permute.xlu0 %1494
  %1496 = vrot.lane.b32.xlu0 %v1472, 10
  %v1497 = vpop.permute.xlu0 %1496
  %1498 = vrot.lane.b32.xlu0 %v1471, 10
  %v1499 = vpop.permute.xlu0 %1498
  %1500 = vrot.lane.b32.xlu0 %v1473, 10
  %v1501 = vpop.permute.xlu0 %1500
  %v1502 = vsel %vm63, %v1495, %v1499
  %v1503 = vsel %vm63, %v1497, %v1501
  %v1504 = vsel %vm63, %v1499, %v1495
  %v1505 = vsel %vm63, %v1501, %v1497
  %1506 = vst [vmem:[#allocation3 + $0x20] sm:$0xff] %v1504
  %1507 = vst [vmem:[#allocation3 + $0x28] sm:$0xff] %v1502
  %1508 = vst [vmem:[#allocation3 + $0x30] sm:$0xff] %v1505
  %1509 = vst [vmem:[#allocation3 + $0x38] sm:$0xff] %v1503
  %1510 = vrot.lane.b32.xlu0 %v1470, 9
  %v1511 = vpop.permute.xlu0 %1510
  %1512 = vrot.lane.b32.xlu0 %v1472, 9
  %v1513 = vpop.permute.xlu0 %1512
  %1514 = vrot.lane.b32.xlu0 %v1471, 9
  %v1515 = vpop.permute.xlu0 %1514
  %1516 = vrot.lane.b32.xlu0 %v1473, 9
  %v1517 = vpop.permute.xlu0 %1516
  %v1518 = vsel %vm80, %v1511, %v1515
  %v1519 = vsel %vm80, %v1513, %v1517
  %v1520 = vsel %vm80, %v1515, %v1511
  %v1521 = vsel %vm80, %v1517, %v1513
  %1522 = vst [vmem:[#allocation3 + $0x40] sm:$0xff] %v1520
  %1523 = vst [vmem:[#allocation3 + $0x48] sm:$0xff] %v1518
  %1524 = vst [vmem:[#allocation3 + $0x50] sm:$0xff] %v1521
  %1525 = vst [vmem:[#allocation3 + $0x58] sm:$0xff] %v1519
  %1526 = vrot.lane.b32.xlu0 %v1470, 1
  %v1527 = vpop.permute.xlu0 %1526
  %1528 = vrot.lane.b32.xlu0 %v1472, 1
  %v1529 = vpop.permute.xlu0 %1528
  %1530 = vrot.lane.b32.xlu0 %v1471, 1
  %v1531 = vpop.permute.xlu0 %1530
  %1532 = vrot.lane.b32.xlu0 %v1473, 1
  %v1533 = vpop.permute.xlu0 %1532
  %v1534 = vsel %vm97, %v1527, %v1531
  %v1535 = vsel %vm97, %v1529, %v1533
  %v1536 = vsel %vm97, %v1531, %v1527
  %v1537 = vsel %vm97, %v1533, %v1529
  %1538 = vst [vmem:[#allocation3 + $0x60] sm:$0xff] %v1536
  %1539 = vst [vmem:[#allocation3 + $0x68] sm:$0xff] %v1534
  %1540 = vst [vmem:[#allocation3 + $0x70] sm:$0xff] %v1537
  %1541 = vst [vmem:[#allocation3 + $0x78] sm:$0xff] %v1535
  %1542 = vrot.lane.b32.xlu0 %v1470, 127
  %v1543 = vpop.permute.xlu0 %1542
  %1544 = vrot.lane.b32.xlu0 %v1472, 127
  %v1545 = vpop.permute.xlu0 %1544
  %1546 = vrot.lane.b32.xlu0 %v1471, 127
  %v1547 = vpop.permute.xlu0 %1546
  %1548 = vrot.lane.b32.xlu0 %v1473, 127
  %v1549 = vpop.permute.xlu0 %1548
  %v1550 = vsel %vm114, %v1543, %v1547
  %v1551 = vsel %vm114, %v1545, %v1549
  %v1552 = vsel %vm114, %v1547, %v1543
  %v1553 = vsel %vm114, %v1549, %v1545
  %1554 = vst [vmem:[#allocation3 + $0x80] sm:$0xff] %v1550
  %1555 = vst [vmem:[#allocation3 + $0x88] sm:$0xff] %v1552
  %1556 = vst [vmem:[#allocation3 + $0x90] sm:$0xff] %v1551
  %1557 = vst [vmem:[#allocation3 + $0x98] sm:$0xff] %v1553
  %1558 = vrot.lane.b32.xlu0 %v1470, 119
  %v1559 = vpop.permute.xlu0 %1558
  %1560 = vrot.lane.b32.xlu0 %v1472, 119
  %v1561 = vpop.permute.xlu0 %1560
  %1562 = vrot.lane.b32.xlu0 %v1471, 119
  %v1563 = vpop.permute.xlu0 %1562
  %1564 = vrot.lane.b32.xlu0 %v1473, 119
  %v1565 = vpop.permute.xlu0 %1564
  %v1566 = vsel %vm131, %v1559, %v1563
  %v1567 = vsel %vm131, %v1561, %v1565
  %v1568 = vsel %vm131, %v1563, %v1559
  %v1569 = vsel %vm131, %v1565, %v1561
  %1570 = vst [vmem:[#allocation3 + $0xa0] sm:$0xff] %v1566
  %1571 = vst [vmem:[#allocation3 + $0xa8] sm:$0xff] %v1568
  %1572 = vst [vmem:[#allocation3 + $0xb0] sm:$0xff] %v1567
  %1573 = vst [vmem:[#allocation3 + $0xb8] sm:$0xff] %v1569
  %1574 = vrot.lane.b32.xlu0 %v1470, 118
  %v1575 = vpop.permute.xlu0 %1574
  %1576 = vrot.lane.b32.xlu0 %v1472, 118
  %v1577 = vpop.permute.xlu0 %1576
  %1578 = vrot.lane.b32.xlu0 %v1471, 118
  %v1579 = vpop.permute.xlu0 %1578
  %1580 = vrot.lane.b32.xlu0 %v1473, 118
  %v1581 = vpop.permute.xlu0 %1580
  %v1582 = vsel %vm148, %v1575, %v1579
  %v1583 = vsel %vm148, %v1577, %v1581
  %v1584 = vsel %vm148, %v1579, %v1575
  %v1585 = vsel %vm148, %v1581, %v1577
  %1586 = vst [vmem:[#allocation3 + $0xc0] sm:$0xff] %v1582
  %1587 = vst [vmem:[#allocation3 + $0xc8] sm:$0xff] %v1584
  %1588 = vst [vmem:[#allocation3 + $0xd0] sm:$0xff] %v1583
  %1589 = vst [vmem:[#allocation3 + $0xd8] sm:$0xff] %v1585
  %1590 = vrot.lane.b32.xlu0 %v1470, 117
  %v1591 = vpop.permute.xlu0 %1590
  %1592 = vrot.lane.b32.xlu0 %v1472, 117
  %v1593 = vpop.permute.xlu0 %1592
  %1594 = vrot.lane.b32.xlu0 %v1471, 117
  %v1595 = vpop.permute.xlu0 %1594
  %1596 = vrot.lane.b32.xlu0 %v1473, 117
  %v1597 = vpop.permute.xlu0 %1596
  %v1598 = vsel %vm165, %v1591, %v1595
  %v1599 = vsel %vm165, %v1593, %v1597
  %v1600 = vsel %vm165, %v1595, %v1591
  %v1601 = vsel %vm165, %v1597, %v1593
  %1602 = vst [vmem:[#allocation3 + $0xe0] sm:$0xff] %v1598
  %1603 = vst [vmem:[#allocation3 + $0xe8] sm:$0xff] %v1600
  %1604 = vst [vmem:[#allocation3 + $0xf0] sm:$0xff] %v1599
  %1605 = vst [vmem:[#allocation3 + $0xf8] sm:$0xff] %v1601
  %v1606 = vld [vmem:[#allocation3] sm:$0xff]
  %v1607 = vld [vmem:[#allocation3 + $0x8] sm:$0xff]
  %v1608 = vld [vmem:[#allocation3 + $0x10] sm:$0xff]
  %v1609 = vld [vmem:[#allocation3 + $0x18] sm:$0xff]
  %v1610 = vld [vmem:[#allocation3 + $0x20] sm:$0xff]
  %v1611 = vld [vmem:[#allocation3 + $0x28] sm:$0xff]
  %v1612 = vld [vmem:[#allocation3 + $0x30] sm:$0xff]
  %v1613 = vld [vmem:[#allocation3 + $0x38] sm:$0xff]
  %v1614 = vld [vmem:[#allocation3 + $0x40] sm:$0xff]
  %v1615 = vld [vmem:[#allocation3 + $0x48] sm:$0xff]
  %v1616 = vld [vmem:[#allocation3 + $0x50] sm:$0xff]
  %v1617 = vld [vmem:[#allocation3 + $0x58] sm:$0xff]
  %v1618 = vld [vmem:[#allocation3 + $0x60] sm:$0xff]
  %v1619 = vld [vmem:[#allocation3 + $0x68] sm:$0xff]
  %v1620 = vld [vmem:[#allocation3 + $0x70] sm:$0xff]
  %v1621 = vld [vmem:[#allocation3 + $0x78] sm:$0xff]
  %v1622 = vld [vmem:[#allocation3 + $0x80] sm:$0xff]
  %v1623 = vld [vmem:[#allocation3 + $0x88] sm:$0xff]
  %v1624 = vld [vmem:[#allocation3 + $0x90] sm:$0xff]
  %v1625 = vld [vmem:[#allocation3 + $0x98] sm:$0xff]
  %v1626 = vld [vmem:[#allocation3 + $0xa0] sm:$0xff]
  %v1627 = vld [vmem:[#allocation3 + $0xa8] sm:$0xff]
  %v1628 = vld [vmem:[#allocation3 + $0xb0] sm:$0xff]
  %v1629 = vld [vmem:[#allocation3 + $0xb8] sm:$0xff]
  %v1630 = vld [vmem:[#allocation3 + $0xc0] sm:$0xff]
  %v1631 = vld [vmem:[#allocation3 + $0xc8] sm:$0xff]
  %v1632 = vld [vmem:[#allocation3 + $0xd0] sm:$0xff]
  %v1633 = vld [vmem:[#allocation3 + $0xd8] sm:$0xff]
  %v1634 = vld [vmem:[#allocation3 + $0xe0] sm:$0xff]
  %v1635 = vld [vmem:[#allocation3 + $0xe8] sm:$0xff]
  %v1636 = vld [vmem:[#allocation3 + $0xf0] sm:$0xff]
  %v1637 = vld [vmem:[#allocation3 + $0xf8] sm:$0xff]
  %1638 = vmatprep.subr.mxu0 %v1637
  %1639 = vmatpush1.msra.mxu0 %v1636
  %1640 = vmatprep.subr.mxu0 %v1635
  %1641 = vmatpush1.msra.mxu0 %v1634
  %1642 = vmatprep.subr.mxu0 %v1633
  %1643 = vmatpush1.msra.mxu0 %v1632
  %1644 = vmatprep.subr.mxu0 %v1631
  %1645 = vmatpush1.msra.mxu0 %v1630
  %1646 = vmatprep.subr.mxu0 %v1629
  %1647 = vmatpush1.msra.mxu0 %v1628
  %1648 = vmatprep.subr.mxu0 %v1627
  %1649 = vmatpush1.msra.mxu0 %v1626
  %1650 = vmatprep.subr.mxu0 %v1625
  %1651 = vmatpush1.msra.mxu0 %v1624
  %1652 = vmatprep.subr.mxu0 %v1623
  %1653 = vmatpush1.msra.mxu0 %v1622
  %1654 = vmatprep.subr.mxu0 %v1621
  %1655 = vmatpush1.msra.mxu0 %v1620
  %1656 = vmatprep.subr.mxu0 %v1619
  %1657 = vmatpush1.msra.mxu0 %v1618
  %1658 = vmatprep.subr.mxu0 %v1617
  %1659 = vmatpush1.msra.mxu0 %v1616
  %1660 = vmatprep.subr.mxu0 %v1615
  %1661 = vmatpush1.msra.mxu0 %v1614
  %1662 = vmatprep.subr.mxu0 %v1613
  %1663 = vmatpush1.msra.mxu0 %v1612
  %1664 = vmatprep.subr.mxu0 %v1611
  %1665 = vmatpush1.msra.mxu0 %v1610
  %1666 = vmatprep.subr.mxu0 %v1609
  %1667 = vmatpush1.msra.mxu0 %v1608
  %1668 = vmatprep.subr.mxu0 %v1607
  %1669 = vmatpush1.msra.mxu0 %v1606
  %1670 = vmatprep.subr.mxu0 0.0
  %1671 = vmatpush2.msra.mxu0 0.0
  %1672 = vmatprep.subr.mxu0 0.0
  %1673 = vmatpush2.msra.mxu0 0.0
  %1674 = vmatprep.subr.mxu0 0.0
  %1675 = vmatpush2.msra.mxu0 0.0
  %1676 = vmatprep.subr.mxu0 0.0
  %1677 = vmatpush2.msra.mxu0 0.0
  %1678 = vmatprep.subr.mxu0 0.0
  %1679 = vmatpush2.msra.mxu0 0.0
  %1680 = vmatprep.subr.mxu0 0.0
  %1681 = vmatpush2.msra.mxu0 0.0
  %1682 = vmatprep.subr.mxu0 0.0
  %1683 = vmatpush2.msra.mxu0 0.0
  %1684 = vmatprep.subr.mxu0 0.0
  %1685 = vmatpush2.msra.mxu0 0.0
  %1686 = vmatprep.subr.mxu0 0.0
  %1687 = vmatpush2.msra.mxu0 0.0
  %1688 = vmatprep.subr.mxu0 0.0
  %1689 = vmatpush2.msra.mxu0 0.0
  %1690 = vmatprep.subr.mxu0 0.0
  %1691 = vmatpush2.msra.mxu0 0.0
  %1692 = vmatprep.subr.mxu0 0.0
  %1693 = vmatpush2.msra.mxu0 0.0
  %1694 = vmatprep.subr.mxu0 0.0
  %1695 = vmatpush2.msra.mxu0 0.0
  %1696 = vmatprep.subr.mxu0 0.0
  %1697 = vmatpush2.msra.mxu0 0.0
  %1698 = vmatprep.subr.mxu0 0.0
  %1699 = vmatpush2.msra.mxu0 0.0
  %1700 = vmatprep.subr.mxu0 0.0
  %1701 = vmatpush2.msra.mxu0 0.0
  %1702 = vmatprep.mubr.f32.mxu0 0.0
  %1703 = vmatmul.mubr.f32.gmra.mxu0 %v1474
  %v1704 = vpop.f32.mrf.mxu0
  %v1705 = vadd.f32 0.0, %v1704
  %v1706 = vpop.f32.mrf.mxu0
  %v1707 = vadd.f32 0.0, %v1706
  %1708 = vmatprep.mubr.f32.mxu0 0.0
  %1709 = vmatmul.mubr.f32.gmra.mxu0 %v1475
  %v1710 = vpop.f32.mrf.mxu0
  %v1711 = vadd.f32 0.0, %v1710
  %v1712 = vpop.f32.mrf.mxu0
  %v1713 = vadd.f32 0.0, %v1712
  %1714 = vdwg.mxu0
  %v1716 = vsel %vm283, %v1476, 0
  %v1719 = vsel %vm283, %v1477, 0
  %1721 = vmatprep.subr.mxu0 0.0
  %1722 = vmatpush1.msra.mxu0 0.0
  %1723 = vmatprep.subr.mxu0 0.0
  %1724 = vmatpush1.msra.mxu0 0.0
  %1725 = vmatprep.subr.mxu0 0.0
  %1726 = vmatpush1.msra.mxu0 0.0
  %1727 = vmatprep.subr.mxu0 0.0
  %1728 = vmatpush1.msra.mxu0 0.0
  %1729 = vmatprep.subr.mxu0 0.0
  %1730 = vmatpush1.msra.mxu0 0.0
  %1731 = vmatprep.subr.mxu0 0.0
  %1732 = vmatpush1.msra.mxu0 0.0
  %1733 = vmatprep.subr.mxu0 0.0
  %1734 = vmatpush1.msra.mxu0 0.0
  %1735 = vmatprep.subr.mxu0 0.0
  %1736 = vmatpush1.msra.mxu0 0.0
  %1737 = vmatprep.subr.mxu0 0.0
  %1738 = vmatpush1.msra.mxu0 0.0
  %1739 = vmatprep.subr.mxu0 0.0
  %1740 = vmatpush1.msra.mxu0 0.0
  %1741 = vmatprep.subr.mxu0 0.0
  %1742 = vmatpush1.msra.mxu0 0.0
  %1743 = vmatprep.subr.mxu0 0.0
  %1744 = vmatpush1.msra.mxu0 0.0
  %1745 = vmatprep.subr.mxu0 0.0
  %1746 = vmatpush1.msra.mxu0 0.0
  %1747 = vmatprep.subr.mxu0 0.0
  %1748 = vmatpush1.msra.mxu0 0.0
  %1749 = vmatprep.subr.mxu0 %v1473
  %1750 = vmatpush1.msra.mxu0 %v1472
  %1751 = vmatprep.subr.mxu0 %v1471
  %1752 = vmatpush1.msra.mxu0 %v1470
  %1753 = vmatprep.subr.mxu0 0.0
  %1754 = vmatpush2.msra.mxu0 0.0
  %1755 = vmatprep.subr.mxu0 0.0
  %1756 = vmatpush2.msra.mxu0 0.0
  %1757 = vmatprep.subr.mxu0 0.0
  %1758 = vmatpush2.msra.mxu0 0.0
  %1759 = vmatprep.subr.mxu0 0.0
  %1760 = vmatpush2.msra.mxu0 0.0
  %1761 = vmatprep.subr.mxu0 0.0
  %1762 = vmatpush2.msra.mxu0 0.0
  %1763 = vmatprep.subr.mxu0 0.0
  %1764 = vmatpush2.msra.mxu0 0.0
  %1765 = vmatprep.subr.mxu0 0.0
  %1766 = vmatpush2.msra.mxu0 0.0
  %1767 = vmatprep.subr.mxu0 0.0
  %1768 = vmatpush2.msra.mxu0 0.0
  %1769 = vmatprep.subr.mxu0 0.0
  %1770 = vmatpush2.msra.mxu0 0.0
  %1771 = vmatprep.subr.mxu0 0.0
  %1772 = vmatpush2.msra.mxu0 0.0
  %1773 = vmatprep.subr.mxu0 0.0
  %1774 = vmatpush2.msra.mxu0 0.0
  %1775 = vmatprep.subr.mxu0 0.0
  %1776 = vmatpush2.msra.mxu0 0.0
  %1777 = vmatprep.subr.mxu0 0.0
  %1778 = vmatpush2.msra.mxu0 0.0
  %1779 = vmatprep.subr.mxu0 0.0
  %1780 = vmatpush2.msra.mxu0 0.0
  %1781 = vmatprep.subr.mxu0 0.0
  %1782 = vmatpush2.msra.mxu0 0.0
  %1783 = vmatprep.subr.mxu0 0.0
  %1784 = vmatpush2.msra.mxu0 0.0
  %1785 = vmatprep.mubr.f32.mxu0 0.0
  %1786 = vmatmul.mubr.f32.gmra.mxu0 %v1716
  %v1787 = vpop.f32.mrf.mxu0
  %v1788 = vadd.f32 %v1705, %v1787
  %v1789 = vpop.f32.mrf.mxu0
  %v1790 = vadd.f32 %v1707, %v1789
  %1791 = vmatprep.mubr.f32.mxu0 0.0
  %1792 = vmatmul.mubr.f32.gmra.mxu0 %v1719
  %v1793 = vpop.f32.mrf.mxu0
  %v1794 = vadd.f32 %v1711, %v1793
  %v1795 = vpop.f32.mrf.mxu0
  %v1796 = vadd.f32 %v1713, %v1795
  %1797 = vdwg.mxu0
  %1798 = vset.pattern.permute.xlu0 16
  %1799 = vperm.xlu0 %1798, %v1476
  %v1800 = vpop.permute.xlu0 %1799
  %1802 = vset.pattern.permute.xlu0 16
  %1803 = vperm.xlu0 %1802, %v1477
  %v1804 = vpop.permute.xlu0 %1803
  %v1806 = vadd.f32 %v1788, %v1800
  %v1807 = vadd.f32 %v1790, %v1800
  %v1808 = vadd.f32 %v1794, %v1804
  %v1809 = vadd.f32 %v1796, %v1804
  %v1810 = vadd.f32 %v1470, %v1806
  %v1811 = vadd.f32 %v1471, %v1807
  %v1812 = vadd.f32 %v1472, %v1808
  %v1813 = vadd.f32 %v1473, %v1809
  %v1814 = vmax.f32 %v1810, 0.0
  %v1815 = vmax.f32 %v1811, 0.0
  %v1816 = vmax.f32 %v1812, 0.0
  %v1817 = vmax.f32 %v1813, 0.0
  %v1818 = vmul.f32 %v1814, %v387
  %v1819 = vmul.f32 %v1815, %v391
  %v1820 = vmul.f32 %v1816, %v387
  %v1821 = vmul.f32 %v1817, %v391
  %1822 = vst [vmem:[#allocation2] sm:$0xff] %v1818
  %1823 = vst [vmem:[#allocation2 + $0x8] sm:$0xff] %v1819
  %1824 = vst [vmem:[#allocation2 + $0x10] sm:$0xff] %v1820
  %1825 = vst [vmem:[#allocation2 + $0x18] sm:$0xff] %v1821
  %v1826 = vld [vmem:[#allocation2] sm:$0xff]
  %v1827 = vld [vmem:[#allocation2 + $0x8] sm:$0xff]
  %v1828 = vld [vmem:[#allocation2 + $0x10] sm:$0xff]
  %v1829 = vld [vmem:[#allocation2 + $0x18] sm:$0xff]
  %v1830 = vld [vmem:[%s1 + $0xa0] sm:$0xff]
  %v1831 = vld [vmem:[%s1 + $0xb0] sm:$0xff]
  %v1832 = vld [vmem:[%s1 + $0xa8] sm:$0xff]
  %v1833 = vld [vmem:[%s1 + $0xb8] sm:$0xff]
  %1834 = vrot.lane.b32.xlu0 %v1826, 11
  %v1835 = vpop.permute.xlu0 %1834
  %1836 = vrot.lane.b32.xlu0 %v1828, 11
  %v1837 = vpop.permute.xlu0 %1836
  %1838 = vrot.lane.b32.xlu0 %v1827, 11
  %v1839 = vpop.permute.xlu0 %1838
  %1840 = vrot.lane.b32.xlu0 %v1829, 11
  %v1841 = vpop.permute.xlu0 %1840
  %v1842 = vsel %vm46, %v1835, %v1839
  %v1843 = vsel %vm46, %v1837, %v1841
  %v1844 = vsel %vm46, %v1839, %v1835
  %v1845 = vsel %vm46, %v1841, %v1837
  %1846 = vst [vmem:[#allocation3] sm:$0xff] %v1844
  %1847 = vst [vmem:[#allocation3 + $0x8] sm:$0xff] %v1842
  %1848 = vst [vmem:[#allocation3 + $0x10] sm:$0xff] %v1845
  %1849 = vst [vmem:[#allocation3 + $0x18] sm:$0xff] %v1843
  %1850 = vrot.lane.b32.xlu0 %v1826, 10
  %v1851 = vpop.permute.xlu0 %1850
  %1852 = vrot.lane.b32.xlu0 %v1828, 10
  %v1853 = vpop.permute.xlu0 %1852
  %1854 = vrot.lane.b32.xlu0 %v1827, 10
  %v1855 = vpop.permute.xlu0 %1854
  %1856 = vrot.lane.b32.xlu0 %v1829, 10
  %v1857 = vpop.permute.xlu0 %1856
  %v1858 = vsel %vm63, %v1851, %v1855
  %v1859 = vsel %vm63, %v1853, %v1857
  %v1860 = vsel %vm63, %v1855, %v1851
  %v1861 = vsel %vm63, %v1857, %v1853
  %1862 = vst [vmem:[#allocation3 + $0x20] sm:$0xff] %v1860
  %1863 = vst [vmem:[#allocation3 + $0x28] sm:$0xff] %v1858
  %1864 = vst [vmem:[#allocation3 + $0x30] sm:$0xff] %v1861
  %1865 = vst [vmem:[#allocation3 + $0x38] sm:$0xff] %v1859
  %1866 = vrot.lane.b32.xlu0 %v1826, 9
  %v1867 = vpop.permute.xlu0 %1866
  %1868 = vrot.lane.b32.xlu0 %v1828, 9
  %v1869 = vpop.permute.xlu0 %1868
  %1870 = vrot.lane.b32.xlu0 %v1827, 9
  %v1871 = vpop.permute.xlu0 %1870
  %1872 = vrot.lane.b32.xlu0 %v1829, 9
  %v1873 = vpop.permute.xlu0 %1872
  %v1874 = vsel %vm80, %v1867, %v1871
  %v1875 = vsel %vm80, %v1869, %v1873
  %v1876 = vsel %vm80, %v1871, %v1867
  %v1877 = vsel %vm80, %v1873, %v1869
  %1878 = vst [vmem:[#allocation3 + $0x40] sm:$0xff] %v1876
  %1879 = vst [vmem:[#allocation3 + $0x48] sm:$0xff] %v1874
  %1880 = vst [vmem:[#allocation3 + $0x50] sm:$0xff] %v1877
  %1881 = vst [vmem:[#allocation3 + $0x58] sm:$0xff] %v1875
  %1882 = vrot.lane.b32.xlu0 %v1826, 1
  %v1883 = vpop.permute.xlu0 %1882
  %1884 = vrot.lane.b32.xlu0 %v1828, 1
  %v1885 = vpop.permute.xlu0 %1884
  %1886 = vrot.lane.b32.xlu0 %v1827, 1
  %v1887 = vpop.permute.xlu0 %1886
  %1888 = vrot.lane.b32.xlu0 %v1829, 1
  %v1889 = vpop.permute.xlu0 %1888
  %v1890 = vsel %vm97, %v1883, %v1887
  %v1891 = vsel %vm97, %v1885, %v1889
  %v1892 = vsel %vm97, %v1887, %v1883
  %v1893 = vsel %vm97, %v1889, %v1885
  %1894 = vst [vmem:[#allocation3 + $0x60] sm:$0xff] %v1892
  %1895 = vst [vmem:[#allocation3 + $0x68] sm:$0xff] %v1890
  %1896 = vst [vmem:[#allocation3 + $0x70] sm:$0xff] %v1893
  %1897 = vst [vmem:[#allocation3 + $0x78] sm:$0xff] %v1891
  %1898 = vrot.lane.b32.xlu0 %v1826, 127
  %v1899 = vpop.permute.xlu0 %1898
  %1900 = vrot.lane.b32.xlu0 %v1828, 127
  %v1901 = vpop.permute.xlu0 %1900
  %1902 = vrot.lane.b32.xlu0 %v1827, 127
  %v1903 = vpop.permute.xlu0 %1902
  %1904 = vrot.lane.b32.xlu0 %v1829, 127
  %v1905 = vpop.permute.xlu0 %1904
  %v1906 = vsel %vm114, %v1899, %v1903
  %v1907 = vsel %vm114, %v1901, %v1905
  %v1908 = vsel %vm114, %v1903, %v1899
  %v1909 = vsel %vm114, %v1905, %v1901
  %1910 = vst [vmem:[#allocation3 + $0x80] sm:$0xff] %v1906
  %1911 = vst [vmem:[#allocation3 + $0x88] sm:$0xff] %v1908
  %1912 = vst [vmem:[#allocation3 + $0x90] sm:$0xff] %v1907
  %1913 = vst [vmem:[#allocation3 + $0x98] sm:$0xff] %v1909
  %1914 = vrot.lane.b32.xlu0 %v1826, 119
  %v1915 = vpop.permute.xlu0 %1914
  %1916 = vrot.lane.b32.xlu0 %v1828, 119
  %v1917 = vpop.permute.xlu0 %1916
  %1918 = vrot.lane.b32.xlu0 %v1827, 119
  %v1919 = vpop.permute.xlu0 %1918
  %1920 = vrot.lane.b32.xlu0 %v1829, 119
  %v1921 = vpop.permute.xlu0 %1920
  %v1922 = vsel %vm131, %v1915, %v1919
  %v1923 = vsel %vm131, %v1917, %v1921
  %v1924 = vsel %vm131, %v1919, %v1915
  %v1925 = vsel %vm131, %v1921, %v1917
  %1926 = vst [vmem:[#allocation3 + $0xa0] sm:$0xff] %v1922
  %1927 = vst [vmem:[#allocation3 + $0xa8] sm:$0xff] %v1924
  %1928 = vst [vmem:[#allocation3 + $0xb0] sm:$0xff] %v1923
  %1929 = vst [vmem:[#allocation3 + $0xb8] sm:$0xff] %v1925
  %1930 = vrot.lane.b32.xlu0 %v1826, 118
  %v1931 = vpop.permute.xlu0 %1930
  %1932 = vrot.lane.b32.xlu0 %v1828, 118
  %v1933 = vpop.permute.xlu0 %1932
  %1934 = vrot.lane.b32.xlu0 %v1827, 118
  %v1935 = vpop.permute.xlu0 %1934
  %1936 = vrot.lane.b32.xlu0 %v1829, 118
  %v1937 = vpop.permute.xlu0 %1936
  %v1938 = vsel %vm148, %v1931, %v1935
  %v1939 = vsel %vm148, %v1933, %v1937
  %v1940 = vsel %vm148, %v1935, %v1931
  %v1941 = vsel %vm148, %v1937, %v1933
  %1942 = vst [vmem:[#allocation3 + $0xc0] sm:$0xff] %v1938
  %1943 = vst [vmem:[#allocation3 + $0xc8] sm:$0xff] %v1940
  %1944 = vst [vmem:[#allocation3 + $0xd0] sm:$0xff] %v1939
  %1945 = vst [vmem:[#allocation3 + $0xd8] sm:$0xff] %v1941
  %1946 = vrot.lane.b32.xlu0 %v1826, 117
  %v1947 = vpop.permute.xlu0 %1946
  %1948 = vrot.lane.b32.xlu0 %v1828, 117
  %v1949 = vpop.permute.xlu0 %1948
  %1950 = vrot.lane.b32.xlu0 %v1827, 117
  %v1951 = vpop.permute.xlu0 %1950
  %1952 = vrot.lane.b32.xlu0 %v1829, 117
  %v1953 = vpop.permute.xlu0 %1952
  %v1954 = vsel %vm165, %v1947, %v1951
  %v1955 = vsel %vm165, %v1949, %v1953
  %v1956 = vsel %vm165, %v1951, %v1947
  %v1957 = vsel %vm165, %v1953, %v1949
  %1958 = vst [vmem:[#allocation3 + $0xe0] sm:$0xff] %v1954
  %1959 = vst [vmem:[#allocation3 + $0xe8] sm:$0xff] %v1956
  %1960 = vst [vmem:[#allocation3 + $0xf0] sm:$0xff] %v1955
  %1961 = vst [vmem:[#allocation3 + $0xf8] sm:$0xff] %v1957
  %v1962 = vld [vmem:[#allocation3] sm:$0xff]
  %v1963 = vld [vmem:[#allocation3 + $0x8] sm:$0xff]
  %v1964 = vld [vmem:[#allocation3 + $0x10] sm:$0xff]
  %v1965 = vld [vmem:[#allocation3 + $0x18] sm:$0xff]
  %v1966 = vld [vmem:[#allocation3 + $0x20] sm:$0xff]
  %v1967 = vld [vmem:[#allocation3 + $0x28] sm:$0xff]
  %v1968 = vld [vmem:[#allocation3 + $0x30] sm:$0xff]
  %v1969 = vld [vmem:[#allocation3 + $0x38] sm:$0xff]
  %v1970 = vld [vmem:[#allocation3 + $0x40] sm:$0xff]
  %v1971 = vld [vmem:[#allocation3 + $0x48] sm:$0xff]
  %v1972 = vld [vmem:[#allocation3 + $0x50] sm:$0xff]
  %v1973 = vld [vmem:[#allocation3 + $0x58] sm:$0xff]
  %v1974 = vld [vmem:[#allocation3 + $0x60] sm:$0xff]
  %v1975 = vld [vmem:[#allocation3 + $0x68] sm:$0xff]
  %v1976 = vld [vmem:[#allocation3 + $0x70] sm:$0xff]
  %v1977 = vld [vmem:[#allocation3 + $0x78] sm:$0xff]
  %v1978 = vld [vmem:[#allocation3 + $0x80] sm:$0xff]
  %v1979 = vld [vmem:[#allocation3 + $0x88] sm:$0xff]
  %v1980 = vld [vmem:[#allocation3 + $0x90] sm:$0xff]
  %v1981 = vld [vmem:[#allocation3 + $0x98] sm:$0xff]
  %v1982 = vld [vmem:[#allocation3 + $0xa0] sm:$0xff]
  %v1983 = vld [vmem:[#allocation3 + $0xa8] sm:$0xff]
  %v1984 = vld [vmem:[#allocation3 + $0xb0] sm:$0xff]
  %v1985 = vld [vmem:[#allocation3 + $0xb8] sm:$0xff]
  %v1986 = vld [vmem:[#allocation3 + $0xc0] sm:$0xff]
  %v1987 = vld [vmem:[#allocation3 + $0xc8] sm:$0xff]
  %v1988 = vld [vmem:[#allocation3 + $0xd0] sm:$0xff]
  %v1989 = vld [vmem:[#allocation3 + $0xd8] sm:$0xff]
  %v1990 = vld [vmem:[#allocation3 + $0xe0] sm:$0xff]
  %v1991 = vld [vmem:[#allocation3 + $0xe8] sm:$0xff]
  %v1992 = vld [vmem:[#allocation3 + $0xf0] sm:$0xff]
  %v1993 = vld [vmem:[#allocation3 + $0xf8] sm:$0xff]
  %1994 = vmatprep.subr.mxu0 %v1993
  %1995 = vmatpush1.msra.mxu0 %v1992
  %1996 = vmatprep.subr.mxu0 %v1991
  %1997 = vmatpush1.msra.mxu0 %v1990
  %1998 = vmatprep.subr.mxu0 %v1989
  %1999 = vmatpush1.msra.mxu0 %v1988
  %2000 = vmatprep.subr.mxu0 %v1987
  %2001 = vmatpush1.msra.mxu0 %v1986
  %2002 = vmatprep.subr.mxu0 %v1985
  %2003 = vmatpush1.msra.mxu0 %v1984
  %2004 = vmatprep.subr.mxu0 %v1983
  %2005 = vmatpush1.msra.mxu0 %v1982
  %2006 = vmatprep.subr.mxu0 %v1981
  %2007 = vmatpush1.msra.mxu0 %v1980
  %2008 = vmatprep.subr.mxu0 %v1979
  %2009 = vmatpush1.msra.mxu0 %v1978
  %2010 = vmatprep.subr.mxu0 %v1977
  %2011 = vmatpush1.msra.mxu0 %v1976
  %2012 = vmatprep.subr.mxu0 %v1975
  %2013 = vmatpush1.msra.mxu0 %v1974
  %2014 = vmatprep.subr.mxu0 %v1973
  %2015 = vmatpush1.msra.mxu0 %v1972
  %2016 = vmatprep.subr.mxu0 %v1971
  %2017 = vmatpush1.msra.mxu0 %v1970
  %2018 = vmatprep.subr.mxu0 %v1969
  %2019 = vmatpush1.msra.mxu0 %v1968
  %2020 = vmatprep.subr.mxu0 %v1967
  %2021 = vmatpush1.msra.mxu0 %v1966
  %2022 = vmatprep.subr.mxu0 %v1965
  %2023 = vmatpush1.msra.mxu0 %v1964
  %2024 = vmatprep.subr.mxu0 %v1963
  %2025 = vmatpush1.msra.mxu0 %v1962
  %2026 = vmatprep.subr.mxu0 0.0
  %2027 = vmatpush2.msra.mxu0 0.0
  %2028 = vmatprep.subr.mxu0 0.0
  %2029 = vmatpush2.msra.mxu0 0.0
  %2030 = vmatprep.subr.mxu0 0.0
  %2031 = vmatpush2.msra.mxu0 0.0
  %2032 = vmatprep.subr.mxu0 0.0
  %2033 = vmatpush2.msra.mxu0 0.0
  %2034 = vmatprep.subr.mxu0 0.0
  %2035 = vmatpush2.msra.mxu0 0.0
  %2036 = vmatprep.subr.mxu0 0.0
  %2037 = vmatpush2.msra.mxu0 0.0
  %2038 = vmatprep.subr.mxu0 0.0
  %2039 = vmatpush2.msra.mxu0 0.0
  %2040 = vmatprep.subr.mxu0 0.0
  %2041 = vmatpush2.msra.mxu0 0.0
  %2042 = vmatprep.subr.mxu0 0.0
  %2043 = vmatpush2.msra.mxu0 0.0
  %2044 = vmatprep.subr.mxu0 0.0
  %2045 = vmatpush2.msra.mxu0 0.0
  %2046 = vmatprep.subr.mxu0 0.0
  %2047 = vmatpush2.msra.mxu0 0.0
  %2048 = vmatprep.subr.mxu0 0.0
  %2049 = vmatpush2.msra.mxu0 0.0
  %2050 = vmatprep.subr.mxu0 0.0
  %2051 = vmatpush2.msra.mxu0 0.0
  %2052 = vmatprep.subr.mxu0 0.0
  %2053 = vmatpush2.msra.mxu0 0.0
  %2054 = vmatprep.subr.mxu0 0.0
  %2055 = vmatpush2.msra.mxu0 0.0
  %2056 = vmatprep.subr.mxu0 0.0
  %2057 = vmatpush2.msra.mxu0 0.0
  %2058 = vmatprep.mubr.f32.mxu0 0.0
  %2059 = vmatmul.mubr.f32.gmra.mxu0 %v1830
  %v2060 = vpop.f32.mrf.mxu0
  %v2061 = vadd.f32 0.0, %v2060
  %v2062 = vpop.f32.mrf.mxu0
  %v2063 = vadd.f32 0.0, %v2062
  %2064 = vmatprep.mubr.f32.mxu0 0.0
  %2065 = vmatmul.mubr.f32.gmra.mxu0 %v1831
  %v2066 = vpop.f32.mrf.mxu0
  %v2067 = vadd.f32 0.0, %v2066
  %v2068 = vpop.f32.mrf.mxu0
  %v2069 = vadd.f32 0.0, %v2068
  %2070 = vdwg.mxu0
  %v2072 = vsel %vm283, %v1832, 0
  %v2075 = vsel %vm283, %v1833, 0
  %2077 = vmatprep.subr.mxu0 0.0
  %2078 = vmatpush1.msra.mxu0 0.0
  %2079 = vmatprep.subr.mxu0 0.0
  %2080 = vmatpush1.msra.mxu0 0.0
  %2081 = vmatprep.subr.mxu0 0.0
  %2082 = vmatpush1.msra.mxu0 0.0
  %2083 = vmatprep.subr.mxu0 0.0
  %2084 = vmatpush1.msra.mxu0 0.0
  %2085 = vmatprep.subr.mxu0 0.0
  %2086 = vmatpush1.msra.mxu0 0.0
  %2087 = vmatprep.subr.mxu0 0.0
  %2088 = vmatpush1.msra.mxu0 0.0
  %2089 = vmatprep.subr.mxu0 0.0
  %2090 = vmatpush1.msra.mxu0 0.0
  %2091 = vmatprep.subr.mxu0 0.0
  %2092 = vmatpush1.msra.mxu0 0.0
  %2093 = vmatprep.subr.mxu0 0.0
  %2094 = vmatpush1.msra.mxu0 0.0
  %2095 = vmatprep.subr.mxu0 0.0
  %2096 = vmatpush1.msra.mxu0 0.0
  %2097 = vmatprep.subr.mxu0 0.0
  %2098 = vmatpush1.msra.mxu0 0.0
  %2099 = vmatprep.subr.mxu0 0.0
  %2100 = vmatpush1.msra.mxu0 0.0
  %2101 = vmatprep.subr.mxu0 0.0
  %2102 = vmatpush1.msra.mxu0 0.0
  %2103 = vmatprep.subr.mxu0 0.0
  %2104 = vmatpush1.msra.mxu0 0.0
  %2105 = vmatprep.subr.mxu0 %v1829
  %2106 = vmatpush1.msra.mxu0 %v1828
  %2107 = vmatprep.subr.mxu0 %v1827
  %2108 = vmatpush1.msra.mxu0 %v1826
  %2109 = vmatprep.subr.mxu0 0.0
  %2110 = vmatpush2.msra.mxu0 0.0
  %2111 = vmatprep.subr.mxu0 0.0
  %2112 = vmatpush2.msra.mxu0 0.0
  %2113 = vmatprep.subr.mxu0 0.0
  %2114 = vmatpush2.msra.mxu0 0.0
  %2115 = vmatprep.subr.mxu0 0.0
  %2116 = vmatpush2.msra.mxu0 0.0
  %2117 = vmatprep.subr.mxu0 0.0
  %2118 = vmatpush2.msra.mxu0 0.0
  %2119 = vmatprep.subr.mxu0 0.0
  %2120 = vmatpush2.msra.mxu0 0.0
  %2121 = vmatprep.subr.mxu0 0.0
  %2122 = vmatpush2.msra.mxu0 0.0
  %2123 = vmatprep.subr.mxu0 0.0
  %2124 = vmatpush2.msra.mxu0 0.0
  %2125 = vmatprep.subr.mxu0 0.0
  %2126 = vmatpush2.msra.mxu0 0.0
  %2127 = vmatprep.subr.mxu0 0.0
  %2128 = vmatpush2.msra.mxu0 0.0
  %2129 = vmatprep.subr.mxu0 0.0
  %2130 = vmatpush2.msra.mxu0 0.0
  %2131 = vmatprep.subr.mxu0 0.0
  %2132 = vmatpush2.msra.mxu0 0.0
  %2133 = vmatprep.subr.mxu0 0.0
  %2134 = vmatpush2.msra.mxu0 0.0
  %2135 = vmatprep.subr.mxu0 0.0
  %2136 = vmatpush2.msra.mxu0 0.0
  %2137 = vmatprep.subr.mxu0 0.0
  %2138 = vmatpush2.msra.mxu0 0.0
  %2139 = vmatprep.subr.mxu0 0.0
  %2140 = vmatpush2.msra.mxu0 0.0
  %2141 = vmatprep.mubr.f32.mxu0 0.0
  %2142 = vmatmul.mubr.f32.gmra.mxu0 %v2072
  %v2143 = vpop.f32.mrf.mxu0
  %v2144 = vadd.f32 %v2061, %v2143
  %v2145 = vpop.f32.mrf.mxu0
  %v2146 = vadd.f32 %v2063, %v2145
  %2147 = vmatprep.mubr.f32.mxu0 0.0
  %2148 = vmatmul.mubr.f32.gmra.mxu0 %v2075
  %v2149 = vpop.f32.mrf.mxu0
  %v2150 = vadd.f32 %v2067, %v2149
  %v2151 = vpop.f32.mrf.mxu0
  %v2152 = vadd.f32 %v2069, %v2151
  %2153 = vdwg.mxu0
  %2154 = vset.pattern.permute.xlu0 16
  %2155 = vperm.xlu0 %2154, %v1832
  %v2156 = vpop.permute.xlu0 %2155
  %2158 = vset.pattern.permute.xlu0 16
  %2159 = vperm.xlu0 %2158, %v1833
  %v2160 = vpop.permute.xlu0 %2159
  %v2162 = vadd.f32 %v2144, %v2156
  %v2163 = vadd.f32 %v2146, %v2156
  %v2164 = vadd.f32 %v2150, %v2160
  %v2165 = vadd.f32 %v2152, %v2160
  %v2166 = vadd.f32 %v1826, %v2162
  %v2167 = vadd.f32 %v1827, %v2163
  %v2168 = vadd.f32 %v1828, %v2164
  %v2169 = vadd.f32 %v1829, %v2165
  %v2170 = vmax.f32 %v2166, 0.0
  %v2171 = vmax.f32 %v2167, 0.0
  %v2172 = vmax.f32 %v2168, 0.0
  %v2173 = vmax.f32 %v2169, 0.0
  %v2174 = vmul.f32 %v2170, %v387
  %v2175 = vmul.f32 %v2171, %v391
  %v2176 = vmul.f32 %v2172, %v387
  %v2177 = vmul.f32 %v2173, %v391
  %2178 = vst [vmem:[#allocation2] sm:$0xff] %v2174
  %2179 = vst [vmem:[#allocation2 + $0x8] sm:$0xff] %v2175
  %2180 = vst [vmem:[#allocation2 + $0x10] sm:$0xff] %v2176
  %2181 = vst [vmem:[#allocation2 + $0x18] sm:$0xff] %v2177
  %v2182 = vld [vmem:[#allocation2] sm:$0xff]
  %v2183 = vld [vmem:[#allocation2 + $0x8] sm:$0xff]
  %v2184 = vld [vmem:[#allocation2 + $0x10] sm:$0xff]
  %v2185 = vld [vmem:[#allocation2 + $0x18] sm:$0xff]
  %v2186 = vld [vmem:[%s1 + $0xc0] sm:$0xff]
  %v2187 = vld [vmem:[%s1 + $0xd0] sm:$0xff]
  %v2188 = vld [vmem:[%s1 + $0xc8] sm:$0xff]
  %v2189 = vld [vmem:[%s1 + $0xd8] sm:$0xff]
  %2190 = vrot.lane.b32.xlu0 %v2182, 11
  %v2191 = vpop.permute.xlu0 %2190
  %2192 = vrot.lane.b32.xlu0 %v2184, 11
  %v2193 = vpop.permute.xlu0 %2192
  %2194 = vrot.lane.b32.xlu0 %v2183, 11
  %v2195 = vpop.permute.xlu0 %2194
  %2196 = vrot.lane.b32.xlu0 %v2185, 11
  %v2197 = vpop.permute.xlu0 %2196
  %v2198 = vsel %vm46, %v2191, %v2195
  %v2199 = vsel %vm46, %v2193, %v2197
  %v2200 = vsel %vm46, %v2195, %v2191
  %v2201 = vsel %vm46, %v2197, %v2193
  %2202 = vst [vmem:[#allocation3] sm:$0xff] %v2200
  %2203 = vst [vmem:[#allocation3 + $0x8] sm:$0xff] %v2198
  %2204 = vst [vmem:[#allocation3 + $0x10] sm:$0xff] %v2201
  %2205 = vst [vmem:[#allocation3 + $0x18] sm:$0xff] %v2199
  %2206 = vrot.lane.b32.xlu0 %v2182, 10
  %v2207 = vpop.permute.xlu0 %2206
  %2208 = vrot.lane.b32.xlu0 %v2184, 10
  %v2209 = vpop.permute.xlu0 %2208
  %2210 = vrot.lane.b32.xlu0 %v2183, 10
  %v2211 = vpop.permute.xlu0 %2210
  %2212 = vrot.lane.b32.xlu0 %v2185, 10
  %v2213 = vpop.permute.xlu0 %2212
  %v2214 = vsel %vm63, %v2207, %v2211
  %v2215 = vsel %vm63, %v2209, %v2213
  %v2216 = vsel %vm63, %v2211, %v2207
  %v2217 = vsel %vm63, %v2213, %v2209
  %2218 = vst [vmem:[#allocation3 + $0x20] sm:$0xff] %v2216
  %2219 = vst [vmem:[#allocation3 + $0x28] sm:$0xff] %v2214
  %2220 = vst [vmem:[#allocation3 + $0x30] sm:$0xff] %v2217
  %2221 = vst [vmem:[#allocation3 + $0x38] sm:$0xff] %v2215
  %2222 = vrot.lane.b32.xlu0 %v2182, 9
  %v2223 = vpop.permute.xlu0 %2222
  %2224 = vrot.lane.b32.xlu0 %v2184, 9
  %v2225 = vpop.permute.xlu0 %2224
  %2226 = vrot.lane.b32.xlu0 %v2183, 9
  %v2227 = vpop.permute.xlu0 %2226
  %2228 = vrot.lane.b32.xlu0 %v2185, 9
  %v2229 = vpop.permute.xlu0 %2228
  %v2230 = vsel %vm80, %v2223, %v2227
  %v2231 = vsel %vm80, %v2225, %v2229
  %v2232 = vsel %vm80, %v2227, %v2223
  %v2233 = vsel %vm80, %v2229, %v2225
  %2234 = vst [vmem:[#allocation3 + $0x40] sm:$0xff] %v2232
  %2235 = vst [vmem:[#allocation3 + $0x48] sm:$0xff] %v2230
  %2236 = vst [vmem:[#allocation3 + $0x50] sm:$0xff] %v2233
  %2237 = vst [vmem:[#allocation3 + $0x58] sm:$0xff] %v2231
  %2238 = vrot.lane.b32.xlu0 %v2182, 1
  %v2239 = vpop.permute.xlu0 %2238
  %2240 = vrot.lane.b32.xlu0 %v2184, 1
  %v2241 = vpop.permute.xlu0 %2240
  %2242 = vrot.lane.b32.xlu0 %v2183, 1
  %v2243 = vpop.permute.xlu0 %2242
  %2244 = vrot.lane.b32.xlu0 %v2185, 1
  %v2245 = vpop.permute.xlu0 %2244
  %v2246 = vsel %vm97, %v2239, %v2243
  %v2247 = vsel %vm97, %v2241, %v2245
  %v2248 = vsel %vm97, %v2243, %v2239
  %v2249 = vsel %vm97, %v2245, %v2241
  %2250 = vst [vmem:[#allocation3 + $0x60] sm:$0xff] %v2248
  %2251 = vst [vmem:[#allocation3 + $0x68] sm:$0xff] %v2246
  %2252 = vst [vmem:[#allocation3 + $0x70] sm:$0xff] %v2249
  %2253 = vst [vmem:[#allocation3 + $0x78] sm:$0xff] %v2247
  %2254 = vrot.lane.b32.xlu0 %v2182, 127
  %v2255 = vpop.permute.xlu0 %2254
  %2256 = vrot.lane.b32.xlu0 %v2184, 127
  %v2257 = vpop.permute.xlu0 %2256
  %2258 = vrot.lane.b32.xlu0 %v2183, 127
  %v2259 = vpop.permute.xlu0 %2258
  %2260 = vrot.lane.b32.xlu0 %v2185, 127
  %v2261 = vpop.permute.xlu0 %2260
  %v2262 = vsel %vm114, %v2255, %v2259
  %v2263 = vsel %vm114, %v2257, %v2261
  %v2264 = vsel %vm114, %v2259, %v2255
  %v2265 = vsel %vm114, %v2261, %v2257
  %2266 = vst [vmem:[#allocation3 + $0x80] sm:$0xff] %v2262
  %2267 = vst [vmem:[#allocation3 + $0x88] sm:$0xff] %v2264
  %2268 = vst [vmem:[#allocation3 + $0x90] sm:$0xff] %v2263
  %2269 = vst [vmem:[#allocation3 + $0x98] sm:$0xff] %v2265
  %2270 = vrot.lane.b32.xlu0 %v2182, 119
  %v2271 = vpop.permute.xlu0 %2270
  %2272 = vrot.lane.b32.xlu0 %v2184, 119
  %v2273 = vpop.permute.xlu0 %2272
  %2274 = vrot.lane.b32.xlu0 %v2183, 119
  %v2275 = vpop.permute.xlu0 %2274
  %2276 = vrot.lane.b32.xlu0 %v2185, 119
  %v2277 = vpop.permute.xlu0 %2276
  %v2278 = vsel %vm131, %v2271, %v2275
  %v2279 = vsel %vm131, %v2273, %v2277
  %v2280 = vsel %vm131, %v2275, %v2271
  %v2281 = vsel %vm131, %v2277, %v2273
  %2282 = vst [vmem:[#allocation3 + $0xa0] sm:$0xff] %v2278
  %2283 = vst [vmem:[#allocation3 + $0xa8] sm:$0xff] %v2280
  %2284 = vst [vmem:[#allocation3 + $0xb0] sm:$0xff] %v2279
  %2285 = vst [vmem:[#allocation3 + $0xb8] sm:$0xff] %v2281
  %2286 = vrot.lane.b32.xlu0 %v2182, 118
  %v2287 = vpop.permute.xlu0 %2286
  %2288 = vrot.lane.b32.xlu0 %v2184, 118
  %v2289 = vpop.permute.xlu0 %2288
  %2290 = vrot.lane.b32.xlu0 %v2183, 118
  %v2291 = vpop.permute.xlu0 %2290
  %2292 = vrot.lane.b32.xlu0 %v2185, 118
  %v2293 = vpop.permute.xlu0 %2292
  %v2294 = vsel %vm148, %v2287, %v2291
  %v2295 = vsel %vm148, %v2289, %v2293
  %v2296 = vsel %vm148, %v2291, %v2287
  %v2297 = vsel %vm148, %v2293, %v2289
  %2298 = vst [vmem:[#allocation3 + $0xc0] sm:$0xff] %v2294
  %2299 = vst [vmem:[#allocation3 + $0xc8] sm:$0xff] %v2296
  %2300 = vst [vmem:[#allocation3 + $0xd0] sm:$0xff] %v2295
  %2301 = vst [vmem:[#allocation3 + $0xd8] sm:$0xff] %v2297
  %2302 = vrot.lane.b32.xlu0 %v2182, 117
  %v2303 = vpop.permute.xlu0 %2302
  %2304 = vrot.lane.b32.xlu0 %v2184, 117
  %v2305 = vpop.permute.xlu0 %2304
  %2306 = vrot.lane.b32.xlu0 %v2183, 117
  %v2307 = vpop.permute.xlu0 %2306
  %2308 = vrot.lane.b32.xlu0 %v2185, 117
  %v2309 = vpop.permute.xlu0 %2308
  %v2310 = vsel %vm165, %v2303, %v2307
  %v2311 = vsel %vm165, %v2305, %v2309
  %v2312 = vsel %vm165, %v2307, %v2303
  %v2313 = vsel %vm165, %v2309, %v2305
  %2314 = vst [vmem:[#allocation3 + $0xe0] sm:$0xff] %v2310
  %2315 = vst [vmem:[#allocation3 + $0xe8] sm:$0xff] %v2312
  %2316 = vst [vmem:[#allocation3 + $0xf0] sm:$0xff] %v2311
  %2317 = vst [vmem:[#allocation3 + $0xf8] sm:$0xff] %v2313
  %v2318 = vld [vmem:[#allocation3] sm:$0xff]
  %v2319 = vld [vmem:[#allocation3 + $0x8] sm:$0xff]
  %v2320 = vld [vmem:[#allocation3 + $0x10] sm:$0xff]
  %v2321 = vld [vmem:[#allocation3 + $0x18] sm:$0xff]
  %v2322 = vld [vmem:[#allocation3 + $0x20] sm:$0xff]
  %v2323 = vld [vmem:[#allocation3 + $0x28] sm:$0xff]
  %v2324 = vld [vmem:[#allocation3 + $0x30] sm:$0xff]
  %v2325 = vld [vmem:[#allocation3 + $0x38] sm:$0xff]
  %v2326 = vld [vmem:[#allocation3 + $0x40] sm:$0xff]
  %v2327 = vld [vmem:[#allocation3 + $0x48] sm:$0xff]
  %v2328 = vld [vmem:[#allocation3 + $0x50] sm:$0xff]
  %v2329 = vld [vmem:[#allocation3 + $0x58] sm:$0xff]
  %v2330 = vld [vmem:[#allocation3 + $0x60] sm:$0xff]
  %v2331 = vld [vmem:[#allocation3 + $0x68] sm:$0xff]
  %v2332 = vld [vmem:[#allocation3 + $0x70] sm:$0xff]
  %v2333 = vld [vmem:[#allocation3 + $0x78] sm:$0xff]
  %v2334 = vld [vmem:[#allocation3 + $0x80] sm:$0xff]
  %v2335 = vld [vmem:[#allocation3 + $0x88] sm:$0xff]
  %v2336 = vld [vmem:[#allocation3 + $0x90] sm:$0xff]
  %v2337 = vld [vmem:[#allocation3 + $0x98] sm:$0xff]
  %v2338 = vld [vmem:[#allocation3 + $0xa0] sm:$0xff]
  %v2339 = vld [vmem:[#allocation3 + $0xa8] sm:$0xff]
  %v2340 = vld [vmem:[#allocation3 + $0xb0] sm:$0xff]
  %v2341 = vld [vmem:[#allocation3 + $0xb8] sm:$0xff]
  %v2342 = vld [vmem:[#allocation3 + $0xc0] sm:$0xff]
  %v2343 = vld [vmem:[#allocation3 + $0xc8] sm:$0xff]
  %v2344 = vld [vmem:[#allocation3 + $0xd0] sm:$0xff]
  %v2345 = vld [vmem:[#allocation3 + $0xd8] sm:$0xff]
  %v2346 = vld [vmem:[#allocation3 + $0xe0] sm:$0xff]
  %v2347 = vld [vmem:[#allocation3 + $0xe8] sm:$0xff]
  %v2348 = vld [vmem:[#allocation3 + $0xf0] sm:$0xff]
  %v2349 = vld [vmem:[#allocation3 + $0xf8] sm:$0xff]
  %2350 = vmatprep.subr.mxu0 %v2349
  %2351 = vmatpush1.msra.mxu0 %v2348
  %2352 = vmatprep.subr.mxu0 %v2347
  %2353 = vmatpush1.msra.mxu0 %v2346
  %2354 = vmatprep.subr.mxu0 %v2345
  %2355 = vmatpush1.msra.mxu0 %v2344
  %2356 = vmatprep.subr.mxu0 %v2343
  %2357 = vmatpush1.msra.mxu0 %v2342
  %2358 = vmatprep.subr.mxu0 %v2341
  %2359 = vmatpush1.msra.mxu0 %v2340
  %2360 = vmatprep.subr.mxu0 %v2339
  %2361 = vmatpush1.msra.mxu0 %v2338
  %2362 = vmatprep.subr.mxu0 %v2337
  %2363 = vmatpush1.msra.mxu0 %v2336
  %2364 = vmatprep.subr.mxu0 %v2335
  %2365 = vmatpush1.msra.mxu0 %v2334
  %2366 = vmatprep.subr.mxu0 %v2333
  %2367 = vmatpush1.msra.mxu0 %v2332
  %2368 = vmatprep.subr.mxu0 %v2331
  %2369 = vmatpush1.msra.mxu0 %v2330
  %2370 = vmatprep.subr.mxu0 %v2329
  %2371 = vmatpush1.msra.mxu0 %v2328
  %2372 = vmatprep.subr.mxu0 %v2327
  %2373 = vmatpush1.msra.mxu0 %v2326
  %2374 = vmatprep.subr.mxu0 %v2325
  %2375 = vmatpush1.msra.mxu0 %v2324
  %2376 = vmatprep.subr.mxu0 %v2323
  %2377 = vmatpush1.msra.mxu0 %v2322
  %2378 = vmatprep.subr.mxu0 %v2321
  %2379 = vmatpush1.msra.mxu0 %v2320
  %2380 = vmatprep.subr.mxu0 %v2319
  %2381 = vmatpush1.msra.mxu0 %v2318
  %2382 = vmatprep.subr.mxu0 0.0
  %2383 = vmatpush2.msra.mxu0 0.0
  %2384 = vmatprep.subr.mxu0 0.0
  %2385 = vmatpush2.msra.mxu0 0.0
  %2386 = vmatprep.subr.mxu0 0.0
  %2387 = vmatpush2.msra.mxu0 0.0
  %2388 = vmatprep.subr.mxu0 0.0
  %2389 = vmatpush2.msra.mxu0 0.0
  %2390 = vmatprep.subr.mxu0 0.0
  %2391 = vmatpush2.msra.mxu0 0.0
  %2392 = vmatprep.subr.mxu0 0.0
  %2393 = vmatpush2.msra.mxu0 0.0
  %2394 = vmatprep.subr.mxu0 0.0
  %2395 = vmatpush2.msra.mxu0 0.0
  %2396 = vmatprep.subr.mxu0 0.0
  %2397 = vmatpush2.msra.mxu0 0.0
  %2398 = vmatprep.subr.mxu0 0.0
  %2399 = vmatpush2.msra.mxu0 0.0
  %2400 = vmatprep.subr.mxu0 0.0
  %2401 = vmatpush2.msra.mxu0 0.0
  %2402 = vmatprep.subr.mxu0 0.0
  %2403 = vmatpush2.msra.mxu0 0.0
  %2404 = vmatprep.subr.mxu0 0.0
  %2405 = vmatpush2.msra.mxu0 0.0
  %2406 = vmatprep.subr.mxu0 0.0
  %2407 = vmatpush2.msra.mxu0 0.0
  %2408 = vmatprep.subr.mxu0 0.0
  %2409 = vmatpush2.msra.mxu0 0.0
  %2410 = vmatprep.subr.mxu0 0.0
  %2411 = vmatpush2.msra.mxu0 0.0
  %2412 = vmatprep.subr.mxu0 0.0
  %2413 = vmatpush2.msra.mxu0 0.0
  %2414 = vmatprep.mubr.f32.mxu0 0.0
  %2415 = vmatmul.mubr.f32.gmra.mxu0 %v2186
  %v2416 = vpop.f32.mrf.mxu0
  %v2417 = vadd.f32 0.0, %v2416
  %v2418 = vpop.f32.mrf.mxu0
  %v2419 = vadd.f32 0.0, %v2418
  %2420 = vmatprep.mubr.f32.mxu0 0.0
  %2421 = vmatmul.mubr.f32.gmra.mxu0 %v2187
  %v2422 = vpop.f32.mrf.mxu0
  %v2423 = vadd.f32 0.0, %v2422
  %v2424 = vpop.f32.mrf.mxu0
  %v2425 = vadd.f32 0.0, %v2424
  %2426 = vdwg.mxu0
  %v2428 = vsel %vm283, %v2188, 0
  %v2431 = vsel %vm283, %v2189, 0
  %2433 = vmatprep.subr.mxu0 0.0
  %2434 = vmatpush1.msra.mxu0 0.0
  %2435 = vmatprep.subr.mxu0 0.0
  %2436 = vmatpush1.msra.mxu0 0.0
  %2437 = vmatprep.subr.mxu0 0.0
  %2438 = vmatpush1.msra.mxu0 0.0
  %2439 = vmatprep.subr.mxu0 0.0
  %2440 = vmatpush1.msra.mxu0 0.0
  %2441 = vmatprep.subr.mxu0 0.0
  %2442 = vmatpush1.msra.mxu0 0.0
  %2443 = vmatprep.subr.mxu0 0.0
  %2444 = vmatpush1.msra.mxu0 0.0
  %2445 = vmatprep.subr.mxu0 0.0
  %2446 = vmatpush1.msra.mxu0 0.0
  %2447 = vmatprep.subr.mxu0 0.0
  %2448 = vmatpush1.msra.mxu0 0.0
  %2449 = vmatprep.subr.mxu0 0.0
  %2450 = vmatpush1.msra.mxu0 0.0
  %2451 = vmatprep.subr.mxu0 0.0
  %2452 = vmatpush1.msra.mxu0 0.0
  %2453 = vmatprep.subr.mxu0 0.0
  %2454 = vmatpush1.msra.mxu0 0.0
  %2455 = vmatprep.subr.mxu0 0.0
  %2456 = vmatpush1.msra.mxu0 0.0
  %2457 = vmatprep.subr.mxu0 0.0
  %2458 = vmatpush1.msra.mxu0 0.0
  %2459 = vmatprep.subr.mxu0 0.0
  %2460 = vmatpush1.msra.mxu0 0.0
  %2461 = vmatprep.subr.mxu0 %v2185
  %2462 = vmatpush1.msra.mxu0 %v2184
  %2463 = vmatprep.subr.mxu0 %v2183
  %2464 = vmatpush1.msra.mxu0 %v2182
  %2465 = vmatprep.subr.mxu0 0.0
  %2466 = vmatpush2.msra.mxu0 0.0
  %2467 = vmatprep.subr.mxu0 0.0
  %2468 = vmatpush2.msra.mxu0 0.0
  %2469 = vmatprep.subr.mxu0 0.0
  %2470 = vmatpush2.msra.mxu0 0.0
  %2471 = vmatprep.subr.mxu0 0.0
  %2472 = vmatpush2.msra.mxu0 0.0
  %2473 = vmatprep.subr.mxu0 0.0
  %2474 = vmatpush2.msra.mxu0 0.0
  %2475 = vmatprep.subr.mxu0 0.0
  %2476 = vmatpush2.msra.mxu0 0.0
  %2477 = vmatprep.subr.mxu0 0.0
  %2478 = vmatpush2.msra.mxu0 0.0
  %2479 = vmatprep.subr.mxu0 0.0
  %2480 = vmatpush2.msra.mxu0 0.0
  %2481 = vmatprep.subr.mxu0 0.0
  %2482 = vmatpush2.msra.mxu0 0.0
  %2483 = vmatprep.subr.mxu0 0.0
  %2484 = vmatpush2.msra.mxu0 0.0
  %2485 = vmatprep.subr.mxu0 0.0
  %2486 = vmatpush2.msra.mxu0 0.0
  %2487 = vmatprep.subr.mxu0 0.0
  %2488 = vmatpush2.msra.mxu0 0.0
  %2489 = vmatprep.subr.mxu0 0.0
  %2490 = vmatpush2.msra.mxu0 0.0
  %2491 = vmatprep.subr.mxu0 0.0
  %2492 = vmatpush2.msra.mxu0 0.0
  %2493 = vmatprep.subr.mxu0 0.0
  %2494 = vmatpush2.msra.mxu0 0.0
  %2495 = vmatprep.subr.mxu0 0.0
  %2496 = vmatpush2.msra.mxu0 0.0
  %2497 = vmatprep.mubr.f32.mxu0 0.0
  %2498 = vmatmul.mubr.f32.gmra.mxu0 %v2428
  %v2499 = vpop.f32.mrf.mxu0
  %v2500 = vadd.f32 %v2417, %v2499
  %v2501 = vpop.f32.mrf.mxu0
  %v2502 = vadd.f32 %v2419, %v2501
  %2503 = vmatprep.mubr.f32.mxu0 0.0
  %2504 = vmatmul.mubr.f32.gmra.mxu0 %v2431
  %v2505 = vpop.f32.mrf.mxu0
  %v2506 = vadd.f32 %v2423, %v2505
  %v2507 = vpop.f32.mrf.mxu0
  %v2508 = vadd.f32 %v2425, %v2507
  %2509 = vdwg.mxu0
  %2510 = vset.pattern.permute.xlu0 16
  %2511 = vperm.xlu0 %2510, %v2188
  %v2512 = vpop.permute.xlu0 %2511
  %2514 = vset.pattern.permute.xlu0 16
  %2515 = vperm.xlu0 %2514, %v2189
  %v2516 = vpop.permute.xlu0 %2515
  %v2518 = vadd.f32 %v2500, %v2512
  %v2519 = vadd.f32 %v2502, %v2512
  %v2520 = vadd.f32 %v2506, %v2516
  %v2521 = vadd.f32 %v2508, %v2516
  %v2522 = vadd.f32 %v2182, %v2518
  %v2523 = vadd.f32 %v2183, %v2519
  %v2524 = vadd.f32 %v2184, %v2520
  %v2525 = vadd.f32 %v2185, %v2521
  %v2526 = vmax.f32 %v2522, 0.0
  %v2527 = vmax.f32 %v2523, 0.0
  %v2528 = vmax.f32 %v2524, 0.0
  %v2529 = vmax.f32 %v2525, 0.0
  %v2530 = vmul.f32 %v2526, %v387
  %v2531 = vmul.f32 %v2527, %v391
  %v2532 = vmul.f32 %v2528, %v387
  %v2533 = vmul.f32 %v2529, %v391
  %2534 = vst [vmem:[#allocation2] sm:$0xff] %v2530
  %2535 = vst [vmem:[#allocation2 + $0x8] sm:$0xff] %v2531
  %2536 = vst [vmem:[#allocation2 + $0x10] sm:$0xff] %v2532
  %2537 = vst [vmem:[#allocation2 + $0x18] sm:$0xff] %v2533
  %v2538 = vld [vmem:[#allocation2] sm:$0xff]
  %v2539 = vld [vmem:[#allocation2 + $0x8] sm:$0xff]
  %v2540 = vld [vmem:[#allocation2 + $0x10] sm:$0xff]
  %v2541 = vld [vmem:[#allocation2 + $0x18] sm:$0xff]
  %v2542 = vld [vmem:[%s2] sm:$0xff]
  %v2543 = vld [vmem:[%s2 + $0x8] sm:$0xff]
  %v2544 = vld [vmem:[%s2 + $0x10] sm:$0xff]
  %2546 = vset.pattern.permute.xlu0 16
  %2547 = vperm.xlu0 %2546, %v2542
  %v2548 = vpop.permute.xlu0 %2547
  %v2550 = vsel %vm283, %v2542, 0
  %2552 = vmatprep.subr.mxu0 0.0
  %2553 = vmatpush1.msra.mxu0 0.0
  %2554 = vmatprep.subr.mxu0 0.0
  %2555 = vmatpush1.msra.mxu0 0.0
  %2556 = vmatprep.subr.mxu0 0.0
  %2557 = vmatpush1.msra.mxu0 0.0
  %2558 = vmatprep.subr.mxu0 0.0
  %2559 = vmatpush1.msra.mxu0 0.0
  %2560 = vmatprep.subr.mxu0 0.0
  %2561 = vmatpush1.msra.mxu0 0.0
  %2562 = vmatprep.subr.mxu0 0.0
  %2563 = vmatpush1.msra.mxu0 0.0
  %2564 = vmatprep.subr.mxu0 0.0
  %2565 = vmatpush1.msra.mxu0 0.0
  %2566 = vmatprep.subr.mxu0 0.0
  %2567 = vmatpush1.msra.mxu0 0.0
  %2568 = vmatprep.subr.mxu0 0.0
  %2569 = vmatpush1.msra.mxu0 0.0
  %2570 = vmatprep.subr.mxu0 0.0
  %2571 = vmatpush1.msra.mxu0 0.0
  %2572 = vmatprep.subr.mxu0 0.0
  %2573 = vmatpush1.msra.mxu0 0.0
  %2574 = vmatprep.subr.mxu0 0.0
  %2575 = vmatpush1.msra.mxu0 0.0
  %2576 = vmatprep.subr.mxu0 0.0
  %2577 = vmatpush1.msra.mxu0 0.0
  %2578 = vmatprep.subr.mxu0 0.0
  %2579 = vmatpush1.msra.mxu0 0.0
  %2580 = vmatprep.subr.mxu0 %v2541
  %2581 = vmatpush1.msra.mxu0 %v2540
  %2582 = vmatprep.subr.mxu0 %v2539
  %2583 = vmatpush1.msra.mxu0 %v2538
  %2584 = vmatprep.subr.mxu0 0.0
  %2585 = vmatpush2.msra.mxu0 0.0
  %2586 = vmatprep.subr.mxu0 0.0
  %2587 = vmatpush2.msra.mxu0 0.0
  %2588 = vmatprep.subr.mxu0 0.0
  %2589 = vmatpush2.msra.mxu0 0.0
  %2590 = vmatprep.subr.mxu0 0.0
  %2591 = vmatpush2.msra.mxu0 0.0
  %2592 = vmatprep.subr.mxu0 0.0
  %2593 = vmatpush2.msra.mxu0 0.0
  %2594 = vmatprep.subr.mxu0 0.0
  %2595 = vmatpush2.msra.mxu0 0.0
  %2596 = vmatprep.subr.mxu0 0.0
  %2597 = vmatpush2.msra.mxu0 0.0
  %2598 = vmatprep.subr.mxu0 0.0
  %2599 = vmatpush2.msra.mxu0 0.0
  %2600 = vmatprep.subr.mxu0 0.0
  %2601 = vmatpush2.msra.mxu0 0.0
  %2602 = vmatprep.subr.mxu0 0.0
  %2603 = vmatpush2.msra.mxu0 0.0
  %2604 = vmatprep.subr.mxu0 0.0
  %2605 = vmatpush2.msra.mxu0 0.0
  %2606 = vmatprep.subr.mxu0 0.0
  %2607 = vmatpush2.msra.mxu0 0.0
  %2608 = vmatprep.subr.mxu0 0.0
  %2609 = vmatpush2.msra.mxu0 0.0
  %2610 = vmatprep.subr.mxu0 0.0
  %2611 = vmatpush2.msra.mxu0 0.0
  %2612 = vmatprep.subr.mxu0 0.0
  %2613 = vmatpush2.msra.mxu0 0.0
  %2614 = vmatprep.subr.mxu0 0.0
  %2615 = vmatpush2.msra.mxu0 0.0
  %2616 = vmatprep.mubr.f32.mxu0 0.0
  %2617 = vmatmul.mubr.f32.gmra.mxu0 %v2550
  %v2618 = vpop.f32.mrf.mxu0
  %v2619 = vadd.f32 %v2548, %v2618
  %v2620 = vpop.f32.mrf.mxu0
  %v2621 = vadd.f32 %v2548, %v2620
  %2622 = vdwg.mxu0
  %v2623 = vmax.f32 %v2619, 0.0
  %v2624 = vmax.f32 %v2621, 0.0
  %2625 = vset.pattern.permute.xlu0 17
  %2626 = vperm.xlu0 %2625, %v2542
  %v2627 = vpop.permute.xlu0 %2626
  %v2629 = vmul.f32 %v2623, %v2627
  %v2630 = vmul.f32 %v2624, %v2627
  %v2631 = vrot.slane %v2629, 4
  %v2632 = vadd.f32 %v2629, %v2631
  %v2633 = vrot.slane %v2632, 2
  %v2634 = vadd.f32 %v2632, %v2633
  %v2635 = vrot.slane %v2634, 1
  %v2636 = vadd.f32 %v2634, %v2635
  %v2637 = vrot.slane %v2630, 4
  %v2638 = vadd.f32 %v2630, %v2637
  %v2639 = vrot.slane %v2638, 2
  %v2640 = vadd.f32 %v2638, %v2639
  %v2641 = vrot.slane %v2640, 1
  %v2642 = vadd.f32 %v2640, %v2641
  %v2643 = vmul.f32 %v2623, %v2543
  %v2644 = vmul.f32 %v2624, %v2544
  %v2645 = vrot.slane %v2643, 4
  %v2646 = vadd.f32 %v2643, %v2645
  %v2647 = vrot.slane %v2646, 2
  %v2648 = vadd.f32 %v2646, %v2647
  %v2649 = vrot.slane %v2648, 1
  %v2650 = vadd.f32 %v2648, %v2649
  %v2651 = vrot.slane %v2644, 4
  %v2652 = vadd.f32 %v2644, %v2651
  %v2653 = vrot.slane %v2652, 2
  %v2654 = vadd.f32 %v2652, %v2653
  %v2655 = vrot.slane %v2654, 1
  %v2656 = vadd.f32 %v2654, %v2655
  %vm2657 = vcmp.gt.f32.partialorder %v19, 0.0
  %v2660 = vcombine.low %v2636, %v2642
  %v2662 = vunpack.c.l.s4 1966171168
  %v2663 = vunpack.c.0.s8 %v2662
  %v2664 = vlaneseq
  %v2665 = vshrl.u32 %v2664, 7
  %v2666 = vsub.s32 %v2663, %v2665
  %v2667 = vrot.slane %v2660, %v2666
  %v2669 = vunpack.c.l.s4 1966171168
  %v2670 = vunpack.c.0.s8 %v2669
  %v2671 = vlaneseq
  %v2672 = vshrl.u32 %v2671, 7
  %v2673 = vsub.s32 %v2670, %v2672
  %v2674 = vrot.slane %v2667, %v2673
  %v2676 = vsel %vm2657, %v2674, -1e+30
  %vm2677 = vcmask 1040384
  %v2678 = vsel %vm2677, %v2676, -inf
  %2679 = vmax.xlane.f32.xlu0 %v2678
  %v2680 = vpop.xlane.xlu0 %2679
  %v2681 = vsub.f32 %v2676, %v2680
  %v2682 = vmul.f32 %v2681, 1.442695
  %v2683 = vpow.pop %v2682
  %v2684 = vsel %vm2677, %v2683, 0.0
  %2685 = vadd.xlane.f32.xlu0 %v2684
  %v2686 = vpop.xlane.xlu0 %2685
  %v2687 = vrcp.pop %v2686
  %v2688 = vmul.f32 %v2683, %v2687
  %2689 = vst [vmem:[%s4] sm:$0x1] %v2688
  %2690 = vadd.xlane.f32.xlu0 %v2650
  %v2691 = vpop.xlane.xlu0 %2690
  %v2692 = vtanh.pop %v2691
  %vm2693 = vcmask 0
  %2694 = vst.msk [vmem:[%s5] sm:$0x1] %vm2693, %v2692
  %v2696 = vlaneseq
  %v2697 = vshrl.u32 %v2696, 7
  %v2698 = vsub.s32 1, %v2697
  %v2699 = vrot.slane %v2676, %v2698
  %v2701 = vsel %vm2677, %v2699, -inf
  %2702 = vmax.xlane.f32.xlu0 %v2701
  %v2703 = vpop.xlane.xlu0 %2702
  %v2704 = vrot.slane %v2676, 1
  %v2706 = vsub.f32 %v2704, %v2703
  %v2707 = vmul.f32 %v2706, 1.442695
  %v2708 = vpow.pop %v2707
  %v2709 = vsel %vm2677, %v2708, 0.0
  %2710 = vadd.xlane.f32.xlu0 %v2709
  %v2711 = vpop.xlane.xlu0 %2710
  %v2712 = vrcp.pop %v2711
  %v2713 = vmul.f32 %v2708, %v2712
  %2714 = vst [vmem:[%s4 + $0x1] sm:$0x1] %v2713
  %2715 = vadd.xlane.f32.xlu0 %v2656
  %v2716 = vpop.xlane.xlu0 %2715
  %v2717 = vtanh.pop %v2716
  %2718 = vst.msk [vmem:[%s5 + $0x1] sm:$0x1] %vm2693, %v2717
  // Predicated region
  $region18: #{net_forward.1} parent=0 // pred_check
    _
  $region19: #{net_forward.1} parent=0 // pred_check_branch
    %2720 = sbr.rel (0) target = $region21
  $region20: #{net_forward.1} parent=0 // pred_region
    _
  $region21: #{net_forward.1} parent=0 // pred_fallthru
    _
  // Predicated region
  $region22: #{net_forward.1} parent=0 // pred_check
    _
  $region23: #{net_forward.1} parent=0 // pred_check_branch
    %2722 = sbr.rel (0) target = $region25
  $region24: #{net_forward.1} parent=0 // pred_region
    _
  $region25: #{net_forward.1} parent=0 // pred_fallthru
    _
  // Predicated region
  $region26: #{net_forward.1} parent=0 // pred_check
    _
  $region27: #{net_forward.1} parent=0 // pred_check_branch
    %2724 = sbr.rel (0) target = $region29
  $region28: #{net_forward.1} parent=0 // pred_region
    _
  $region29: #{net_forward.1} parent=0 // pred_fallthru
    _
  // Predicated region
  $region30: #{net_forward.1} parent=0 // pred_check
    _
  $region31: #{net_forward.1} parent=0 // pred_check_branch
    %2726 = sbr.rel (0) target = $region33
  $region32: #{net_forward.1} parent=0 // pred_region
    _
  $region33: #{net_forward.1} parent=0 // pred_fallthru
    _

</llo_original>
